<compile_context>
chip_gen: v6e
topology: v6e:2x2x1
jax: 0.10.0
libtpu: 0.0.40
codegen_flags: <defaults>
</compile_context>

<pallas_src>
import functools
import math

import jax
import jax.numpy as jnp
from jax.experimental import pallas as pl
from jax.experimental.pallas import tpu as pltpu


def _round_up(x, m):
    return (x + m - 1) // m * m


def _pick_block_rows(B, row_bytes, budget_bytes=4 * 1024 * 1024):
    """Largest divisor of B whose per-block footprint fits the budget; prefer >=2 grid steps."""
    divisors = [d for d in range(1, B + 1) if B % d == 0]
    fit = [d for d in divisors if d * row_bytes <= budget_bytes] or [1]
    bt = fit[-1]
    if bt == B and len(fit) > 1:
        bt = fit[-2]  # keep at least 2 grid steps so "parallel" can shard across TCs (v7x)
    return bt


def _tcn_kernel(x_ref, w_ref, shift_ref, o_ref, acc_ref, *, K, stride, T_out):
    # x_ref:     (Bt, T_pad, C_in)     batch of time-padded input rows
    # w_ref:     (K, C_in, C_out_p)    BN-scale-folded conv weights, one matrix per tap
    # shift_ref: (1, C_out_p)          fused BN shift (includes conv bias)
    # o_ref:     (Bt*T_out, C_out_p)   lane-dense output slab
    # acc_ref:   (Bt*T_out, C_out_p)   f32 VMEM accumulator
    Bt, T_pad, C_in = x_ref.shape
    M = Bt * T_out
    acc_ref[...] = jnp.zeros_like(acc_ref)
    if stride == 1:
        for k in range(K):  # static, unrolled loop over temporal taps
            xk = x_ref[:, pl.ds(k, T_out), :]                      # (Bt, T_out, C_in)
            acc_ref[...] += jnp.dot(xk.reshape(M, C_in), w_ref[k],
                                    preferred_element_type=jnp.float32)
    else:
        x = x_ref[...]
        span = stride * (T_out - 1) + 1
        for k in range(K):
            xk = jax.lax.slice(x, (0, k, 0), (Bt, k + span, C_in), (1, stride, 1))
            acc_ref[...] += jnp.dot(xk.reshape(M, C_in), w_ref[k],
                                    preferred_element_type=jnp.float32)
    o_ref[...] = (acc_ref[...] + shift_ref[...]).astype(o_ref.dtype)


@functools.partial(jax.jit, static_argnames=("kernel_size", "stride", "eps"))
def unit_tcn_forward(x, w_pt, conv_bias, bn_gamma, bn_beta, bn_mean, bn_var,
                     *, kernel_size=9, stride=1, eps=1e-5):
    """x: (N, C_in, T, V) float32 (NCHW, same as PyTorch). Inference-mode BN."""
    N, C_in, T, V = x.shape
    C_out = w_pt.shape[0]
    K = kernel_size
    pad = (K - 1) // 2
    T_pad = T + 2 * pad
    T_out = (T_pad - K) // stride + 1       # exact PyTorch Conv2d output-size formula
    C_out_p = _round_up(C_out, 128)         # lane-dense output / MXU-friendly N dim
    B = N * V

    # --- glue (plain JAX, fused under jit): layout + padding + parameter folding ---
    # (N, C_in, T, V) -> (B, T, C_in) -> zero-pad time
    x_r = jnp.transpose(x, (0, 3, 2, 1)).reshape(B, T, C_in)
    x_r = jnp.pad(x_r, ((0, 0), (pad, pad), (0, 0)))              # (B, T_pad, C_in)

    inv_std = 1.0 / jnp.sqrt(bn_var + eps)
    scale = bn_gamma * inv_std                                    # (C_out,)
    shift = bn_beta + scale * (conv_bias - bn_mean)               # (C_out,)
    # PyTorch weight (C_out, C_in, K, 1) -> (K, C_in, C_out); fold BN scale; pad lanes.
    w = jnp.transpose(w_pt[:, :, :, 0], (2, 1, 0)) * scale[None, None, :]
    w = jnp.pad(w, ((0, 0), (0, 0), (0, C_out_p - C_out)))        # (K, C_in, C_out_p)
    shift = jnp.pad(shift, (0, C_out_p - C_out)).reshape(1, C_out_p)

    # rows-per-block: input + output + accumulator footprint per row (fp32)
    row_bytes = (T_pad * C_in + 2 * T_out * C_out_p) * 4
    Bt = _pick_block_rows(B, row_bytes)
    grid = (B // Bt,)

    kernel = functools.partial(_tcn_kernel, K=K, stride=stride, T_out=T_out)

    cost = pl.CostEstimate(
        flops=2 * B * T_out * K * C_in * C_out_p,
        transcendentals=0,
        bytes_accessed=(x_r.size + w.size + shift.size + B * T_out * C_out_p) * 4,
    )

    out2d = pl.pallas_call(
        kernel,
        out_shape=jax.ShapeDtypeStruct((B * T_out, C_out_p), x.dtype),
        grid_spec=pltpu.PrefetchScalarGridSpec(
            num_scalar_prefetch=0,
            grid=grid,
            in_specs=[
                pl.BlockSpec((Bt, T_pad, C_in), lambda b: (b, 0, 0)),
                pl.BlockSpec((K, C_in, C_out_p), lambda b: (0, 0, 0)),
                pl.BlockSpec((1, C_out_p), lambda b: (0, 0)),
            ],
            out_specs=pl.BlockSpec((Bt * T_out, C_out_p), lambda b: (b, 0)),
            scratch_shapes=[pltpu.VMEM((Bt * T_out, C_out_p), jnp.float32)],
        ),
        compiler_params=pltpu.CompilerParams(
            dimension_semantics=("parallel",),
            vmem_limit_bytes=32 * 1024 * 1024,
        ),
        cost_estimate=cost,
    )(x_r, w, shift)

    # (B*T_out, C_out_p) -> (N, C_out, T_out, V), dropping the lane padding
    out = out2d.reshape(N, V, T_out, C_out_p)[..., :C_out]
    return jnp.transpose(out, (0, 3, 2, 1))


def _reference(x, w_pt, conv_bias, bn_gamma, bn_beta, bn_mean, bn_var,
               *, kernel_size=9, stride=1, eps=1e-5):
    pad = (kernel_size - 1) // 2
    y = jax.lax.conv_general_dilated(
        x, w_pt,
        window_strides=(stride, 1),
        padding=((pad, pad), (0, 0)),
        dimension_numbers=("NCHW", "OIHW", "NCHW"),
    ) + conv_bias.reshape(1, -1, 1, 1)
    inv_std = 1.0 / jnp.sqrt(bn_var + eps)
    return (y - bn_mean.reshape(1, -1, 1, 1)) * (bn_gamma * inv_std).reshape(1, -1, 1, 1) \
        + bn_beta.reshape(1, -1, 1, 1)


if __name__ == "__main__":
    N, C_in, C_out, T, V = 2, 4, 8, 16, 16
    K, stride = 9, 1

    key = jax.random.PRNGKey(0)
    kx, kw = jax.random.split(key)

    x = jax.random.normal(kx, (N, C_in, T, V), dtype=jnp.float32)

    # conv_init: kaiming_normal_(mode='fan_out'): std = sqrt(2 / (C_out*K*1)); bias = 0
    std = math.sqrt(2.0 / (C_out * K * 1))
    w_pt = jax.random.normal(kw, (C_out, C_in, K, 1), dtype=jnp.float32) * std
    conv_bias = jnp.zeros((C_out,), jnp.float32)

    # bn_init(bn, 1): gamma=1, beta=0; fresh running stats: mean=0, var=1
    bn_gamma = jnp.ones((C_out,), jnp.float32)
    bn_beta = jnp.zeros((C_out,), jnp.float32)
    bn_mean = jnp.zeros((C_out,), jnp.float32)
    bn_var = jnp.ones((C_out,), jnp.float32)

    out = unit_tcn_forward(x, w_pt, conv_bias, bn_gamma, bn_beta, bn_mean, bn_var,
                           kernel_size=K, stride=stride)
    out = jax.block_until_ready(out)

    ref = _reference(x, w_pt, conv_bias, bn_gamma, bn_beta, bn_mean, bn_var,
                     kernel_size=K, stride=stride)
    assert out.shape == (N, C_out, T, V), out.shape
    assert jnp.allclose(out, ref, atol=1e-4, rtol=1e-4), float(jnp.max(jnp.abs(out - ref)))

    print("KERNEL_OK")
</pallas_src>

<mosaic_0001>
module attributes {stable_mosaic.version = 11 : i64} {
  func.func @_tcn_kernel(%arg0: i32, %arg1: memref<16x24x4xf32, #tpu.memory_space<vmem>>, %arg2: memref<9x4x128xf32, #tpu.memory_space<vmem>>, %arg3: memref<1x128xf32, #tpu.memory_space<vmem>>, %arg4: memref<256x128xf32, #tpu.memory_space<vmem>>, %arg5: memref<256x128xf32, #tpu.memory_space<vmem>>) attributes {dimension_semantics = [#tpu.dimension_semantics<parallel>], iteration_bounds = array<i64: 2>, scalar_prefetch = 0 : i64, scratch_operands = 1 : i64, tpu.core_type = #tpu.core_type<tc>, window_params = [{transform_indices = @transform_0, window_bounds = array<i64: 16, 24, 4>}, {pipeline_mode = #tpu.pipeline_mode<synchronous>, transform_indices = @transform_1, window_bounds = array<i64: 9, 4, 128>}, {pipeline_mode = #tpu.pipeline_mode<synchronous>, transform_indices = @transform_2, window_bounds = array<i64: 1, 128>}, {transform_indices = @transform_3, window_bounds = array<i64: 256, 128>}]} {
    %cst = arith.constant 0.000000e+00 : f32
    %0 = vector.broadcast %cst : f32 to vector<256x128xf32>
    %c0 = arith.constant 0 : index
    %c0_0 = arith.constant 0 : index
    %1 = vector.load %arg5[%c0, %c0_0] : memref<256x128xf32, #tpu.memory_space<vmem>>, vector<256x128xf32>
    tpu.vector_store %arg5[%c0, %c0_0], %0 {strides = array<i32>} : memref<256x128xf32, #tpu.memory_space<vmem>>, vector<256x128xf32>,
    %c0_1 = arith.constant 0 : index
    %c0_2 = arith.constant 0 : index
    %c0_3 = arith.constant 0 : index
    %2 = vector.load %arg1[%c0_1, %c0_2, %c0_3] : memref<16x24x4xf32, #tpu.memory_space<vmem>>, vector<16x16x4xf32>
    %c0_4 = arith.constant 0 : index
    %c0_5 = arith.constant 0 : index
    %3 = vector.load %arg5[%c0_4, %c0_5] : memref<256x128xf32, #tpu.memory_space<vmem>>, vector<256x128xf32>
    %4 = vector.shape_cast %2 : vector<16x16x4xf32> to vector<256x4xf32>
    %c0_6 = arith.constant 0 : index
    %c0_7 = arith.constant 0 : index
    %c0_8 = arith.constant 0 : index
    %5 = vector.load %arg2[%c0_6, %c0_7, %c0_8] : memref<9x4x128xf32, #tpu.memory_space<vmem>>, vector<1x4x128xf32>
    %6 = vector.shape_cast %5 : vector<1x4x128xf32> to vector<4x128xf32>
    %cst_9 = arith.constant dense<0.000000e+00> : vector<256x128xf32>
    %7 = tpu.matmul %4, %6, %cst_9 {dimension_numbers = #tpu.dot_dimension_numbers<[1], [0], [0], [1], [0, 0, 1, 1], [], []>} : vector<256x4xf32>, vector<4x128xf32>, vector<256x128xf32> -> vector<256x128xf32>
    %8 = arith.addf %3, %7 : vector<256x128xf32>
    %c0_10 = arith.constant 0 : index
    %c0_11 = arith.constant 0 : index
    %9 = vector.load %arg5[%c0_10, %c0_11] : memref<256x128xf32, #tpu.memory_space<vmem>>, vector<256x128xf32>
    tpu.vector_store %arg5[%c0_10, %c0_11], %8 {strides = array<i32>} : memref<256x128xf32, #tpu.memory_space<vmem>>, vector<256x128xf32>,
    %c0_12 = arith.constant 0 : index
    %c1 = arith.constant 1 : index
    %c0_13 = arith.constant 0 : index
    %10 = vector.load %arg1[%c0_12, %c1, %c0_13] : memref<16x24x4xf32, #tpu.memory_space<vmem>>, vector<16x16x4xf32>
    %c0_14 = arith.constant 0 : index
    %c0_15 = arith.constant 0 : index
    %11 = vector.load %arg5[%c0_14, %c0_15] : memref<256x128xf32, #tpu.memory_space<vmem>>, vector<256x128xf32>
    %12 = vector.shape_cast %10 : vector<16x16x4xf32> to vector<256x4xf32>
    %c1_16 = arith.constant 1 : index
    %c0_17 = arith.constant 0 : index
    %c0_18 = arith.constant 0 : index
    %13 = vector.load %arg2[%c1_16, %c0_17, %c0_18] : memref<9x4x128xf32, #tpu.memory_space<vmem>>, vector<1x4x128xf32>
    %14 = vector.shape_cast %13 : vector<1x4x128xf32> to vector<4x128xf32>
    %cst_19 = arith.constant dense<0.000000e+00> : vector<256x128xf32>
    %15 = tpu.matmul %12, %14, %cst_19 {dimension_numbers = #tpu.dot_dimension_numbers<[1], [0], [0], [1], [0, 0, 1, 1], [], []>} : vector<256x4xf32>, vector<4x128xf32>, vector<256x128xf32> -> vector<256x128xf32>
    %16 = arith.addf %11, %15 : vector<256x128xf32>
    %c0_20 = arith.constant 0 : index
    %c0_21 = arith.constant 0 : index
    %17 = vector.load %arg5[%c0_20, %c0_21] : memref<256x128xf32, #tpu.memory_space<vmem>>, vector<256x128xf32>
    tpu.vector_store %arg5[%c0_20, %c0_21], %16 {strides = array<i32>} : memref<256x128xf32, #tpu.memory_space<vmem>>, vector<256x128xf32>,
    %c0_22 = arith.constant 0 : index
    %c2 = arith.constant 2 : index
    %c0_23 = arith.constant 0 : index
    %18 = vector.load %arg1[%c0_22, %c2, %c0_23] : memref<16x24x4xf32, #tpu.memory_space<vmem>>, vector<16x16x4xf32>
    %c0_24 = arith.constant 0 : index
    %c0_25 = arith.constant 0 : index
    %19 = vector.load %arg5[%c0_24, %c0_25] : memref<256x128xf32, #tpu.memory_space<vmem>>, vector<256x128xf32>
    %20 = vector.shape_cast %18 : vector<16x16x4xf32> to vector<256x4xf32>
    %c2_26 = arith.constant 2 : index
    %c0_27 = arith.constant 0 : index
    %c0_28 = arith.constant 0 : index
    %21 = vector.load %arg2[%c2_26, %c0_27, %c0_28] : memref<9x4x128xf32, #tpu.memory_space<vmem>>, vector<1x4x128xf32>
    %22 = vector.shape_cast %21 : vector<1x4x128xf32> to vector<4x128xf32>
    %cst_29 = arith.constant dense<0.000000e+00> : vector<256x128xf32>
    %23 = tpu.matmul %20, %22, %cst_29 {dimension_numbers = #tpu.dot_dimension_numbers<[1], [0], [0], [1], [0, 0, 1, 1], [], []>} : vector<256x4xf32>, vector<4x128xf32>, vector<256x128xf32> -> vector<256x128xf32>
    %24 = arith.addf %19, %23 : vector<256x128xf32>
    %c0_30 = arith.constant 0 : index
    %c0_31 = arith.constant 0 : index
    %25 = vector.load %arg5[%c0_30, %c0_31] : memref<256x128xf32, #tpu.memory_space<vmem>>, vector<256x128xf32>
    tpu.vector_store %arg5[%c0_30, %c0_31], %24 {strides = array<i32>} : memref<256x128xf32, #tpu.memory_space<vmem>>, vector<256x128xf32>,
    %c0_32 = arith.constant 0 : index
    %c3 = arith.constant 3 : index
    %c0_33 = arith.constant 0 : index
    %26 = vector.load %arg1[%c0_32, %c3, %c0_33] : memref<16x24x4xf32, #tpu.memory_space<vmem>>, vector<16x16x4xf32>
    %c0_34 = arith.constant 0 : index
    %c0_35 = arith.constant 0 : index
    %27 = vector.load %arg5[%c0_34, %c0_35] : memref<256x128xf32, #tpu.memory_space<vmem>>, vector<256x128xf32>
    %28 = vector.shape_cast %26 : vector<16x16x4xf32> to vector<256x4xf32>
    %c3_36 = arith.constant 3 : index
    %c0_37 = arith.constant 0 : index
    %c0_38 = arith.constant 0 : index
    %29 = vector.load %arg2[%c3_36, %c0_37, %c0_38] : memref<9x4x128xf32, #tpu.memory_space<vmem>>, vector<1x4x128xf32>
    %30 = vector.shape_cast %29 : vector<1x4x128xf32> to vector<4x128xf32>
    %cst_39 = arith.constant dense<0.000000e+00> : vector<256x128xf32>
    %31 = tpu.matmul %28, %30, %cst_39 {dimension_numbers = #tpu.dot_dimension_numbers<[1], [0], [0], [1], [0, 0, 1, 1], [], []>} : vector<256x4xf32>, vector<4x128xf32>, vector<256x128xf32> -> vector<256x128xf32>
    %32 = arith.addf %27, %31 : vector<256x128xf32>
    %c0_40 = arith.constant 0 : index
    %c0_41 = arith.constant 0 : index
    %33 = vector.load %arg5[%c0_40, %c0_41] : memref<256x128xf32, #tpu.memory_space<vmem>>, vector<256x128xf32>
    tpu.vector_store %arg5[%c0_40, %c0_41], %32 {strides = array<i32>} : memref<256x128xf32, #tpu.memory_space<vmem>>, vector<256x128xf32>,
    %c0_42 = arith.constant 0 : index
    %c4 = arith.constant 4 : index
    %c0_43 = arith.constant 0 : index
    %34 = vector.load %arg1[%c0_42, %c4, %c0_43] : memref<16x24x4xf32, #tpu.memory_space<vmem>>, vector<16x16x4xf32>
    %c0_44 = arith.constant 0 : index
    %c0_45 = arith.constant 0 : index
    %35 = vector.load %arg5[%c0_44, %c0_45] : memref<256x128xf32, #tpu.memory_space<vmem>>, vector<256x128xf32>
    %36 = vector.shape_cast %34 : vector<16x16x4xf32> to vector<256x4xf32>
    %c4_46 = arith.constant 4 : index
    %c0_47 = arith.constant 0 : index
    %c0_48 = arith.constant 0 : index
    %37 = vector.load %arg2[%c4_46, %c0_47, %c0_48] : memref<9x4x128xf32, #tpu.memory_space<vmem>>, vector<1x4x128xf32>
    %38 = vector.shape_cast %37 : vector<1x4x128xf32> to vector<4x128xf32>
    %cst_49 = arith.constant dense<0.000000e+00> : vector<256x128xf32>
    %39 = tpu.matmul %36, %38, %cst_49 {dimension_numbers = #tpu.dot_dimension_numbers<[1], [0], [0], [1], [0, 0, 1, 1], [], []>} : vector<256x4xf32>, vector<4x128xf32>, vector<256x128xf32> -> vector<256x128xf32>
    %40 = arith.addf %35, %39 : vector<256x128xf32>
    %c0_50 = arith.constant 0 : index
    %c0_51 = arith.constant 0 : index
    %41 = vector.load %arg5[%c0_50, %c0_51] : memref<256x128xf32, #tpu.memory_space<vmem>>, vector<256x128xf32>
    tpu.vector_store %arg5[%c0_50, %c0_51], %40 {strides = array<i32>} : memref<256x128xf32, #tpu.memory_space<vmem>>, vector<256x128xf32>,
    %c0_52 = arith.constant 0 : index
    %c5 = arith.constant 5 : index
    %c0_53 = arith.constant 0 : index
    %42 = vector.load %arg1[%c0_52, %c5, %c0_53] : memref<16x24x4xf32, #tpu.memory_space<vmem>>, vector<16x16x4xf32>
    %c0_54 = arith.constant 0 : index
    %c0_55 = arith.constant 0 : index
    %43 = vector.load %arg5[%c0_54, %c0_55] : memref<256x128xf32, #tpu.memory_space<vmem>>, vector<256x128xf32>
    %44 = vector.shape_cast %42 : vector<16x16x4xf32> to vector<256x4xf32>
    %c5_56 = arith.constant 5 : index
    %c0_57 = arith.constant 0 : index
    %c0_58 = arith.constant 0 : index
    %45 = vector.load %arg2[%c5_56, %c0_57, %c0_58] : memref<9x4x128xf32, #tpu.memory_space<vmem>>, vector<1x4x128xf32>
    %46 = vector.shape_cast %45 : vector<1x4x128xf32> to vector<4x128xf32>
    %cst_59 = arith.constant dense<0.000000e+00> : vector<256x128xf32>
    %47 = tpu.matmul %44, %46, %cst_59 {dimension_numbers = #tpu.dot_dimension_numbers<[1], [0], [0], [1], [0, 0, 1, 1], [], []>} : vector<256x4xf32>, vector<4x128xf32>, vector<256x128xf32> -> vector<256x128xf32>
    %48 = arith.addf %43, %47 : vector<256x128xf32>
    %c0_60 = arith.constant 0 : index
    %c0_61 = arith.constant 0 : index
    %49 = vector.load %arg5[%c0_60, %c0_61] : memref<256x128xf32, #tpu.memory_space<vmem>>, vector<256x128xf32>
    tpu.vector_store %arg5[%c0_60, %c0_61], %48 {strides = array<i32>} : memref<256x128xf32, #tpu.memory_space<vmem>>, vector<256x128xf32>,
    %c0_62 = arith.constant 0 : index
    %c6 = arith.constant 6 : index
    %c0_63 = arith.constant 0 : index
    %50 = vector.load %arg1[%c0_62, %c6, %c0_63] : memref<16x24x4xf32, #tpu.memory_space<vmem>>, vector<16x16x4xf32>
    %c0_64 = arith.constant 0 : index
    %c0_65 = arith.constant 0 : index
    %51 = vector.load %arg5[%c0_64, %c0_65] : memref<256x128xf32, #tpu.memory_space<vmem>>, vector<256x128xf32>
    %52 = vector.shape_cast %50 : vector<16x16x4xf32> to vector<256x4xf32>
    %c6_66 = arith.constant 6 : index
    %c0_67 = arith.constant 0 : index
    %c0_68 = arith.constant 0 : index
    %53 = vector.load %arg2[%c6_66, %c0_67, %c0_68] : memref<9x4x128xf32, #tpu.memory_space<vmem>>, vector<1x4x128xf32>
    %54 = vector.shape_cast %53 : vector<1x4x128xf32> to vector<4x128xf32>
    %cst_69 = arith.constant dense<0.000000e+00> : vector<256x128xf32>
    %55 = tpu.matmul %52, %54, %cst_69 {dimension_numbers = #tpu.dot_dimension_numbers<[1], [0], [0], [1], [0, 0, 1, 1], [], []>} : vector<256x4xf32>, vector<4x128xf32>, vector<256x128xf32> -> vector<256x128xf32>
    %56 = arith.addf %51, %55 : vector<256x128xf32>
    %c0_70 = arith.constant 0 : index
    %c0_71 = arith.constant 0 : index
    %57 = vector.load %arg5[%c0_70, %c0_71] : memref<256x128xf32, #tpu.memory_space<vmem>>, vector<256x128xf32>
    tpu.vector_store %arg5[%c0_70, %c0_71], %56 {strides = array<i32>} : memref<256x128xf32, #tpu.memory_space<vmem>>, vector<256x128xf32>,
    %c0_72 = arith.constant 0 : index
    %c7 = arith.constant 7 : index
    %c0_73 = arith.constant 0 : index
    %58 = vector.load %arg1[%c0_72, %c7, %c0_73] : memref<16x24x4xf32, #tpu.memory_space<vmem>>, vector<16x16x4xf32>
    %c0_74 = arith.constant 0 : index
    %c0_75 = arith.constant 0 : index
    %59 = vector.load %arg5[%c0_74, %c0_75] : memref<256x128xf32, #tpu.memory_space<vmem>>, vector<256x128xf32>
    %60 = vector.shape_cast %58 : vector<16x16x4xf32> to vector<256x4xf32>
    %c7_76 = arith.constant 7 : index
    %c0_77 = arith.constant 0 : index
    %c0_78 = arith.constant 0 : index
    %61 = vector.load %arg2[%c7_76, %c0_77, %c0_78] : memref<9x4x128xf32, #tpu.memory_space<vmem>>, vector<1x4x128xf32>
    %62 = vector.shape_cast %61 : vector<1x4x128xf32> to vector<4x128xf32>
    %cst_79 = arith.constant dense<0.000000e+00> : vector<256x128xf32>
    %63 = tpu.matmul %60, %62, %cst_79 {dimension_numbers = #tpu.dot_dimension_numbers<[1], [0], [0], [1], [0, 0, 1, 1], [], []>} : vector<256x4xf32>, vector<4x128xf32>, vector<256x128xf32> -> vector<256x128xf32>
    %64 = arith.addf %59, %63 : vector<256x128xf32>
    %c0_80 = arith.constant 0 : index
    %c0_81 = arith.constant 0 : index
    %65 = vector.load %arg5[%c0_80, %c0_81] : memref<256x128xf32, #tpu.memory_space<vmem>>, vector<256x128xf32>
    tpu.vector_store %arg5[%c0_80, %c0_81], %64 {strides = array<i32>} : memref<256x128xf32, #tpu.memory_space<vmem>>, vector<256x128xf32>,
    %c0_82 = arith.constant 0 : index
    %c8 = arith.constant 8 : index
    %c0_83 = arith.constant 0 : index
    %66 = vector.load %arg1[%c0_82, %c8, %c0_83] : memref<16x24x4xf32, #tpu.memory_space<vmem>>, vector<16x16x4xf32>
    %c0_84 = arith.constant 0 : index
    %c0_85 = arith.constant 0 : index
    %67 = vector.load %arg5[%c0_84, %c0_85] : memref<256x128xf32, #tpu.memory_space<vmem>>, vector<256x128xf32>
    %68 = vector.shape_cast %66 : vector<16x16x4xf32> to vector<256x4xf32>
    %c8_86 = arith.constant 8 : index
    %c0_87 = arith.constant 0 : index
    %c0_88 = arith.constant 0 : index
    %69 = vector.load %arg2[%c8_86, %c0_87, %c0_88] : memref<9x4x128xf32, #tpu.memory_space<vmem>>, vector<1x4x128xf32>
    %70 = vector.shape_cast %69 : vector<1x4x128xf32> to vector<4x128xf32>
    %cst_89 = arith.constant dense<0.000000e+00> : vector<256x128xf32>
    %71 = tpu.matmul %68, %70, %cst_89 {dimension_numbers = #tpu.dot_dimension_numbers<[1], [0], [0], [1], [0, 0, 1, 1], [], []>} : vector<256x4xf32>, vector<4x128xf32>, vector<256x128xf32> -> vector<256x128xf32>
    %72 = arith.addf %67, %71 : vector<256x128xf32>
    %c0_90 = arith.constant 0 : index
    %c0_91 = arith.constant 0 : index
    %73 = vector.load %arg5[%c0_90, %c0_91] : memref<256x128xf32, #tpu.memory_space<vmem>>, vector<256x128xf32>
    tpu.vector_store %arg5[%c0_90, %c0_91], %72 {strides = array<i32>} : memref<256x128xf32, #tpu.memory_space<vmem>>, vector<256x128xf32>,
    %c0_92 = arith.constant 0 : index
    %c0_93 = arith.constant 0 : index
    %74 = vector.load %arg5[%c0_92, %c0_93] : memref<256x128xf32, #tpu.memory_space<vmem>>, vector<256x128xf32>
    %c0_94 = arith.constant 0 : index
    %c0_95 = arith.constant 0 : index
    %75 = vector.load %arg3[%c0_94, %c0_95] : memref<1x128xf32, #tpu.memory_space<vmem>>, vector<1x128xf32>
    %76 = vector.broadcast %75 : vector<1x128xf32> to vector<256x128xf32>
    %77 = arith.addf %74, %76 : vector<256x128xf32>
    %c0_96 = arith.constant 0 : index
    %c0_97 = arith.constant 0 : index
    %78 = vector.load %arg4[%c0_96, %c0_97] : memref<256x128xf32, #tpu.memory_space<vmem>>, vector<256x128xf32>
    tpu.vector_store %arg4[%c0_96, %c0_97], %77 {strides = array<i32>} : memref<256x128xf32, #tpu.memory_space<vmem>>, vector<256x128xf32>,
    return
  }
  func.func @transform_0(%arg0: i32) -> (i32, i32, i32) {
    %c0_i32 = arith.constant 0 : i32
    %c0_i32_0 = arith.constant 0 : i32
    %c0_i32_1 = arith.constant 0 : i32
    return %arg0, %c0_i32, %c0_i32_0 : i32, i32, i32
  }
  func.func @transform_1(%arg0: i32) -> (i32, i32, i32) {
    %c0_i32 = arith.constant 0 : i32
    %c0_i32_0 = arith.constant 0 : i32
    %c0_i32_1 = arith.constant 0 : i32
    %c0_i32_2 = arith.constant 0 : i32
    return %c0_i32, %c0_i32_0, %c0_i32_1 : i32, i32, i32
  }
  func.func @transform_2(%arg0: i32) -> (i32, i32) {
    %c0_i32 = arith.constant 0 : i32
    %c0_i32_0 = arith.constant 0 : i32
    %c0_i32_1 = arith.constant 0 : i32
    return %c0_i32, %c0_i32_0 : i32, i32
  }
  func.func @transform_3(%arg0: i32) -> (i32, i32) {
    %c0_i32 = arith.constant 0 : i32
    %c0_i32_0 = arith.constant 0 : i32
    return %arg0, %c0_i32 : i32, i32
  }
}

</mosaic_0001>

<llo_original>
// kernel: unit_tcn_forward.1
$region0: #{unit_tcn_forward.1}
  #allocation0 [shape = 'u32[]', space=smem, size = 0x4, offset = 0x4, fixed_abs, tag = 'smem constant byte address 0x4 - core index']
  #allocation1 [shape = 'u32[144,128]{1,0:T(1,128)}', space=vmem, size = 0x12000, scoped, tag = 'internal scratch']
  #allocation2 [shape = 'f32[256,128]{1,0:T(8,128)}', space=vmem, size = 0x20000, scoped, tag = 'scratch operand']
  %s0 = inlined_call_operand.vmem [shape: f32[32,24,4], index: 0, kind: input, shape index: {}]
  %s1 = inlined_call_operand.vmem [shape: f32[9,4,128], index: 1, kind: input, shape index: {}]
  %s2 = inlined_call_operand.vmem [shape: f32[1,128], index: 2, kind: input, shape index: {}]
  %s3 = inlined_call_operand.vmem [shape: f32[512,128], index: 3, kind: output, shape index: {}]
  %s4 = sld [smem:[#allocation0]]
  $region45: #{unit_tcn_forward.1} parent=0
    _
  %s6 = ssub.s32 1, %s4
  %s7 = scalar_select 0, %s6, %s4
  loop: start=0, step=1, limit=4
  $region2: #{unit_tcn_forward.1} parent=0 // loop_pre_header
    _
  $region3: #{unit_tcn_forward.1} parent=0 // loop_header
    %s9 = sphi 0, %s13
    %p10 = scmp.ge.s32.totalorder %s9, 4
    %s19 = sphi 0, %s21
    %s22 = sphi 0, %s19
    %s23 = sphi 0, %s22
    %s39 = sphi 0, %s23
    %s43 = sphi 0, %s43
    %s45 = sphi 0, %s43
    %s46 = sphi 0, %s45
    %s60 = sphi 0, %s46
    %s64 = sphi 0, %s64
    %s66 = sphi 0, %s64
    %s67 = sphi 0, %s66
    %s81 = sphi 0, %s67
    %s87 = sphi 0, %s89
    %s90 = sphi 0, %s87
    %s91 = sphi 0, %s90
    %s107 = sphi 0, %s91
  $region4: #{unit_tcn_forward.1} parent=0 // loop_header_branch
    %12 = sbr.rel (%p10) target = $region8
  $region5: #{unit_tcn_forward.1} parent=0 // loop_body
    %s14 = ssub.s32 %s9, 1
    %s15 = ssub.s32 %s9, 2
    %s16 = sadd.s32 %s9, 1
    %s17 = ssub.s32 %s9, %s16
    %p18 = scmp.eq.s32.totalorder %s17, 0
    %s20 = sadd.s32 %s19, 1
    %s21 = scalar_select %p18, %s19, %s20
    %p24 = pneg %p18
    %p25 = scmp.eq.s32.totalorder %s9, 1
    %p26 = por %p24, %p25
    %p27 = scmp.ne.s32.totalorder %s19, %s22
    %p28 = scmp.eq.s32.totalorder %s9, 0
    %p29 = por %p27, %p28
    %p30 = scmp.ne.s32.totalorder %s19, %s22
    %p31 = scmp.eq.s32.totalorder %s14, 1
    %p32 = por %p30, %p31
    %p33 = scmp.ne.s32.totalorder %s22, %s23
    %p34 = scmp.eq.s32.totalorder %s14, 0
    %p35 = por %p33, %p34
    %p36 = scmp.ne.s32.totalorder %s22, %s23
    %p37 = scmp.eq.s32.totalorder %s15, 1
    %p38 = por %p36, %p37
    %p40 = scmp.ne.s32.totalorder %s23, %s39
    %p41 = scmp.eq.s32.totalorder %s15, 0
    %p42 = por %p40, %p41
    %s44 = sadd.s32 %s43, 1
    %p47 = scmp.eq.s32.totalorder %s9, 1
    %p48 = scmp.ne.s32.totalorder %s43, %s45
    %p49 = scmp.eq.s32.totalorder %s9, 0
    %p50 = por %p48, %p49
    %p51 = scmp.ne.s32.totalorder %s43, %s45
    %p52 = scmp.eq.s32.totalorder %s14, 1
    %p53 = por %p51, %p52
    %p54 = scmp.ne.s32.totalorder %s45, %s46
    %p55 = scmp.eq.s32.totalorder %s14, 0
    %p56 = por %p54, %p55
    %p57 = scmp.ne.s32.totalorder %s45, %s46
    %p58 = scmp.eq.s32.totalorder %s15, 1
    %p59 = por %p57, %p58
    %p61 = scmp.ne.s32.totalorder %s46, %s60
    %p62 = scmp.eq.s32.totalorder %s15, 0
    %p63 = por %p61, %p62
    %s65 = sadd.s32 %s64, 1
    %p68 = scmp.eq.s32.totalorder %s9, 1
    %p69 = scmp.ne.s32.totalorder %s64, %s66
    %p70 = scmp.eq.s32.totalorder %s9, 0
    %p71 = por %p69, %p70
    %p72 = scmp.ne.s32.totalorder %s64, %s66
    %p73 = scmp.eq.s32.totalorder %s14, 1
    %p74 = por %p72, %p73
    %p75 = scmp.ne.s32.totalorder %s66, %s67
    %p76 = scmp.eq.s32.totalorder %s14, 0
    %p77 = por %p75, %p76
    %p78 = scmp.ne.s32.totalorder %s66, %s67
    %p79 = scmp.eq.s32.totalorder %s15, 1
    %p80 = por %p78, %p79
    %p82 = scmp.ne.s32.totalorder %s67, %s81
    %p83 = scmp.eq.s32.totalorder %s15, 0
    %p84 = por %p82, %p83
    %s85 = ssub.s32 %s9, %s16
    %p86 = scmp.eq.s32.totalorder %s85, 0
    %s88 = sadd.s32 %s87, 1
    %s89 = scalar_select %p86, %s87, %s88
    %p92 = pneg %p86
    %p93 = scmp.eq.s32.totalorder %s9, 1
    %p94 = por %p92, %p93
    %p95 = scmp.ne.s32.totalorder %s87, %s90
    %p96 = scmp.eq.s32.totalorder %s9, 0
    %p97 = por %p95, %p96
    %p98 = scmp.ne.s32.totalorder %s87, %s90
    %p99 = scmp.eq.s32.totalorder %s14, 1
    %p100 = por %p98, %p99
    %p101 = scmp.ne.s32.totalorder %s90, %s91
    %p102 = scmp.eq.s32.totalorder %s14, 0
    %p103 = por %p101, %p102
    %p104 = scmp.ne.s32.totalorder %s90, %s91
    %p105 = scmp.eq.s32.totalorder %s15, 1
    %p106 = por %p104, %p105
    %p108 = scmp.ne.s32.totalorder %s91, %s107
    %p109 = scmp.eq.s32.totalorder %s15, 0
    %p110 = por %p108, %p109
    %p111 = scmp.le.s32.totalorder 1, %s9
    %p112 = scmp.lt.s32.totalorder %s9, 3
    %p113 = pnand %p111, %p112
    %p114 = pneg %p113
    // Predicated region
    $region9: #{unit_tcn_forward.1} parent=5 // pred_check
      _
    $region10: #{unit_tcn_forward.1} parent=5 // pred_check_branch
      %116 = sbr.rel (%p113) target = $region12
    $region11: #{unit_tcn_forward.1} parent=5 // pred_region
      %s117 = ssub.s32 %s9, 1
      // Predicated region
      $region13: #{unit_tcn_forward.1} parent=11 // pred_check
        %p118 = pneg %p56
      $region14: #{unit_tcn_forward.1} parent=11 // pred_check_branch
        %120 = sbr.rel (%p118) target = $region16
      $region15: #{unit_tcn_forward.1} parent=11 // pred_region
        _
      $region16: #{unit_tcn_forward.1} parent=11 // pred_fallthru
        _
      // Predicated region
      $region17: #{unit_tcn_forward.1} parent=11 // pred_check
        %p121 = pneg %p77
      $region18: #{unit_tcn_forward.1} parent=11 // pred_check_branch
        %123 = sbr.rel (%p121) target = $region20
      $region19: #{unit_tcn_forward.1} parent=11 // pred_region
        _
      $region20: #{unit_tcn_forward.1} parent=11 // pred_fallthru
        _
    $region12: #{unit_tcn_forward.1} parent=5 // pred_fallthru
      _
    %p124 = scmp.lt.s32.totalorder %s9, 2
    // Predicated region
    $region21: #{unit_tcn_forward.1} parent=5 // pred_check
      %p125 = pneg %p124
    $region22: #{unit_tcn_forward.1} parent=5 // pred_check_branch
      %127 = sbr.rel (%p125) target = $region24
    $region23: #{unit_tcn_forward.1} parent=5 // pred_region
      // Predicated region
      $region25: #{unit_tcn_forward.1} parent=23 // pred_check
        %p128 = pneg %p29
      $region26: #{unit_tcn_forward.1} parent=23 // pred_check_branch
        %130 = sbr.rel (%p128) target = $region28
      $region27: #{unit_tcn_forward.1} parent=23 // pred_region
        %s131 = smul.u32 16, %s9
        %p132 = scmp.lt.s32.totalorder %s131, 31
        %s133 = scalar_select %p132, %s131, 31
        %s134 = smul.addr %s133, 3
        %s135 = smul.addr %s134, 8
        %s136 = scalar_lea.vmem %s0, %s135
        %s137 = smul.u32 16, %s9
      $region28: #{unit_tcn_forward.1} parent=23 // pred_fallthru
        _
    $region24: #{unit_tcn_forward.1} parent=5 // pred_fallthru
      _
    %p138 = scmp.le.s32.totalorder 1, %s9
    %p139 = scmp.lt.s32.totalorder %s9, 3
    %p140 = pnand %p138, %p139
    %p141 = pneg %p140
    // Predicated region
    $region29: #{unit_tcn_forward.1} parent=5 // pred_check
      _
    $region30: #{unit_tcn_forward.1} parent=5 // pred_check_branch
      %143 = sbr.rel (%p140) target = $region32
    $region31: #{unit_tcn_forward.1} parent=5 // pred_region
      %s144 = ssub.s32 %s9, 1
      %s145 = smul.u32 16, %s14
      %p146 = scmp.lt.s32.totalorder %s145, 31
      %s147 = scalar_select %p146, %s145, 31
      %s148 = smul.addr %s147, 3
      %s149 = smul.addr %s148, 8
      %s150 = scalar_lea.vmem %s0, %s149
      %p151 = pneg %p35
      %p152 = pneg %p32
      %p153 = pneg %p56
      %p154 = pneg %p53
      %p155 = pneg %p77
      %p156 = pneg %p74
      %p157 = pneg %p103
      %p158 = pneg %p100
      %s159 = smul.u32 32, %s14
      %p160 = scmp.lt.s32.totalorder %s159, 63
      %s161 = scalar_select %p160, %s159, 63
      %s162 = smul.addr %s161, 8
      %s163 = scalar_lea.vmem %s3, %s162
      %s164 = smul.u32 16, %s14
      %p165 = scmp.lt.s32.totalorder %s164, 31
      %s166 = scalar_select %p165, %s164, 31
      %s167 = smul.addr %s166, 3
      %s168 = smul.addr %s167, 8
      %s169 = scalar_lea.vmem %s0, %s168
      %s170 = smul.u32 16, %s14
      %s171 = smul.u32 32, %s14
      %p172 = scmp.lt.s32.totalorder %s171, 63
      %s173 = scalar_select %p172, %s171, 63
      %s174 = smul.addr %s173, 8
      %s175 = scalar_lea.vmem %s3, %s174
      %s176 = smul.u32 32, %s14
      %177 = vst [vmem:[#allocation2] sm:$0xff] 0.0
      %178 = vst [vmem:[#allocation2 + $0x8] sm:$0xff] 0.0
      %179 = vst [vmem:[#allocation2 + $0x10] sm:$0xff] 0.0
      %180 = vst [vmem:[#allocation2 + $0x18] sm:$0xff] 0.0
      %181 = vst [vmem:[#allocation2 + $0x20] sm:$0xff] 0.0
      %182 = vst [vmem:[#allocation2 + $0x28] sm:$0xff] 0.0
      %183 = vst [vmem:[#allocation2 + $0x30] sm:$0xff] 0.0
      %184 = vst [vmem:[#allocation2 + $0x38] sm:$0xff] 0.0
      %185 = vst [vmem:[#allocation2 + $0x40] sm:$0xff] 0.0
      %186 = vst [vmem:[#allocation2 + $0x48] sm:$0xff] 0.0
      %187 = vst [vmem:[#allocation2 + $0x50] sm:$0xff] 0.0
      %188 = vst [vmem:[#allocation2 + $0x58] sm:$0xff] 0.0
      %189 = vst [vmem:[#allocation2 + $0x60] sm:$0xff] 0.0
      %190 = vst [vmem:[#allocation2 + $0x68] sm:$0xff] 0.0
      %191 = vst [vmem:[#allocation2 + $0x70] sm:$0xff] 0.0
      %192 = vst [vmem:[#allocation2 + $0x78] sm:$0xff] 0.0
      %193 = vst [vmem:[#allocation2 + $0x80] sm:$0xff] 0.0
      %194 = vst [vmem:[#allocation2 + $0x88] sm:$0xff] 0.0
      %195 = vst [vmem:[#allocation2 + $0x90] sm:$0xff] 0.0
      %196 = vst [vmem:[#allocation2 + $0x98] sm:$0xff] 0.0
      %197 = vst [vmem:[#allocation2 + $0xa0] sm:$0xff] 0.0
      %198 = vst [vmem:[#allocation2 + $0xa8] sm:$0xff] 0.0
      %199 = vst [vmem:[#allocation2 + $0xb0] sm:$0xff] 0.0
      %200 = vst [vmem:[#allocation2 + $0xb8] sm:$0xff] 0.0
      %201 = vst [vmem:[#allocation2 + $0xc0] sm:$0xff] 0.0
      %202 = vst [vmem:[#allocation2 + $0xc8] sm:$0xff] 0.0
      %203 = vst [vmem:[#allocation2 + $0xd0] sm:$0xff] 0.0
      %204 = vst [vmem:[#allocation2 + $0xd8] sm:$0xff] 0.0
      %205 = vst [vmem:[#allocation2 + $0xe0] sm:$0xff] 0.0
      %206 = vst [vmem:[#allocation2 + $0xe8] sm:$0xff] 0.0
      %207 = vst [vmem:[#allocation2 + $0xf0] sm:$0xff] 0.0
      %208 = vst [vmem:[#allocation2 + $0xf8] sm:$0xff] 0.0
      %v209 = vld [vmem:[%s169] sm:$0xff]
      %v210 = vld [vmem:[%s169 + $0x8] sm:$0xff]
      %v211 = vld [vmem:[%s169 + $0x18] sm:$0xff]
      %v212 = vld [vmem:[%s169 + $0x20] sm:$0xff]
      %v213 = vld [vmem:[%s169 + $0x30] sm:$0xff]
      %v214 = vld [vmem:[%s169 + $0x38] sm:$0xff]
      %v215 = vld [vmem:[%s169 + $0x48] sm:$0xff]
      %v216 = vld [vmem:[%s169 + $0x50] sm:$0xff]
      %v217 = vld [vmem:[%s169 + $0x60] sm:$0xff]
      %v218 = vld [vmem:[%s169 + $0x68] sm:$0xff]
      %v219 = vld [vmem:[%s169 + $0x78] sm:$0xff]
      %v220 = vld [vmem:[%s169 + $0x80] sm:$0xff]
      %v221 = vld [vmem:[%s169 + $0x90] sm:$0xff]
      %v222 = vld [vmem:[%s169 + $0x98] sm:$0xff]
      %v223 = vld [vmem:[%s169 + $0xa8] sm:$0xff]
      %v224 = vld [vmem:[%s169 + $0xb0] sm:$0xff]
      %v225 = vld [vmem:[%s169 + $0xc0] sm:$0xff]
      %v226 = vld [vmem:[%s169 + $0xc8] sm:$0xff]
      %v227 = vld [vmem:[%s169 + $0xd8] sm:$0xff]
      %v228 = vld [vmem:[%s169 + $0xe0] sm:$0xff]
      %v229 = vld [vmem:[%s169 + $0xf0] sm:$0xff]
      %v230 = vld [vmem:[%s169 + $0xf8] sm:$0xff]
      %v231 = vld [vmem:[%s169 + $0x108] sm:$0xff]
      %v232 = vld [vmem:[%s169 + $0x110] sm:$0xff]
      %v233 = vld [vmem:[%s169 + $0x120] sm:$0xff]
      %v234 = vld [vmem:[%s169 + $0x128] sm:$0xff]
      %v235 = vld [vmem:[%s169 + $0x138] sm:$0xff]
      %v236 = vld [vmem:[%s169 + $0x140] sm:$0xff]
      %v237 = vld [vmem:[%s169 + $0x150] sm:$0xff]
      %v238 = vld [vmem:[%s169 + $0x158] sm:$0xff]
      %v239 = vld [vmem:[%s169 + $0x168] sm:$0xff]
      %v240 = vld [vmem:[%s169 + $0x170] sm:$0xff]
      %v241 = vld [vmem:[#allocation2] sm:$0xff]
      %v242 = vld [vmem:[#allocation2 + $0x8] sm:$0xff]
      %v243 = vld [vmem:[#allocation2 + $0x10] sm:$0xff]
      %v244 = vld [vmem:[#allocation2 + $0x18] sm:$0xff]
      %v245 = vld [vmem:[#allocation2 + $0x20] sm:$0xff]
      %v246 = vld [vmem:[#allocation2 + $0x28] sm:$0xff]
      %v247 = vld [vmem:[#allocation2 + $0x30] sm:$0xff]
      %v248 = vld [vmem:[#allocation2 + $0x38] sm:$0xff]
      %v249 = vld [vmem:[#allocation2 + $0x40] sm:$0xff]
      %v250 = vld [vmem:[#allocation2 + $0x48] sm:$0xff]
      %v251 = vld [vmem:[#allocation2 + $0x50] sm:$0xff]
      %v252 = vld [vmem:[#allocation2 + $0x58] sm:$0xff]
      %v253 = vld [vmem:[#allocation2 + $0x60] sm:$0xff]
      %v254 = vld [vmem:[#allocation2 + $0x68] sm:$0xff]
      %v255 = vld [vmem:[#allocation2 + $0x70] sm:$0xff]
      %v256 = vld [vmem:[#allocation2 + $0x78] sm:$0xff]
      %v257 = vld [vmem:[#allocation2 + $0x80] sm:$0xff]
      %v258 = vld [vmem:[#allocation2 + $0x88] sm:$0xff]
      %v259 = vld [vmem:[#allocation2 + $0x90] sm:$0xff]
      %v260 = vld [vmem:[#allocation2 + $0x98] sm:$0xff]
      %v261 = vld [vmem:[#allocation2 + $0xa0] sm:$0xff]
      %v262 = vld [vmem:[#allocation2 + $0xa8] sm:$0xff]
      %v263 = vld [vmem:[#allocation2 + $0xb0] sm:$0xff]
      %v264 = vld [vmem:[#allocation2 + $0xb8] sm:$0xff]
      %v265 = vld [vmem:[#allocation2 + $0xc0] sm:$0xff]
      %v266 = vld [vmem:[#allocation2 + $0xc8] sm:$0xff]
      %v267 = vld [vmem:[#allocation2 + $0xd0] sm:$0xff]
      %v268 = vld [vmem:[#allocation2 + $0xd8] sm:$0xff]
      %v269 = vld [vmem:[#allocation2 + $0xe0] sm:$0xff]
      %v270 = vld [vmem:[#allocation2 + $0xe8] sm:$0xff]
      %v271 = vld [vmem:[#allocation2 + $0xf0] sm:$0xff]
      %v272 = vld [vmem:[#allocation2 + $0xf8] sm:$0xff]
      %v273 = vld [vmem:[%s1] sm:$0xf]
      %vm274 = vcmask 31744
      %v276 = vsel %vm274, %v209, 0
      %v279 = vsel %vm274, %v210, 0
      %v282 = vsel %vm274, %v211, 0
      %v285 = vsel %vm274, %v212, 0
      %v288 = vsel %vm274, %v213, 0
      %v291 = vsel %vm274, %v214, 0
      %v294 = vsel %vm274, %v215, 0
      %v297 = vsel %vm274, %v216, 0
      %v300 = vsel %vm274, %v217, 0
      %v303 = vsel %vm274, %v218, 0
      %v306 = vsel %vm274, %v219, 0
      %v309 = vsel %vm274, %v220, 0
      %v312 = vsel %vm274, %v221, 0
      %v315 = vsel %vm274, %v222, 0
      %v318 = vsel %vm274, %v223, 0
      %v321 = vsel %vm274, %v224, 0
      %v324 = vsel %vm274, %v225, 0
      %v327 = vsel %vm274, %v226, 0
      %v330 = vsel %vm274, %v227, 0
      %v333 = vsel %vm274, %v228, 0
      %v336 = vsel %vm274, %v229, 0
      %v339 = vsel %vm274, %v230, 0
      %v342 = vsel %vm274, %v231, 0
      %v345 = vsel %vm274, %v232, 0
      %v348 = vsel %vm274, %v233, 0
      %v351 = vsel %vm274, %v234, 0
      %v354 = vsel %vm274, %v235, 0
      %v357 = vsel %vm274, %v236, 0
      %v360 = vsel %vm274, %v237, 0
      %v363 = vsel %vm274, %v238, 0
      %v366 = vsel %vm274, %v239, 0
      %v369 = vsel %vm274, %v240, 0
      %vm371 = vcmask 1043456
      %v373 = vsel %vm371, %v273, 0
      %375 = vmatprep.subr.mxu0 0.0
      %376 = vmatpush1.msra.mxu0 0.0
      %377 = vmatprep.subr.mxu0 0.0
      %378 = vmatpush1.msra.mxu0 0.0
      %379 = vmatprep.subr.mxu0 0.0
      %380 = vmatpush1.msra.mxu0 0.0
      %381 = vmatprep.subr.mxu0 0.0
      %382 = vmatpush1.msra.mxu0 0.0
      %383 = vmatprep.subr.mxu0 0.0
      %384 = vmatpush1.msra.mxu0 0.0
      %385 = vmatprep.subr.mxu0 0.0
      %386 = vmatpush1.msra.mxu0 0.0
      %387 = vmatprep.subr.mxu0 0.0
      %388 = vmatpush1.msra.mxu0 0.0
      %389 = vmatprep.subr.mxu0 0.0
      %390 = vmatpush1.msra.mxu0 0.0
      %391 = vmatprep.subr.mxu0 0.0
      %392 = vmatpush1.msra.mxu0 0.0
      %393 = vmatprep.subr.mxu0 0.0
      %394 = vmatpush1.msra.mxu0 0.0
      %395 = vmatprep.subr.mxu0 0.0
      %396 = vmatpush1.msra.mxu0 0.0
      %397 = vmatprep.subr.mxu0 0.0
      %398 = vmatpush1.msra.mxu0 0.0
      %399 = vmatprep.subr.mxu0 0.0
      %400 = vmatpush1.msra.mxu0 0.0
      %401 = vmatprep.subr.mxu0 0.0
      %402 = vmatpush1.msra.mxu0 0.0
      %403 = vmatprep.subr.mxu0 0.0
      %404 = vmatpush1.msra.mxu0 0.0
      %405 = vmatprep.subr.mxu0 0.0
      %406 = vmatpush1.msra.mxu0 %v373
      %407 = vmatprep.subr.mxu0 0.0
      %408 = vmatpush2.msra.mxu0 0.0
      %409 = vmatprep.subr.mxu0 0.0
      %410 = vmatpush2.msra.mxu0 0.0
      %411 = vmatprep.subr.mxu0 0.0
      %412 = vmatpush2.msra.mxu0 0.0
      %413 = vmatprep.subr.mxu0 0.0
      %414 = vmatpush2.msra.mxu0 0.0
      %415 = vmatprep.subr.mxu0 0.0
      %416 = vmatpush2.msra.mxu0 0.0
      %417 = vmatprep.subr.mxu0 0.0
      %418 = vmatpush2.msra.mxu0 0.0
      %419 = vmatprep.subr.mxu0 0.0
      %420 = vmatpush2.msra.mxu0 0.0
      %421 = vmatprep.subr.mxu0 0.0
      %422 = vmatpush2.msra.mxu0 0.0
      %423 = vmatprep.subr.mxu0 0.0
      %424 = vmatpush2.msra.mxu0 0.0
      %425 = vmatprep.subr.mxu0 0.0
      %426 = vmatpush2.msra.mxu0 0.0
      %427 = vmatprep.subr.mxu0 0.0
      %428 = vmatpush2.msra.mxu0 0.0
      %429 = vmatprep.subr.mxu0 0.0
      %430 = vmatpush2.msra.mxu0 0.0
      %431 = vmatprep.subr.mxu0 0.0
      %432 = vmatpush2.msra.mxu0 0.0
      %433 = vmatprep.subr.mxu0 0.0
      %434 = vmatpush2.msra.mxu0 0.0
      %435 = vmatprep.subr.mxu0 0.0
      %436 = vmatpush2.msra.mxu0 0.0
      %437 = vmatprep.subr.mxu0 0.0
      %438 = vmatpush2.msra.mxu0 0.0
      %439 = vmatprep.mubr.f32.mxu0 0.0
      %440 = vmatmul.mubr.f32.gmra.mxu0 %v276
      %v441 = vpop.f32.mrf.mxu0
      %v442 = vadd.f32 0.0, %v441
      %v443 = vpop.f32.mrf.mxu0
      %444 = vmatprep.mubr.f32.mxu0 0.0
      %445 = vmatmul.mubr.f32.gmra.mxu0 %v279
      %v446 = vpop.f32.mrf.mxu0
      %v447 = vadd.f32 0.0, %v446
      %v448 = vpop.f32.mrf.mxu0
      %449 = vmatprep.mubr.f32.mxu0 0.0
      %450 = vmatmul.mubr.f32.gmra.mxu0 %v282
      %v451 = vpop.f32.mrf.mxu0
      %v452 = vadd.f32 0.0, %v451
      %v453 = vpop.f32.mrf.mxu0
      %454 = vmatprep.mubr.f32.mxu0 0.0
      %455 = vmatmul.mubr.f32.gmra.mxu0 %v285
      %v456 = vpop.f32.mrf.mxu0
      %v457 = vadd.f32 0.0, %v456
      %v458 = vpop.f32.mrf.mxu0
      %459 = vmatprep.mubr.f32.mxu0 0.0
      %460 = vmatmul.mubr.f32.gmra.mxu0 %v288
      %v461 = vpop.f32.mrf.mxu0
      %v462 = vadd.f32 0.0, %v461
      %v463 = vpop.f32.mrf.mxu0
      %464 = vmatprep.mubr.f32.mxu0 0.0
      %465 = vmatmul.mubr.f32.gmra.mxu0 %v291
      %v466 = vpop.f32.mrf.mxu0
      %v467 = vadd.f32 0.0, %v466
      %v468 = vpop.f32.mrf.mxu0
      %469 = vmatprep.mubr.f32.mxu0 0.0
      %470 = vmatmul.mubr.f32.gmra.mxu0 %v294
      %v471 = vpop.f32.mrf.mxu0
      %v472 = vadd.f32 0.0, %v471
      %v473 = vpop.f32.mrf.mxu0
      %474 = vmatprep.mubr.f32.mxu0 0.0
      %475 = vmatmul.mubr.f32.gmra.mxu0 %v297
      %v476 = vpop.f32.mrf.mxu0
      %v477 = vadd.f32 0.0, %v476
      %v478 = vpop.f32.mrf.mxu0
      %479 = vmatprep.mubr.f32.mxu0 0.0
      %480 = vmatmul.mubr.f32.gmra.mxu0 %v300
      %v481 = vpop.f32.mrf.mxu0
      %v482 = vadd.f32 0.0, %v481
      %v483 = vpop.f32.mrf.mxu0
      %484 = vmatprep.mubr.f32.mxu0 0.0
      %485 = vmatmul.mubr.f32.gmra.mxu0 %v303
      %v486 = vpop.f32.mrf.mxu0
      %v487 = vadd.f32 0.0, %v486
      %v488 = vpop.f32.mrf.mxu0
      %489 = vmatprep.mubr.f32.mxu0 0.0
      %490 = vmatmul.mubr.f32.gmra.mxu0 %v306
      %v491 = vpop.f32.mrf.mxu0
      %v492 = vadd.f32 0.0, %v491
      %v493 = vpop.f32.mrf.mxu0
      %494 = vmatprep.mubr.f32.mxu0 0.0
      %495 = vmatmul.mubr.f32.gmra.mxu0 %v309
      %v496 = vpop.f32.mrf.mxu0
      %v497 = vadd.f32 0.0, %v496
      %v498 = vpop.f32.mrf.mxu0
      %499 = vmatprep.mubr.f32.mxu0 0.0
      %500 = vmatmul.mubr.f32.gmra.mxu0 %v312
      %v501 = vpop.f32.mrf.mxu0
      %v502 = vadd.f32 0.0, %v501
      %v503 = vpop.f32.mrf.mxu0
      %504 = vmatprep.mubr.f32.mxu0 0.0
      %505 = vmatmul.mubr.f32.gmra.mxu0 %v315
      %v506 = vpop.f32.mrf.mxu0
      %v507 = vadd.f32 0.0, %v506
      %v508 = vpop.f32.mrf.mxu0
      %509 = vmatprep.mubr.f32.mxu0 0.0
      %510 = vmatmul.mubr.f32.gmra.mxu0 %v318
      %v511 = vpop.f32.mrf.mxu0
      %v512 = vadd.f32 0.0, %v511
      %v513 = vpop.f32.mrf.mxu0
      %514 = vmatprep.mubr.f32.mxu0 0.0
      %515 = vmatmul.mubr.f32.gmra.mxu0 %v321
      %v516 = vpop.f32.mrf.mxu0
      %v517 = vadd.f32 0.0, %v516
      %v518 = vpop.f32.mrf.mxu0
      %519 = vmatprep.mubr.f32.mxu0 0.0
      %520 = vmatmul.mubr.f32.gmra.mxu0 %v324
      %v521 = vpop.f32.mrf.mxu0
      %v522 = vadd.f32 0.0, %v521
      %v523 = vpop.f32.mrf.mxu0
      %524 = vmatprep.mubr.f32.mxu0 0.0
      %525 = vmatmul.mubr.f32.gmra.mxu0 %v327
      %v526 = vpop.f32.mrf.mxu0
      %v527 = vadd.f32 0.0, %v526
      %v528 = vpop.f32.mrf.mxu0
      %529 = vmatprep.mubr.f32.mxu0 0.0
      %530 = vmatmul.mubr.f32.gmra.mxu0 %v330
      %v531 = vpop.f32.mrf.mxu0
      %v532 = vadd.f32 0.0, %v531
      %v533 = vpop.f32.mrf.mxu0
      %534 = vmatprep.mubr.f32.mxu0 0.0
      %535 = vmatmul.mubr.f32.gmra.mxu0 %v333
      %v536 = vpop.f32.mrf.mxu0
      %v537 = vadd.f32 0.0, %v536
      %v538 = vpop.f32.mrf.mxu0
      %539 = vmatprep.mubr.f32.mxu0 0.0
      %540 = vmatmul.mubr.f32.gmra.mxu0 %v336
      %v541 = vpop.f32.mrf.mxu0
      %v542 = vadd.f32 0.0, %v541
      %v543 = vpop.f32.mrf.mxu0
      %544 = vmatprep.mubr.f32.mxu0 0.0
      %545 = vmatmul.mubr.f32.gmra.mxu0 %v339
      %v546 = vpop.f32.mrf.mxu0
      %v547 = vadd.f32 0.0, %v546
      %v548 = vpop.f32.mrf.mxu0
      %549 = vmatprep.mubr.f32.mxu0 0.0
      %550 = vmatmul.mubr.f32.gmra.mxu0 %v342
      %v551 = vpop.f32.mrf.mxu0
      %v552 = vadd.f32 0.0, %v551
      %v553 = vpop.f32.mrf.mxu0
      %554 = vmatprep.mubr.f32.mxu0 0.0
      %555 = vmatmul.mubr.f32.gmra.mxu0 %v345
      %v556 = vpop.f32.mrf.mxu0
      %v557 = vadd.f32 0.0, %v556
      %v558 = vpop.f32.mrf.mxu0
      %559 = vmatprep.mubr.f32.mxu0 0.0
      %560 = vmatmul.mubr.f32.gmra.mxu0 %v348
      %v561 = vpop.f32.mrf.mxu0
      %v562 = vadd.f32 0.0, %v561
      %v563 = vpop.f32.mrf.mxu0
      %564 = vmatprep.mubr.f32.mxu0 0.0
      %565 = vmatmul.mubr.f32.gmra.mxu0 %v351
      %v566 = vpop.f32.mrf.mxu0
      %v567 = vadd.f32 0.0, %v566
      %v568 = vpop.f32.mrf.mxu0
      %569 = vmatprep.mubr.f32.mxu0 0.0
      %570 = vmatmul.mubr.f32.gmra.mxu0 %v354
      %v571 = vpop.f32.mrf.mxu0
      %v572 = vadd.f32 0.0, %v571
      %v573 = vpop.f32.mrf.mxu0
      %574 = vmatprep.mubr.f32.mxu0 0.0
      %575 = vmatmul.mubr.f32.gmra.mxu0 %v357
      %v576 = vpop.f32.mrf.mxu0
      %v577 = vadd.f32 0.0, %v576
      %v578 = vpop.f32.mrf.mxu0
      %579 = vmatprep.mubr.f32.mxu0 0.0
      %580 = vmatmul.mubr.f32.gmra.mxu0 %v360
      %v581 = vpop.f32.mrf.mxu0
      %v582 = vadd.f32 0.0, %v581
      %v583 = vpop.f32.mrf.mxu0
      %584 = vmatprep.mubr.f32.mxu0 0.0
      %585 = vmatmul.mubr.f32.gmra.mxu0 %v363
      %v586 = vpop.f32.mrf.mxu0
      %v587 = vadd.f32 0.0, %v586
      %v588 = vpop.f32.mrf.mxu0
      %589 = vmatprep.mubr.f32.mxu0 0.0
      %590 = vmatmul.mubr.f32.gmra.mxu0 %v366
      %v591 = vpop.f32.mrf.mxu0
      %v592 = vadd.f32 0.0, %v591
      %v593 = vpop.f32.mrf.mxu0
      %594 = vmatprep.mubr.f32.mxu0 0.0
      %595 = vmatmul.mubr.f32.gmra.mxu0 %v369
      %v596 = vpop.f32.mrf.mxu0
      %v597 = vadd.f32 0.0, %v596
      %v598 = vpop.f32.mrf.mxu0
      %599 = vdwg.mxu0
      %v600 = vadd.f32 %v241, %v442
      %v601 = vadd.f32 %v242, %v447
      %v602 = vadd.f32 %v243, %v452
      %v603 = vadd.f32 %v244, %v457
      %v604 = vadd.f32 %v245, %v462
      %v605 = vadd.f32 %v246, %v467
      %v606 = vadd.f32 %v247, %v472
      %v607 = vadd.f32 %v248, %v477
      %v608 = vadd.f32 %v249, %v482
      %v609 = vadd.f32 %v250, %v487
      %v610 = vadd.f32 %v251, %v492
      %v611 = vadd.f32 %v252, %v497
      %v612 = vadd.f32 %v253, %v502
      %v613 = vadd.f32 %v254, %v507
      %v614 = vadd.f32 %v255, %v512
      %v615 = vadd.f32 %v256, %v517
      %v616 = vadd.f32 %v257, %v522
      %v617 = vadd.f32 %v258, %v527
      %v618 = vadd.f32 %v259, %v532
      %v619 = vadd.f32 %v260, %v537
      %v620 = vadd.f32 %v261, %v542
      %v621 = vadd.f32 %v262, %v547
      %v622 = vadd.f32 %v263, %v552
      %v623 = vadd.f32 %v264, %v557
      %v624 = vadd.f32 %v265, %v562
      %v625 = vadd.f32 %v266, %v567
      %v626 = vadd.f32 %v267, %v572
      %v627 = vadd.f32 %v268, %v577
      %v628 = vadd.f32 %v269, %v582
      %v629 = vadd.f32 %v270, %v587
      %v630 = vadd.f32 %v271, %v592
      %v631 = vadd.f32 %v272, %v597
      %632 = vst [vmem:[#allocation2] sm:$0xff] %v600
      %633 = vst [vmem:[#allocation2 + $0x8] sm:$0xff] %v601
      %634 = vst [vmem:[#allocation2 + $0x10] sm:$0xff] %v602
      %635 = vst [vmem:[#allocation2 + $0x18] sm:$0xff] %v603
      %636 = vst [vmem:[#allocation2 + $0x20] sm:$0xff] %v604
      %637 = vst [vmem:[#allocation2 + $0x28] sm:$0xff] %v605
      %638 = vst [vmem:[#allocation2 + $0x30] sm:$0xff] %v606
      %639 = vst [vmem:[#allocation2 + $0x38] sm:$0xff] %v607
      %640 = vst [vmem:[#allocation2 + $0x40] sm:$0xff] %v608
      %641 = vst [vmem:[#allocation2 + $0x48] sm:$0xff] %v609
      %642 = vst [vmem:[#allocation2 + $0x50] sm:$0xff] %v610
      %643 = vst [vmem:[#allocation2 + $0x58] sm:$0xff] %v611
      %644 = vst [vmem:[#allocation2 + $0x60] sm:$0xff] %v612
      %645 = vst [vmem:[#allocation2 + $0x68] sm:$0xff] %v613
      %646 = vst [vmem:[#allocation2 + $0x70] sm:$0xff] %v614
      %647 = vst [vmem:[#allocation2 + $0x78] sm:$0xff] %v615
      %648 = vst [vmem:[#allocation2 + $0x80] sm:$0xff] %v616
      %649 = vst [vmem:[#allocation2 + $0x88] sm:$0xff] %v617
      %650 = vst [vmem:[#allocation2 + $0x90] sm:$0xff] %v618
      %651 = vst [vmem:[#allocation2 + $0x98] sm:$0xff] %v619
      %652 = vst [vmem:[#allocation2 + $0xa0] sm:$0xff] %v620
      %653 = vst [vmem:[#allocation2 + $0xa8] sm:$0xff] %v621
      %654 = vst [vmem:[#allocation2 + $0xb0] sm:$0xff] %v622
      %655 = vst [vmem:[#allocation2 + $0xb8] sm:$0xff] %v623
      %656 = vst [vmem:[#allocation2 + $0xc0] sm:$0xff] %v624
      %657 = vst [vmem:[#allocation2 + $0xc8] sm:$0xff] %v625
      %658 = vst [vmem:[#allocation2 + $0xd0] sm:$0xff] %v626
      %659 = vst [vmem:[#allocation2 + $0xd8] sm:$0xff] %v627
      %660 = vst [vmem:[#allocation2 + $0xe0] sm:$0xff] %v628
      %661 = vst [vmem:[#allocation2 + $0xe8] sm:$0xff] %v629
      %662 = vst [vmem:[#allocation2 + $0xf0] sm:$0xff] %v630
      %663 = vst [vmem:[#allocation2 + $0xf8] sm:$0xff] %v631
      %v664 = vld [vmem:[%s169 + $0x1] sm:$0xff]
      %v665 = vld [vmem:[%s169 + $0x9] sm:$0xff]
      %v666 = vld [vmem:[%s169 + $0x19] sm:$0xff]
      %v667 = vld [vmem:[%s169 + $0x21] sm:$0xff]
      %v668 = vld [vmem:[%s169 + $0x31] sm:$0xff]
      %v669 = vld [vmem:[%s169 + $0x39] sm:$0xff]
      %v670 = vld [vmem:[%s169 + $0x49] sm:$0xff]
      %v671 = vld [vmem:[%s169 + $0x51] sm:$0xff]
      %v672 = vld [vmem:[%s169 + $0x61] sm:$0xff]
      %v673 = vld [vmem:[%s169 + $0x69] sm:$0xff]
      %v674 = vld [vmem:[%s169 + $0x79] sm:$0xff]
      %v675 = vld [vmem:[%s169 + $0x81] sm:$0xff]
      %v676 = vld [vmem:[%s169 + $0x91] sm:$0xff]
      %v677 = vld [vmem:[%s169 + $0x99] sm:$0xff]
      %v678 = vld [vmem:[%s169 + $0xa9] sm:$0xff]
      %v679 = vld [vmem:[%s169 + $0xb1] sm:$0xff]
      %v680 = vld [vmem:[%s169 + $0xc1] sm:$0xff]
      %v681 = vld [vmem:[%s169 + $0xc9] sm:$0xff]
      %v682 = vld [vmem:[%s169 + $0xd9] sm:$0xff]
      %v683 = vld [vmem:[%s169 + $0xe1] sm:$0xff]
      %v684 = vld [vmem:[%s169 + $0xf1] sm:$0xff]
      %v685 = vld [vmem:[%s169 + $0xf9] sm:$0xff]
      %v686 = vld [vmem:[%s169 + $0x109] sm:$0xff]
      %v687 = vld [vmem:[%s169 + $0x111] sm:$0xff]
      %v688 = vld [vmem:[%s169 + $0x121] sm:$0xff]
      %v689 = vld [vmem:[%s169 + $0x129] sm:$0xff]
      %v690 = vld [vmem:[%s169 + $0x139] sm:$0xff]
      %v691 = vld [vmem:[%s169 + $0x141] sm:$0xff]
      %v692 = vld [vmem:[%s169 + $0x151] sm:$0xff]
      %v693 = vld [vmem:[%s169 + $0x159] sm:$0xff]
      %v694 = vld [vmem:[%s169 + $0x169] sm:$0xff]
      %v695 = vld [vmem:[%s169 + $0x171] sm:$0xff]
      %v696 = vld [vmem:[#allocation2] sm:$0xff]
      %v697 = vld [vmem:[#allocation2 + $0x8] sm:$0xff]
      %v698 = vld [vmem:[#allocation2 + $0x10] sm:$0xff]
      %v699 = vld [vmem:[#allocation2 + $0x18] sm:$0xff]
      %v700 = vld [vmem:[#allocation2 + $0x20] sm:$0xff]
      %v701 = vld [vmem:[#allocation2 + $0x28] sm:$0xff]
      %v702 = vld [vmem:[#allocation2 + $0x30] sm:$0xff]
      %v703 = vld [vmem:[#allocation2 + $0x38] sm:$0xff]
      %v704 = vld [vmem:[#allocation2 + $0x40] sm:$0xff]
      %v705 = vld [vmem:[#allocation2 + $0x48] sm:$0xff]
      %v706 = vld [vmem:[#allocation2 + $0x50] sm:$0xff]
      %v707 = vld [vmem:[#allocation2 + $0x58] sm:$0xff]
      %v708 = vld [vmem:[#allocation2 + $0x60] sm:$0xff]
      %v709 = vld [vmem:[#allocation2 + $0x68] sm:$0xff]
      %v710 = vld [vmem:[#allocation2 + $0x70] sm:$0xff]
      %v711 = vld [vmem:[#allocation2 + $0x78] sm:$0xff]
      %v712 = vld [vmem:[#allocation2 + $0x80] sm:$0xff]
      %v713 = vld [vmem:[#allocation2 + $0x88] sm:$0xff]
      %v714 = vld [vmem:[#allocation2 + $0x90] sm:$0xff]
      %v715 = vld [vmem:[#allocation2 + $0x98] sm:$0xff]
      %v716 = vld [vmem:[#allocation2 + $0xa0] sm:$0xff]
      %v717 = vld [vmem:[#allocation2 + $0xa8] sm:$0xff]
      %v718 = vld [vmem:[#allocation2 + $0xb0] sm:$0xff]
      %v719 = vld [vmem:[#allocation2 + $0xb8] sm:$0xff]
      %v720 = vld [vmem:[#allocation2 + $0xc0] sm:$0xff]
      %v721 = vld [vmem:[#allocation2 + $0xc8] sm:$0xff]
      %v722 = vld [vmem:[#allocation2 + $0xd0] sm:$0xff]
      %v723 = vld [vmem:[#allocation2 + $0xd8] sm:$0xff]
      %v724 = vld [vmem:[#allocation2 + $0xe0] sm:$0xff]
      %v725 = vld [vmem:[#allocation2 + $0xe8] sm:$0xff]
      %v726 = vld [vmem:[#allocation2 + $0xf0] sm:$0xff]
      %v727 = vld [vmem:[#allocation2 + $0xf8] sm:$0xff]
      %s728 = scalar_lea.vmem %s1, 4
      %v729 = vld [vmem:[%s728] sm:$0xf]
      %v731 = vsel %vm274, %v664, 0
      %v734 = vsel %vm274, %v665, 0
      %v737 = vsel %vm274, %v666, 0
      %v740 = vsel %vm274, %v667, 0
      %v743 = vsel %vm274, %v668, 0
      %v746 = vsel %vm274, %v669, 0
      %v749 = vsel %vm274, %v670, 0
      %v752 = vsel %vm274, %v671, 0
      %v755 = vsel %vm274, %v672, 0
      %v758 = vsel %vm274, %v673, 0
      %v761 = vsel %vm274, %v674, 0
      %v764 = vsel %vm274, %v675, 0
      %v767 = vsel %vm274, %v676, 0
      %v770 = vsel %vm274, %v677, 0
      %v773 = vsel %vm274, %v678, 0
      %v776 = vsel %vm274, %v679, 0
      %v779 = vsel %vm274, %v680, 0
      %v782 = vsel %vm274, %v681, 0
      %v785 = vsel %vm274, %v682, 0
      %v788 = vsel %vm274, %v683, 0
      %v791 = vsel %vm274, %v684, 0
      %v794 = vsel %vm274, %v685, 0
      %v797 = vsel %vm274, %v686, 0
      %v800 = vsel %vm274, %v687, 0
      %v803 = vsel %vm274, %v688, 0
      %v806 = vsel %vm274, %v689, 0
      %v809 = vsel %vm274, %v690, 0
      %v812 = vsel %vm274, %v691, 0
      %v815 = vsel %vm274, %v692, 0
      %v818 = vsel %vm274, %v693, 0
      %v821 = vsel %vm274, %v694, 0
      %v824 = vsel %vm274, %v695, 0
      %v827 = vsel %vm371, %v729, 0
      %829 = vmatprep.subr.mxu0 0.0
      %830 = vmatpush1.msra.mxu0 0.0
      %831 = vmatprep.subr.mxu0 0.0
      %832 = vmatpush1.msra.mxu0 0.0
      %833 = vmatprep.subr.mxu0 0.0
      %834 = vmatpush1.msra.mxu0 0.0
      %835 = vmatprep.subr.mxu0 0.0
      %836 = vmatpush1.msra.mxu0 0.0
      %837 = vmatprep.subr.mxu0 0.0
      %838 = vmatpush1.msra.mxu0 0.0
      %839 = vmatprep.subr.mxu0 0.0
      %840 = vmatpush1.msra.mxu0 0.0
      %841 = vmatprep.subr.mxu0 0.0
      %842 = vmatpush1.msra.mxu0 0.0
      %843 = vmatprep.subr.mxu0 0.0
      %844 = vmatpush1.msra.mxu0 0.0
      %845 = vmatprep.subr.mxu0 0.0
      %846 = vmatpush1.msra.mxu0 0.0
      %847 = vmatprep.subr.mxu0 0.0
      %848 = vmatpush1.msra.mxu0 0.0
      %849 = vmatprep.subr.mxu0 0.0
      %850 = vmatpush1.msra.mxu0 0.0
      %851 = vmatprep.subr.mxu0 0.0
      %852 = vmatpush1.msra.mxu0 0.0
      %853 = vmatprep.subr.mxu0 0.0
      %854 = vmatpush1.msra.mxu0 0.0
      %855 = vmatprep.subr.mxu0 0.0
      %856 = vmatpush1.msra.mxu0 0.0
      %857 = vmatprep.subr.mxu0 0.0
      %858 = vmatpush1.msra.mxu0 0.0
      %859 = vmatprep.subr.mxu0 0.0
      %860 = vmatpush1.msra.mxu0 %v827
      %861 = vmatprep.subr.mxu0 0.0
      %862 = vmatpush2.msra.mxu0 0.0
      %863 = vmatprep.subr.mxu0 0.0
      %864 = vmatpush2.msra.mxu0 0.0
      %865 = vmatprep.subr.mxu0 0.0
      %866 = vmatpush2.msra.mxu0 0.0
      %867 = vmatprep.subr.mxu0 0.0
      %868 = vmatpush2.msra.mxu0 0.0
      %869 = vmatprep.subr.mxu0 0.0
      %870 = vmatpush2.msra.mxu0 0.0
      %871 = vmatprep.subr.mxu0 0.0
      %872 = vmatpush2.msra.mxu0 0.0
      %873 = vmatprep.subr.mxu0 0.0
      %874 = vmatpush2.msra.mxu0 0.0
      %875 = vmatprep.subr.mxu0 0.0
      %876 = vmatpush2.msra.mxu0 0.0
      %877 = vmatprep.subr.mxu0 0.0
      %878 = vmatpush2.msra.mxu0 0.0
      %879 = vmatprep.subr.mxu0 0.0
      %880 = vmatpush2.msra.mxu0 0.0
      %881 = vmatprep.subr.mxu0 0.0
      %882 = vmatpush2.msra.mxu0 0.0
      %883 = vmatprep.subr.mxu0 0.0
      %884 = vmatpush2.msra.mxu0 0.0
      %885 = vmatprep.subr.mxu0 0.0
      %886 = vmatpush2.msra.mxu0 0.0
      %887 = vmatprep.subr.mxu0 0.0
      %888 = vmatpush2.msra.mxu0 0.0
      %889 = vmatprep.subr.mxu0 0.0
      %890 = vmatpush2.msra.mxu0 0.0
      %891 = vmatprep.subr.mxu0 0.0
      %892 = vmatpush2.msra.mxu0 0.0
      %893 = vmatprep.mubr.f32.mxu0 0.0
      %894 = vmatmul.mubr.f32.gmra.mxu0 %v731
      %v895 = vpop.f32.mrf.mxu0
      %v896 = vadd.f32 0.0, %v895
      %v897 = vpop.f32.mrf.mxu0
      %898 = vmatprep.mubr.f32.mxu0 0.0
      %899 = vmatmul.mubr.f32.gmra.mxu0 %v734
      %v900 = vpop.f32.mrf.mxu0
      %v901 = vadd.f32 0.0, %v900
      %v902 = vpop.f32.mrf.mxu0
      %903 = vmatprep.mubr.f32.mxu0 0.0
      %904 = vmatmul.mubr.f32.gmra.mxu0 %v737
      %v905 = vpop.f32.mrf.mxu0
      %v906 = vadd.f32 0.0, %v905
      %v907 = vpop.f32.mrf.mxu0
      %908 = vmatprep.mubr.f32.mxu0 0.0
      %909 = vmatmul.mubr.f32.gmra.mxu0 %v740
      %v910 = vpop.f32.mrf.mxu0
      %v911 = vadd.f32 0.0, %v910
      %v912 = vpop.f32.mrf.mxu0
      %913 = vmatprep.mubr.f32.mxu0 0.0
      %914 = vmatmul.mubr.f32.gmra.mxu0 %v743
      %v915 = vpop.f32.mrf.mxu0
      %v916 = vadd.f32 0.0, %v915
      %v917 = vpop.f32.mrf.mxu0
      %918 = vmatprep.mubr.f32.mxu0 0.0
      %919 = vmatmul.mubr.f32.gmra.mxu0 %v746
      %v920 = vpop.f32.mrf.mxu0
      %v921 = vadd.f32 0.0, %v920
      %v922 = vpop.f32.mrf.mxu0
      %923 = vmatprep.mubr.f32.mxu0 0.0
      %924 = vmatmul.mubr.f32.gmra.mxu0 %v749
      %v925 = vpop.f32.mrf.mxu0
      %v926 = vadd.f32 0.0, %v925
      %v927 = vpop.f32.mrf.mxu0
      %928 = vmatprep.mubr.f32.mxu0 0.0
      %929 = vmatmul.mubr.f32.gmra.mxu0 %v752
      %v930 = vpop.f32.mrf.mxu0
      %v931 = vadd.f32 0.0, %v930
      %v932 = vpop.f32.mrf.mxu0
      %933 = vmatprep.mubr.f32.mxu0 0.0
      %934 = vmatmul.mubr.f32.gmra.mxu0 %v755
      %v935 = vpop.f32.mrf.mxu0
      %v936 = vadd.f32 0.0, %v935
      %v937 = vpop.f32.mrf.mxu0
      %938 = vmatprep.mubr.f32.mxu0 0.0
      %939 = vmatmul.mubr.f32.gmra.mxu0 %v758
      %v940 = vpop.f32.mrf.mxu0
      %v941 = vadd.f32 0.0, %v940
      %v942 = vpop.f32.mrf.mxu0
      %943 = vmatprep.mubr.f32.mxu0 0.0
      %944 = vmatmul.mubr.f32.gmra.mxu0 %v761
      %v945 = vpop.f32.mrf.mxu0
      %v946 = vadd.f32 0.0, %v945
      %v947 = vpop.f32.mrf.mxu0
      %948 = vmatprep.mubr.f32.mxu0 0.0
      %949 = vmatmul.mubr.f32.gmra.mxu0 %v764
      %v950 = vpop.f32.mrf.mxu0
      %v951 = vadd.f32 0.0, %v950
      %v952 = vpop.f32.mrf.mxu0
      %953 = vmatprep.mubr.f32.mxu0 0.0
      %954 = vmatmul.mubr.f32.gmra.mxu0 %v767
      %v955 = vpop.f32.mrf.mxu0
      %v956 = vadd.f32 0.0, %v955
      %v957 = vpop.f32.mrf.mxu0
      %958 = vmatprep.mubr.f32.mxu0 0.0
      %959 = vmatmul.mubr.f32.gmra.mxu0 %v770
      %v960 = vpop.f32.mrf.mxu0
      %v961 = vadd.f32 0.0, %v960
      %v962 = vpop.f32.mrf.mxu0
      %963 = vmatprep.mubr.f32.mxu0 0.0
      %964 = vmatmul.mubr.f32.gmra.mxu0 %v773
      %v965 = vpop.f32.mrf.mxu0
      %v966 = vadd.f32 0.0, %v965
      %v967 = vpop.f32.mrf.mxu0
      %968 = vmatprep.mubr.f32.mxu0 0.0
      %969 = vmatmul.mubr.f32.gmra.mxu0 %v776
      %v970 = vpop.f32.mrf.mxu0
      %v971 = vadd.f32 0.0, %v970
      %v972 = vpop.f32.mrf.mxu0
      %973 = vmatprep.mubr.f32.mxu0 0.0
      %974 = vmatmul.mubr.f32.gmra.mxu0 %v779
      %v975 = vpop.f32.mrf.mxu0
      %v976 = vadd.f32 0.0, %v975
      %v977 = vpop.f32.mrf.mxu0
      %978 = vmatprep.mubr.f32.mxu0 0.0
      %979 = vmatmul.mubr.f32.gmra.mxu0 %v782
      %v980 = vpop.f32.mrf.mxu0
      %v981 = vadd.f32 0.0, %v980
      %v982 = vpop.f32.mrf.mxu0
      %983 = vmatprep.mubr.f32.mxu0 0.0
      %984 = vmatmul.mubr.f32.gmra.mxu0 %v785
      %v985 = vpop.f32.mrf.mxu0
      %v986 = vadd.f32 0.0, %v985
      %v987 = vpop.f32.mrf.mxu0
      %988 = vmatprep.mubr.f32.mxu0 0.0
      %989 = vmatmul.mubr.f32.gmra.mxu0 %v788
      %v990 = vpop.f32.mrf.mxu0
      %v991 = vadd.f32 0.0, %v990
      %v992 = vpop.f32.mrf.mxu0
      %993 = vmatprep.mubr.f32.mxu0 0.0
      %994 = vmatmul.mubr.f32.gmra.mxu0 %v791
      %v995 = vpop.f32.mrf.mxu0
      %v996 = vadd.f32 0.0, %v995
      %v997 = vpop.f32.mrf.mxu0
      %998 = vmatprep.mubr.f32.mxu0 0.0
      %999 = vmatmul.mubr.f32.gmra.mxu0 %v794
      %v1000 = vpop.f32.mrf.mxu0
      %v1001 = vadd.f32 0.0, %v1000
      %v1002 = vpop.f32.mrf.mxu0
      %1003 = vmatprep.mubr.f32.mxu0 0.0
      %1004 = vmatmul.mubr.f32.gmra.mxu0 %v797
      %v1005 = vpop.f32.mrf.mxu0
      %v1006 = vadd.f32 0.0, %v1005
      %v1007 = vpop.f32.mrf.mxu0
      %1008 = vmatprep.mubr.f32.mxu0 0.0
      %1009 = vmatmul.mubr.f32.gmra.mxu0 %v800
      %v1010 = vpop.f32.mrf.mxu0
      %v1011 = vadd.f32 0.0, %v1010
      %v1012 = vpop.f32.mrf.mxu0
      %1013 = vmatprep.mubr.f32.mxu0 0.0
      %1014 = vmatmul.mubr.f32.gmra.mxu0 %v803
      %v1015 = vpop.f32.mrf.mxu0
      %v1016 = vadd.f32 0.0, %v1015
      %v1017 = vpop.f32.mrf.mxu0
      %1018 = vmatprep.mubr.f32.mxu0 0.0
      %1019 = vmatmul.mubr.f32.gmra.mxu0 %v806
      %v1020 = vpop.f32.mrf.mxu0
      %v1021 = vadd.f32 0.0, %v1020
      %v1022 = vpop.f32.mrf.mxu0
      %1023 = vmatprep.mubr.f32.mxu0 0.0
      %1024 = vmatmul.mubr.f32.gmra.mxu0 %v809
      %v1025 = vpop.f32.mrf.mxu0
      %v1026 = vadd.f32 0.0, %v1025
      %v1027 = vpop.f32.mrf.mxu0
      %1028 = vmatprep.mubr.f32.mxu0 0.0
      %1029 = vmatmul.mubr.f32.gmra.mxu0 %v812
      %v1030 = vpop.f32.mrf.mxu0
      %v1031 = vadd.f32 0.0, %v1030
      %v1032 = vpop.f32.mrf.mxu0
      %1033 = vmatprep.mubr.f32.mxu0 0.0
      %1034 = vmatmul.mubr.f32.gmra.mxu0 %v815
      %v1035 = vpop.f32.mrf.mxu0
      %v1036 = vadd.f32 0.0, %v1035
      %v1037 = vpop.f32.mrf.mxu0
      %1038 = vmatprep.mubr.f32.mxu0 0.0
      %1039 = vmatmul.mubr.f32.gmra.mxu0 %v818
      %v1040 = vpop.f32.mrf.mxu0
      %v1041 = vadd.f32 0.0, %v1040
      %v1042 = vpop.f32.mrf.mxu0
      %1043 = vmatprep.mubr.f32.mxu0 0.0
      %1044 = vmatmul.mubr.f32.gmra.mxu0 %v821
      %v1045 = vpop.f32.mrf.mxu0
      %v1046 = vadd.f32 0.0, %v1045
      %v1047 = vpop.f32.mrf.mxu0
      %1048 = vmatprep.mubr.f32.mxu0 0.0
      %1049 = vmatmul.mubr.f32.gmra.mxu0 %v824
      %v1050 = vpop.f32.mrf.mxu0
      %v1051 = vadd.f32 0.0, %v1050
      %v1052 = vpop.f32.mrf.mxu0
      %1053 = vdwg.mxu0
      %v1054 = vadd.f32 %v696, %v896
      %v1055 = vadd.f32 %v697, %v901
      %v1056 = vadd.f32 %v698, %v906
      %v1057 = vadd.f32 %v699, %v911
      %v1058 = vadd.f32 %v700, %v916
      %v1059 = vadd.f32 %v701, %v921
      %v1060 = vadd.f32 %v702, %v926
      %v1061 = vadd.f32 %v703, %v931
      %v1062 = vadd.f32 %v704, %v936
      %v1063 = vadd.f32 %v705, %v941
      %v1064 = vadd.f32 %v706, %v946
      %v1065 = vadd.f32 %v707, %v951
      %v1066 = vadd.f32 %v708, %v956
      %v1067 = vadd.f32 %v709, %v961
      %v1068 = vadd.f32 %v710, %v966
      %v1069 = vadd.f32 %v711, %v971
      %v1070 = vadd.f32 %v712, %v976
      %v1071 = vadd.f32 %v713, %v981
      %v1072 = vadd.f32 %v714, %v986
      %v1073 = vadd.f32 %v715, %v991
      %v1074 = vadd.f32 %v716, %v996
      %v1075 = vadd.f32 %v717, %v1001
      %v1076 = vadd.f32 %v718, %v1006
      %v1077 = vadd.f32 %v719, %v1011
      %v1078 = vadd.f32 %v720, %v1016
      %v1079 = vadd.f32 %v721, %v1021
      %v1080 = vadd.f32 %v722, %v1026
      %v1081 = vadd.f32 %v723, %v1031
      %v1082 = vadd.f32 %v724, %v1036
      %v1083 = vadd.f32 %v725, %v1041
      %v1084 = vadd.f32 %v726, %v1046
      %v1085 = vadd.f32 %v727, %v1051
      %1086 = vst [vmem:[#allocation2] sm:$0xff] %v1054
      %1087 = vst [vmem:[#allocation2 + $0x8] sm:$0xff] %v1055
      %1088 = vst [vmem:[#allocation2 + $0x10] sm:$0xff] %v1056
      %1089 = vst [vmem:[#allocation2 + $0x18] sm:$0xff] %v1057
      %1090 = vst [vmem:[#allocation2 + $0x20] sm:$0xff] %v1058
      %1091 = vst [vmem:[#allocation2 + $0x28] sm:$0xff] %v1059
      %1092 = vst [vmem:[#allocation2 + $0x30] sm:$0xff] %v1060
      %1093 = vst [vmem:[#allocation2 + $0x38] sm:$0xff] %v1061
      %1094 = vst [vmem:[#allocation2 + $0x40] sm:$0xff] %v1062
      %1095 = vst [vmem:[#allocation2 + $0x48] sm:$0xff] %v1063
      %1096 = vst [vmem:[#allocation2 + $0x50] sm:$0xff] %v1064
      %1097 = vst [vmem:[#allocation2 + $0x58] sm:$0xff] %v1065
      %1098 = vst [vmem:[#allocation2 + $0x60] sm:$0xff] %v1066
      %1099 = vst [vmem:[#allocation2 + $0x68] sm:$0xff] %v1067
      %1100 = vst [vmem:[#allocation2 + $0x70] sm:$0xff] %v1068
      %1101 = vst [vmem:[#allocation2 + $0x78] sm:$0xff] %v1069
      %1102 = vst [vmem:[#allocation2 + $0x80] sm:$0xff] %v1070
      %1103 = vst [vmem:[#allocation2 + $0x88] sm:$0xff] %v1071
      %1104 = vst [vmem:[#allocation2 + $0x90] sm:$0xff] %v1072
      %1105 = vst [vmem:[#allocation2 + $0x98] sm:$0xff] %v1073
      %1106 = vst [vmem:[#allocation2 + $0xa0] sm:$0xff] %v1074
      %1107 = vst [vmem:[#allocation2 + $0xa8] sm:$0xff] %v1075
      %1108 = vst [vmem:[#allocation2 + $0xb0] sm:$0xff] %v1076
      %1109 = vst [vmem:[#allocation2 + $0xb8] sm:$0xff] %v1077
      %1110 = vst [vmem:[#allocation2 + $0xc0] sm:$0xff] %v1078
      %1111 = vst [vmem:[#allocation2 + $0xc8] sm:$0xff] %v1079
      %1112 = vst [vmem:[#allocation2 + $0xd0] sm:$0xff] %v1080
      %1113 = vst [vmem:[#allocation2 + $0xd8] sm:$0xff] %v1081
      %1114 = vst [vmem:[#allocation2 + $0xe0] sm:$0xff] %v1082
      %1115 = vst [vmem:[#allocation2 + $0xe8] sm:$0xff] %v1083
      %1116 = vst [vmem:[#allocation2 + $0xf0] sm:$0xff] %v1084
      %1117 = vst [vmem:[#allocation2 + $0xf8] sm:$0xff] %v1085
      %v1118 = vld [vmem:[%s169 + $0x2] sm:$0xff]
      %v1119 = vld [vmem:[%s169 + $0xa] sm:$0xff]
      %v1120 = vld [vmem:[%s169 + $0x1a] sm:$0xff]
      %v1121 = vld [vmem:[%s169 + $0x22] sm:$0xff]
      %v1122 = vld [vmem:[%s169 + $0x32] sm:$0xff]
      %v1123 = vld [vmem:[%s169 + $0x3a] sm:$0xff]
      %v1124 = vld [vmem:[%s169 + $0x4a] sm:$0xff]
      %v1125 = vld [vmem:[%s169 + $0x52] sm:$0xff]
      %v1126 = vld [vmem:[%s169 + $0x62] sm:$0xff]
      %v1127 = vld [vmem:[%s169 + $0x6a] sm:$0xff]
      %v1128 = vld [vmem:[%s169 + $0x7a] sm:$0xff]
      %v1129 = vld [vmem:[%s169 + $0x82] sm:$0xff]
      %v1130 = vld [vmem:[%s169 + $0x92] sm:$0xff]
      %v1131 = vld [vmem:[%s169 + $0x9a] sm:$0xff]
      %v1132 = vld [vmem:[%s169 + $0xaa] sm:$0xff]
      %v1133 = vld [vmem:[%s169 + $0xb2] sm:$0xff]
      %v1134 = vld [vmem:[%s169 + $0xc2] sm:$0xff]
      %v1135 = vld [vmem:[%s169 + $0xca] sm:$0xff]
      %v1136 = vld [vmem:[%s169 + $0xda] sm:$0xff]
      %v1137 = vld [vmem:[%s169 + $0xe2] sm:$0xff]
      %v1138 = vld [vmem:[%s169 + $0xf2] sm:$0xff]
      %v1139 = vld [vmem:[%s169 + $0xfa] sm:$0xff]
      %v1140 = vld [vmem:[%s169 + $0x10a] sm:$0xff]
      %v1141 = vld [vmem:[%s169 + $0x112] sm:$0xff]
      %v1142 = vld [vmem:[%s169 + $0x122] sm:$0xff]
      %v1143 = vld [vmem:[%s169 + $0x12a] sm:$0xff]
      %v1144 = vld [vmem:[%s169 + $0x13a] sm:$0xff]
      %v1145 = vld [vmem:[%s169 + $0x142] sm:$0xff]
      %v1146 = vld [vmem:[%s169 + $0x152] sm:$0xff]
      %v1147 = vld [vmem:[%s169 + $0x15a] sm:$0xff]
      %v1148 = vld [vmem:[%s169 + $0x16a] sm:$0xff]
      %v1149 = vld [vmem:[%s169 + $0x172] sm:$0xff]
      %v1150 = vld [vmem:[#allocation2] sm:$0xff]
      %v1151 = vld [vmem:[#allocation2 + $0x8] sm:$0xff]
      %v1152 = vld [vmem:[#allocation2 + $0x10] sm:$0xff]
      %v1153 = vld [vmem:[#allocation2 + $0x18] sm:$0xff]
      %v1154 = vld [vmem:[#allocation2 + $0x20] sm:$0xff]
      %v1155 = vld [vmem:[#allocation2 + $0x28] sm:$0xff]
      %v1156 = vld [vmem:[#allocation2 + $0x30] sm:$0xff]
      %v1157 = vld [vmem:[#allocation2 + $0x38] sm:$0xff]
      %v1158 = vld [vmem:[#allocation2 + $0x40] sm:$0xff]
      %v1159 = vld [vmem:[#allocation2 + $0x48] sm:$0xff]
      %v1160 = vld [vmem:[#allocation2 + $0x50] sm:$0xff]
      %v1161 = vld [vmem:[#allocation2 + $0x58] sm:$0xff]
      %v1162 = vld [vmem:[#allocation2 + $0x60] sm:$0xff]
      %v1163 = vld [vmem:[#allocation2 + $0x68] sm:$0xff]
      %v1164 = vld [vmem:[#allocation2 + $0x70] sm:$0xff]
      %v1165 = vld [vmem:[#allocation2 + $0x78] sm:$0xff]
      %v1166 = vld [vmem:[#allocation2 + $0x80] sm:$0xff]
      %v1167 = vld [vmem:[#allocation2 + $0x88] sm:$0xff]
      %v1168 = vld [vmem:[#allocation2 + $0x90] sm:$0xff]
      %v1169 = vld [vmem:[#allocation2 + $0x98] sm:$0xff]
      %v1170 = vld [vmem:[#allocation2 + $0xa0] sm:$0xff]
      %v1171 = vld [vmem:[#allocation2 + $0xa8] sm:$0xff]
      %v1172 = vld [vmem:[#allocation2 + $0xb0] sm:$0xff]
      %v1173 = vld [vmem:[#allocation2 + $0xb8] sm:$0xff]
      %v1174 = vld [vmem:[#allocation2 + $0xc0] sm:$0xff]
      %v1175 = vld [vmem:[#allocation2 + $0xc8] sm:$0xff]
      %v1176 = vld [vmem:[#allocation2 + $0xd0] sm:$0xff]
      %v1177 = vld [vmem:[#allocation2 + $0xd8] sm:$0xff]
      %v1178 = vld [vmem:[#allocation2 + $0xe0] sm:$0xff]
      %v1179 = vld [vmem:[#allocation2 + $0xe8] sm:$0xff]
      %v1180 = vld [vmem:[#allocation2 + $0xf0] sm:$0xff]
      %v1181 = vld [vmem:[#allocation2 + $0xf8] sm:$0xff]
      %s1182 = scalar_lea.vmem %s1, 8
      %v1183 = vld [vmem:[%s1182] sm:$0xf]
      %v1185 = vsel %vm274, %v1118, 0
      %v1188 = vsel %vm274, %v1119, 0
      %v1191 = vsel %vm274, %v1120, 0
      %v1194 = vsel %vm274, %v1121, 0
      %v1197 = vsel %vm274, %v1122, 0
      %v1200 = vsel %vm274, %v1123, 0
      %v1203 = vsel %vm274, %v1124, 0
      %v1206 = vsel %vm274, %v1125, 0
      %v1209 = vsel %vm274, %v1126, 0
      %v1212 = vsel %vm274, %v1127, 0
      %v1215 = vsel %vm274, %v1128, 0
      %v1218 = vsel %vm274, %v1129, 0
      %v1221 = vsel %vm274, %v1130, 0
      %v1224 = vsel %vm274, %v1131, 0
      %v1227 = vsel %vm274, %v1132, 0
      %v1230 = vsel %vm274, %v1133, 0
      %v1233 = vsel %vm274, %v1134, 0
      %v1236 = vsel %vm274, %v1135, 0
      %v1239 = vsel %vm274, %v1136, 0
      %v1242 = vsel %vm274, %v1137, 0
      %v1245 = vsel %vm274, %v1138, 0
      %v1248 = vsel %vm274, %v1139, 0
      %v1251 = vsel %vm274, %v1140, 0
      %v1254 = vsel %vm274, %v1141, 0
      %v1257 = vsel %vm274, %v1142, 0
      %v1260 = vsel %vm274, %v1143, 0
      %v1263 = vsel %vm274, %v1144, 0
      %v1266 = vsel %vm274, %v1145, 0
      %v1269 = vsel %vm274, %v1146, 0
      %v1272 = vsel %vm274, %v1147, 0
      %v1275 = vsel %vm274, %v1148, 0
      %v1278 = vsel %vm274, %v1149, 0
      %v1281 = vsel %vm371, %v1183, 0
      %1283 = vmatprep.subr.mxu0 0.0
      %1284 = vmatpush1.msra.mxu0 0.0
      %1285 = vmatprep.subr.mxu0 0.0
      %1286 = vmatpush1.msra.mxu0 0.0
      %1287 = vmatprep.subr.mxu0 0.0
      %1288 = vmatpush1.msra.mxu0 0.0
      %1289 = vmatprep.subr.mxu0 0.0
      %1290 = vmatpush1.msra.mxu0 0.0
      %1291 = vmatprep.subr.mxu0 0.0
      %1292 = vmatpush1.msra.mxu0 0.0
      %1293 = vmatprep.subr.mxu0 0.0
      %1294 = vmatpush1.msra.mxu0 0.0
      %1295 = vmatprep.subr.mxu0 0.0
      %1296 = vmatpush1.msra.mxu0 0.0
      %1297 = vmatprep.subr.mxu0 0.0
      %1298 = vmatpush1.msra.mxu0 0.0
      %1299 = vmatprep.subr.mxu0 0.0
      %1300 = vmatpush1.msra.mxu0 0.0
      %1301 = vmatprep.subr.mxu0 0.0
      %1302 = vmatpush1.msra.mxu0 0.0
      %1303 = vmatprep.subr.mxu0 0.0
      %1304 = vmatpush1.msra.mxu0 0.0
      %1305 = vmatprep.subr.mxu0 0.0
      %1306 = vmatpush1.msra.mxu0 0.0
      %1307 = vmatprep.subr.mxu0 0.0
      %1308 = vmatpush1.msra.mxu0 0.0
      %1309 = vmatprep.subr.mxu0 0.0
      %1310 = vmatpush1.msra.mxu0 0.0
      %1311 = vmatprep.subr.mxu0 0.0
      %1312 = vmatpush1.msra.mxu0 0.0
      %1313 = vmatprep.subr.mxu0 0.0
      %1314 = vmatpush1.msra.mxu0 %v1281
      %1315 = vmatprep.subr.mxu0 0.0
      %1316 = vmatpush2.msra.mxu0 0.0
      %1317 = vmatprep.subr.mxu0 0.0
      %1318 = vmatpush2.msra.mxu0 0.0
      %1319 = vmatprep.subr.mxu0 0.0
      %1320 = vmatpush2.msra.mxu0 0.0
      %1321 = vmatprep.subr.mxu0 0.0
      %1322 = vmatpush2.msra.mxu0 0.0
      %1323 = vmatprep.subr.mxu0 0.0
      %1324 = vmatpush2.msra.mxu0 0.0
      %1325 = vmatprep.subr.mxu0 0.0
      %1326 = vmatpush2.msra.mxu0 0.0
      %1327 = vmatprep.subr.mxu0 0.0
      %1328 = vmatpush2.msra.mxu0 0.0
      %1329 = vmatprep.subr.mxu0 0.0
      %1330 = vmatpush2.msra.mxu0 0.0
      %1331 = vmatprep.subr.mxu0 0.0
      %1332 = vmatpush2.msra.mxu0 0.0
      %1333 = vmatprep.subr.mxu0 0.0
      %1334 = vmatpush2.msra.mxu0 0.0
      %1335 = vmatprep.subr.mxu0 0.0
      %1336 = vmatpush2.msra.mxu0 0.0
      %1337 = vmatprep.subr.mxu0 0.0
      %1338 = vmatpush2.msra.mxu0 0.0
      %1339 = vmatprep.subr.mxu0 0.0
      %1340 = vmatpush2.msra.mxu0 0.0
      %1341 = vmatprep.subr.mxu0 0.0
      %1342 = vmatpush2.msra.mxu0 0.0
      %1343 = vmatprep.subr.mxu0 0.0
      %1344 = vmatpush2.msra.mxu0 0.0
      %1345 = vmatprep.subr.mxu0 0.0
      %1346 = vmatpush2.msra.mxu0 0.0
      %1347 = vmatprep.mubr.f32.mxu0 0.0
      %1348 = vmatmul.mubr.f32.gmra.mxu0 %v1185
      %v1349 = vpop.f32.mrf.mxu0
      %v1350 = vadd.f32 0.0, %v1349
      %v1351 = vpop.f32.mrf.mxu0
      %1352 = vmatprep.mubr.f32.mxu0 0.0
      %1353 = vmatmul.mubr.f32.gmra.mxu0 %v1188
      %v1354 = vpop.f32.mrf.mxu0
      %v1355 = vadd.f32 0.0, %v1354
      %v1356 = vpop.f32.mrf.mxu0
      %1357 = vmatprep.mubr.f32.mxu0 0.0
      %1358 = vmatmul.mubr.f32.gmra.mxu0 %v1191
      %v1359 = vpop.f32.mrf.mxu0
      %v1360 = vadd.f32 0.0, %v1359
      %v1361 = vpop.f32.mrf.mxu0
      %1362 = vmatprep.mubr.f32.mxu0 0.0
      %1363 = vmatmul.mubr.f32.gmra.mxu0 %v1194
      %v1364 = vpop.f32.mrf.mxu0
      %v1365 = vadd.f32 0.0, %v1364
      %v1366 = vpop.f32.mrf.mxu0
      %1367 = vmatprep.mubr.f32.mxu0 0.0
      %1368 = vmatmul.mubr.f32.gmra.mxu0 %v1197
      %v1369 = vpop.f32.mrf.mxu0
      %v1370 = vadd.f32 0.0, %v1369
      %v1371 = vpop.f32.mrf.mxu0
      %1372 = vmatprep.mubr.f32.mxu0 0.0
      %1373 = vmatmul.mubr.f32.gmra.mxu0 %v1200
      %v1374 = vpop.f32.mrf.mxu0
      %v1375 = vadd.f32 0.0, %v1374
      %v1376 = vpop.f32.mrf.mxu0
      %1377 = vmatprep.mubr.f32.mxu0 0.0
      %1378 = vmatmul.mubr.f32.gmra.mxu0 %v1203
      %v1379 = vpop.f32.mrf.mxu0
      %v1380 = vadd.f32 0.0, %v1379
      %v1381 = vpop.f32.mrf.mxu0
      %1382 = vmatprep.mubr.f32.mxu0 0.0
      %1383 = vmatmul.mubr.f32.gmra.mxu0 %v1206
      %v1384 = vpop.f32.mrf.mxu0
      %v1385 = vadd.f32 0.0, %v1384
      %v1386 = vpop.f32.mrf.mxu0
      %1387 = vmatprep.mubr.f32.mxu0 0.0
      %1388 = vmatmul.mubr.f32.gmra.mxu0 %v1209
      %v1389 = vpop.f32.mrf.mxu0
      %v1390 = vadd.f32 0.0, %v1389
      %v1391 = vpop.f32.mrf.mxu0
      %1392 = vmatprep.mubr.f32.mxu0 0.0
      %1393 = vmatmul.mubr.f32.gmra.mxu0 %v1212
      %v1394 = vpop.f32.mrf.mxu0
      %v1395 = vadd.f32 0.0, %v1394
      %v1396 = vpop.f32.mrf.mxu0
      %1397 = vmatprep.mubr.f32.mxu0 0.0
      %1398 = vmatmul.mubr.f32.gmra.mxu0 %v1215
      %v1399 = vpop.f32.mrf.mxu0
      %v1400 = vadd.f32 0.0, %v1399
      %v1401 = vpop.f32.mrf.mxu0
      %1402 = vmatprep.mubr.f32.mxu0 0.0
      %1403 = vmatmul.mubr.f32.gmra.mxu0 %v1218
      %v1404 = vpop.f32.mrf.mxu0
      %v1405 = vadd.f32 0.0, %v1404
      %v1406 = vpop.f32.mrf.mxu0
      %1407 = vmatprep.mubr.f32.mxu0 0.0
      %1408 = vmatmul.mubr.f32.gmra.mxu0 %v1221
      %v1409 = vpop.f32.mrf.mxu0
      %v1410 = vadd.f32 0.0, %v1409
      %v1411 = vpop.f32.mrf.mxu0
      %1412 = vmatprep.mubr.f32.mxu0 0.0
      %1413 = vmatmul.mubr.f32.gmra.mxu0 %v1224
      %v1414 = vpop.f32.mrf.mxu0
      %v1415 = vadd.f32 0.0, %v1414
      %v1416 = vpop.f32.mrf.mxu0
      %1417 = vmatprep.mubr.f32.mxu0 0.0
      %1418 = vmatmul.mubr.f32.gmra.mxu0 %v1227
      %v1419 = vpop.f32.mrf.mxu0
      %v1420 = vadd.f32 0.0, %v1419
      %v1421 = vpop.f32.mrf.mxu0
      %1422 = vmatprep.mubr.f32.mxu0 0.0
      %1423 = vmatmul.mubr.f32.gmra.mxu0 %v1230
      %v1424 = vpop.f32.mrf.mxu0
      %v1425 = vadd.f32 0.0, %v1424
      %v1426 = vpop.f32.mrf.mxu0
      %1427 = vmatprep.mubr.f32.mxu0 0.0
      %1428 = vmatmul.mubr.f32.gmra.mxu0 %v1233
      %v1429 = vpop.f32.mrf.mxu0
      %v1430 = vadd.f32 0.0, %v1429
      %v1431 = vpop.f32.mrf.mxu0
      %1432 = vmatprep.mubr.f32.mxu0 0.0
      %1433 = vmatmul.mubr.f32.gmra.mxu0 %v1236
      %v1434 = vpop.f32.mrf.mxu0
      %v1435 = vadd.f32 0.0, %v1434
      %v1436 = vpop.f32.mrf.mxu0
      %1437 = vmatprep.mubr.f32.mxu0 0.0
      %1438 = vmatmul.mubr.f32.gmra.mxu0 %v1239
      %v1439 = vpop.f32.mrf.mxu0
      %v1440 = vadd.f32 0.0, %v1439
      %v1441 = vpop.f32.mrf.mxu0
      %1442 = vmatprep.mubr.f32.mxu0 0.0
      %1443 = vmatmul.mubr.f32.gmra.mxu0 %v1242
      %v1444 = vpop.f32.mrf.mxu0
      %v1445 = vadd.f32 0.0, %v1444
      %v1446 = vpop.f32.mrf.mxu0
      %1447 = vmatprep.mubr.f32.mxu0 0.0
      %1448 = vmatmul.mubr.f32.gmra.mxu0 %v1245
      %v1449 = vpop.f32.mrf.mxu0
      %v1450 = vadd.f32 0.0, %v1449
      %v1451 = vpop.f32.mrf.mxu0
      %1452 = vmatprep.mubr.f32.mxu0 0.0
      %1453 = vmatmul.mubr.f32.gmra.mxu0 %v1248
      %v1454 = vpop.f32.mrf.mxu0
      %v1455 = vadd.f32 0.0, %v1454
      %v1456 = vpop.f32.mrf.mxu0
      %1457 = vmatprep.mubr.f32.mxu0 0.0
      %1458 = vmatmul.mubr.f32.gmra.mxu0 %v1251
      %v1459 = vpop.f32.mrf.mxu0
      %v1460 = vadd.f32 0.0, %v1459
      %v1461 = vpop.f32.mrf.mxu0
      %1462 = vmatprep.mubr.f32.mxu0 0.0
      %1463 = vmatmul.mubr.f32.gmra.mxu0 %v1254
      %v1464 = vpop.f32.mrf.mxu0
      %v1465 = vadd.f32 0.0, %v1464
      %v1466 = vpop.f32.mrf.mxu0
      %1467 = vmatprep.mubr.f32.mxu0 0.0
      %1468 = vmatmul.mubr.f32.gmra.mxu0 %v1257
      %v1469 = vpop.f32.mrf.mxu0
      %v1470 = vadd.f32 0.0, %v1469
      %v1471 = vpop.f32.mrf.mxu0
      %1472 = vmatprep.mubr.f32.mxu0 0.0
      %1473 = vmatmul.mubr.f32.gmra.mxu0 %v1260
      %v1474 = vpop.f32.mrf.mxu0
      %v1475 = vadd.f32 0.0, %v1474
      %v1476 = vpop.f32.mrf.mxu0
      %1477 = vmatprep.mubr.f32.mxu0 0.0
      %1478 = vmatmul.mubr.f32.gmra.mxu0 %v1263
      %v1479 = vpop.f32.mrf.mxu0
      %v1480 = vadd.f32 0.0, %v1479
      %v1481 = vpop.f32.mrf.mxu0
      %1482 = vmatprep.mubr.f32.mxu0 0.0
      %1483 = vmatmul.mubr.f32.gmra.mxu0 %v1266
      %v1484 = vpop.f32.mrf.mxu0
      %v1485 = vadd.f32 0.0, %v1484
      %v1486 = vpop.f32.mrf.mxu0
      %1487 = vmatprep.mubr.f32.mxu0 0.0
      %1488 = vmatmul.mubr.f32.gmra.mxu0 %v1269
      %v1489 = vpop.f32.mrf.mxu0
      %v1490 = vadd.f32 0.0, %v1489
      %v1491 = vpop.f32.mrf.mxu0
      %1492 = vmatprep.mubr.f32.mxu0 0.0
      %1493 = vmatmul.mubr.f32.gmra.mxu0 %v1272
      %v1494 = vpop.f32.mrf.mxu0
      %v1495 = vadd.f32 0.0, %v1494
      %v1496 = vpop.f32.mrf.mxu0
      %1497 = vmatprep.mubr.f32.mxu0 0.0
      %1498 = vmatmul.mubr.f32.gmra.mxu0 %v1275
      %v1499 = vpop.f32.mrf.mxu0
      %v1500 = vadd.f32 0.0, %v1499
      %v1501 = vpop.f32.mrf.mxu0
      %1502 = vmatprep.mubr.f32.mxu0 0.0
      %1503 = vmatmul.mubr.f32.gmra.mxu0 %v1278
      %v1504 = vpop.f32.mrf.mxu0
      %v1505 = vadd.f32 0.0, %v1504
      %v1506 = vpop.f32.mrf.mxu0
      %1507 = vdwg.mxu0
      %v1508 = vadd.f32 %v1150, %v1350
      %v1509 = vadd.f32 %v1151, %v1355
      %v1510 = vadd.f32 %v1152, %v1360
      %v1511 = vadd.f32 %v1153, %v1365
      %v1512 = vadd.f32 %v1154, %v1370
      %v1513 = vadd.f32 %v1155, %v1375
      %v1514 = vadd.f32 %v1156, %v1380
      %v1515 = vadd.f32 %v1157, %v1385
      %v1516 = vadd.f32 %v1158, %v1390
      %v1517 = vadd.f32 %v1159, %v1395
      %v1518 = vadd.f32 %v1160, %v1400
      %v1519 = vadd.f32 %v1161, %v1405
      %v1520 = vadd.f32 %v1162, %v1410
      %v1521 = vadd.f32 %v1163, %v1415
      %v1522 = vadd.f32 %v1164, %v1420
      %v1523 = vadd.f32 %v1165, %v1425
      %v1524 = vadd.f32 %v1166, %v1430
      %v1525 = vadd.f32 %v1167, %v1435
      %v1526 = vadd.f32 %v1168, %v1440
      %v1527 = vadd.f32 %v1169, %v1445
      %v1528 = vadd.f32 %v1170, %v1450
      %v1529 = vadd.f32 %v1171, %v1455
      %v1530 = vadd.f32 %v1172, %v1460
      %v1531 = vadd.f32 %v1173, %v1465
      %v1532 = vadd.f32 %v1174, %v1470
      %v1533 = vadd.f32 %v1175, %v1475
      %v1534 = vadd.f32 %v1176, %v1480
      %v1535 = vadd.f32 %v1177, %v1485
      %v1536 = vadd.f32 %v1178, %v1490
      %v1537 = vadd.f32 %v1179, %v1495
      %v1538 = vadd.f32 %v1180, %v1500
      %v1539 = vadd.f32 %v1181, %v1505
      %1540 = vst [vmem:[#allocation2] sm:$0xff] %v1508
      %1541 = vst [vmem:[#allocation2 + $0x8] sm:$0xff] %v1509
      %1542 = vst [vmem:[#allocation2 + $0x10] sm:$0xff] %v1510
      %1543 = vst [vmem:[#allocation2 + $0x18] sm:$0xff] %v1511
      %1544 = vst [vmem:[#allocation2 + $0x20] sm:$0xff] %v1512
      %1545 = vst [vmem:[#allocation2 + $0x28] sm:$0xff] %v1513
      %1546 = vst [vmem:[#allocation2 + $0x30] sm:$0xff] %v1514
      %1547 = vst [vmem:[#allocation2 + $0x38] sm:$0xff] %v1515
      %1548 = vst [vmem:[#allocation2 + $0x40] sm:$0xff] %v1516
      %1549 = vst [vmem:[#allocation2 + $0x48] sm:$0xff] %v1517
      %1550 = vst [vmem:[#allocation2 + $0x50] sm:$0xff] %v1518
      %1551 = vst [vmem:[#allocation2 + $0x58] sm:$0xff] %v1519
      %1552 = vst [vmem:[#allocation2 + $0x60] sm:$0xff] %v1520
      %1553 = vst [vmem:[#allocation2 + $0x68] sm:$0xff] %v1521
      %1554 = vst [vmem:[#allocation2 + $0x70] sm:$0xff] %v1522
      %1555 = vst [vmem:[#allocation2 + $0x78] sm:$0xff] %v1523
      %1556 = vst [vmem:[#allocation2 + $0x80] sm:$0xff] %v1524
      %1557 = vst [vmem:[#allocation2 + $0x88] sm:$0xff] %v1525
      %1558 = vst [vmem:[#allocation2 + $0x90] sm:$0xff] %v1526
      %1559 = vst [vmem:[#allocation2 + $0x98] sm:$0xff] %v1527
      %1560 = vst [vmem:[#allocation2 + $0xa0] sm:$0xff] %v1528
      %1561 = vst [vmem:[#allocation2 + $0xa8] sm:$0xff] %v1529
      %1562 = vst [vmem:[#allocation2 + $0xb0] sm:$0xff] %v1530
      %1563 = vst [vmem:[#allocation2 + $0xb8] sm:$0xff] %v1531
      %1564 = vst [vmem:[#allocation2 + $0xc0] sm:$0xff] %v1532
      %1565 = vst [vmem:[#allocation2 + $0xc8] sm:$0xff] %v1533
      %1566 = vst [vmem:[#allocation2 + $0xd0] sm:$0xff] %v1534
      %1567 = vst [vmem:[#allocation2 + $0xd8] sm:$0xff] %v1535
      %1568 = vst [vmem:[#allocation2 + $0xe0] sm:$0xff] %v1536
      %1569 = vst [vmem:[#allocation2 + $0xe8] sm:$0xff] %v1537
      %1570 = vst [vmem:[#allocation2 + $0xf0] sm:$0xff] %v1538
      %1571 = vst [vmem:[#allocation2 + $0xf8] sm:$0xff] %v1539
      %v1572 = vld [vmem:[%s169 + $0x3] sm:$0xff]
      %v1573 = vld [vmem:[%s169 + $0xb] sm:$0xff]
      %v1574 = vld [vmem:[%s169 + $0x1b] sm:$0xff]
      %v1575 = vld [vmem:[%s169 + $0x23] sm:$0xff]
      %v1576 = vld [vmem:[%s169 + $0x33] sm:$0xff]
      %v1577 = vld [vmem:[%s169 + $0x3b] sm:$0xff]
      %v1578 = vld [vmem:[%s169 + $0x4b] sm:$0xff]
      %v1579 = vld [vmem:[%s169 + $0x53] sm:$0xff]
      %v1580 = vld [vmem:[%s169 + $0x63] sm:$0xff]
      %v1581 = vld [vmem:[%s169 + $0x6b] sm:$0xff]
      %v1582 = vld [vmem:[%s169 + $0x7b] sm:$0xff]
      %v1583 = vld [vmem:[%s169 + $0x83] sm:$0xff]
      %v1584 = vld [vmem:[%s169 + $0x93] sm:$0xff]
      %v1585 = vld [vmem:[%s169 + $0x9b] sm:$0xff]
      %v1586 = vld [vmem:[%s169 + $0xab] sm:$0xff]
      %v1587 = vld [vmem:[%s169 + $0xb3] sm:$0xff]
      %v1588 = vld [vmem:[%s169 + $0xc3] sm:$0xff]
      %v1589 = vld [vmem:[%s169 + $0xcb] sm:$0xff]
      %v1590 = vld [vmem:[%s169 + $0xdb] sm:$0xff]
      %v1591 = vld [vmem:[%s169 + $0xe3] sm:$0xff]
      %v1592 = vld [vmem:[%s169 + $0xf3] sm:$0xff]
      %v1593 = vld [vmem:[%s169 + $0xfb] sm:$0xff]
      %v1594 = vld [vmem:[%s169 + $0x10b] sm:$0xff]
      %v1595 = vld [vmem:[%s169 + $0x113] sm:$0xff]
      %v1596 = vld [vmem:[%s169 + $0x123] sm:$0xff]
      %v1597 = vld [vmem:[%s169 + $0x12b] sm:$0xff]
      %v1598 = vld [vmem:[%s169 + $0x13b] sm:$0xff]
      %v1599 = vld [vmem:[%s169 + $0x143] sm:$0xff]
      %v1600 = vld [vmem:[%s169 + $0x153] sm:$0xff]
      %v1601 = vld [vmem:[%s169 + $0x15b] sm:$0xff]
      %v1602 = vld [vmem:[%s169 + $0x16b] sm:$0xff]
      %v1603 = vld [vmem:[%s169 + $0x173] sm:$0xff]
      %v1604 = vld [vmem:[#allocation2] sm:$0xff]
      %v1605 = vld [vmem:[#allocation2 + $0x8] sm:$0xff]
      %v1606 = vld [vmem:[#allocation2 + $0x10] sm:$0xff]
      %v1607 = vld [vmem:[#allocation2 + $0x18] sm:$0xff]
      %v1608 = vld [vmem:[#allocation2 + $0x20] sm:$0xff]
      %v1609 = vld [vmem:[#allocation2 + $0x28] sm:$0xff]
      %v1610 = vld [vmem:[#allocation2 + $0x30] sm:$0xff]
      %v1611 = vld [vmem:[#allocation2 + $0x38] sm:$0xff]
      %v1612 = vld [vmem:[#allocation2 + $0x40] sm:$0xff]
      %v1613 = vld [vmem:[#allocation2 + $0x48] sm:$0xff]
      %v1614 = vld [vmem:[#allocation2 + $0x50] sm:$0xff]
      %v1615 = vld [vmem:[#allocation2 + $0x58] sm:$0xff]
      %v1616 = vld [vmem:[#allocation2 + $0x60] sm:$0xff]
      %v1617 = vld [vmem:[#allocation2 + $0x68] sm:$0xff]
      %v1618 = vld [vmem:[#allocation2 + $0x70] sm:$0xff]
      %v1619 = vld [vmem:[#allocation2 + $0x78] sm:$0xff]
      %v1620 = vld [vmem:[#allocation2 + $0x80] sm:$0xff]
      %v1621 = vld [vmem:[#allocation2 + $0x88] sm:$0xff]
      %v1622 = vld [vmem:[#allocation2 + $0x90] sm:$0xff]
      %v1623 = vld [vmem:[#allocation2 + $0x98] sm:$0xff]
      %v1624 = vld [vmem:[#allocation2 + $0xa0] sm:$0xff]
      %v1625 = vld [vmem:[#allocation2 + $0xa8] sm:$0xff]
      %v1626 = vld [vmem:[#allocation2 + $0xb0] sm:$0xff]
      %v1627 = vld [vmem:[#allocation2 + $0xb8] sm:$0xff]
      %v1628 = vld [vmem:[#allocation2 + $0xc0] sm:$0xff]
      %v1629 = vld [vmem:[#allocation2 + $0xc8] sm:$0xff]
      %v1630 = vld [vmem:[#allocation2 + $0xd0] sm:$0xff]
      %v1631 = vld [vmem:[#allocation2 + $0xd8] sm:$0xff]
      %v1632 = vld [vmem:[#allocation2 + $0xe0] sm:$0xff]
      %v1633 = vld [vmem:[#allocation2 + $0xe8] sm:$0xff]
      %v1634 = vld [vmem:[#allocation2 + $0xf0] sm:$0xff]
      %v1635 = vld [vmem:[#allocation2 + $0xf8] sm:$0xff]
      %s1636 = scalar_lea.vmem %s1, 12
      %v1637 = vld [vmem:[%s1636] sm:$0xf]
      %v1639 = vsel %vm274, %v1572, 0
      %v1642 = vsel %vm274, %v1573, 0
      %v1645 = vsel %vm274, %v1574, 0
      %v1648 = vsel %vm274, %v1575, 0
      %v1651 = vsel %vm274, %v1576, 0
      %v1654 = vsel %vm274, %v1577, 0
      %v1657 = vsel %vm274, %v1578, 0
      %v1660 = vsel %vm274, %v1579, 0
      %v1663 = vsel %vm274, %v1580, 0
      %v1666 = vsel %vm274, %v1581, 0
      %v1669 = vsel %vm274, %v1582, 0
      %v1672 = vsel %vm274, %v1583, 0
      %v1675 = vsel %vm274, %v1584, 0
      %v1678 = vsel %vm274, %v1585, 0
      %v1681 = vsel %vm274, %v1586, 0
      %v1684 = vsel %vm274, %v1587, 0
      %v1687 = vsel %vm274, %v1588, 0
      %v1690 = vsel %vm274, %v1589, 0
      %v1693 = vsel %vm274, %v1590, 0
      %v1696 = vsel %vm274, %v1591, 0
      %v1699 = vsel %vm274, %v1592, 0
      %v1702 = vsel %vm274, %v1593, 0
      %v1705 = vsel %vm274, %v1594, 0
      %v1708 = vsel %vm274, %v1595, 0
      %v1711 = vsel %vm274, %v1596, 0
      %v1714 = vsel %vm274, %v1597, 0
      %v1717 = vsel %vm274, %v1598, 0
      %v1720 = vsel %vm274, %v1599, 0
      %v1723 = vsel %vm274, %v1600, 0
      %v1726 = vsel %vm274, %v1601, 0
      %v1729 = vsel %vm274, %v1602, 0
      %v1732 = vsel %vm274, %v1603, 0
      %v1735 = vsel %vm371, %v1637, 0
      %1737 = vmatprep.subr.mxu0 0.0
      %1738 = vmatpush1.msra.mxu0 0.0
      %1739 = vmatprep.subr.mxu0 0.0
      %1740 = vmatpush1.msra.mxu0 0.0
      %1741 = vmatprep.subr.mxu0 0.0
      %1742 = vmatpush1.msra.mxu0 0.0
      %1743 = vmatprep.subr.mxu0 0.0
      %1744 = vmatpush1.msra.mxu0 0.0
      %1745 = vmatprep.subr.mxu0 0.0
      %1746 = vmatpush1.msra.mxu0 0.0
      %1747 = vmatprep.subr.mxu0 0.0
      %1748 = vmatpush1.msra.mxu0 0.0
      %1749 = vmatprep.subr.mxu0 0.0
      %1750 = vmatpush1.msra.mxu0 0.0
      %1751 = vmatprep.subr.mxu0 0.0
      %1752 = vmatpush1.msra.mxu0 0.0
      %1753 = vmatprep.subr.mxu0 0.0
      %1754 = vmatpush1.msra.mxu0 0.0
      %1755 = vmatprep.subr.mxu0 0.0
      %1756 = vmatpush1.msra.mxu0 0.0
      %1757 = vmatprep.subr.mxu0 0.0
      %1758 = vmatpush1.msra.mxu0 0.0
      %1759 = vmatprep.subr.mxu0 0.0
      %1760 = vmatpush1.msra.mxu0 0.0
      %1761 = vmatprep.subr.mxu0 0.0
      %1762 = vmatpush1.msra.mxu0 0.0
      %1763 = vmatprep.subr.mxu0 0.0
      %1764 = vmatpush1.msra.mxu0 0.0
      %1765 = vmatprep.subr.mxu0 0.0
      %1766 = vmatpush1.msra.mxu0 0.0
      %1767 = vmatprep.subr.mxu0 0.0
      %1768 = vmatpush1.msra.mxu0 %v1735
      %1769 = vmatprep.subr.mxu0 0.0
      %1770 = vmatpush2.msra.mxu0 0.0
      %1771 = vmatprep.subr.mxu0 0.0
      %1772 = vmatpush2.msra.mxu0 0.0
      %1773 = vmatprep.subr.mxu0 0.0
      %1774 = vmatpush2.msra.mxu0 0.0
      %1775 = vmatprep.subr.mxu0 0.0
      %1776 = vmatpush2.msra.mxu0 0.0
      %1777 = vmatprep.subr.mxu0 0.0
      %1778 = vmatpush2.msra.mxu0 0.0
      %1779 = vmatprep.subr.mxu0 0.0
      %1780 = vmatpush2.msra.mxu0 0.0
      %1781 = vmatprep.subr.mxu0 0.0
      %1782 = vmatpush2.msra.mxu0 0.0
      %1783 = vmatprep.subr.mxu0 0.0
      %1784 = vmatpush2.msra.mxu0 0.0
      %1785 = vmatprep.subr.mxu0 0.0
      %1786 = vmatpush2.msra.mxu0 0.0
      %1787 = vmatprep.subr.mxu0 0.0
      %1788 = vmatpush2.msra.mxu0 0.0
      %1789 = vmatprep.subr.mxu0 0.0
      %1790 = vmatpush2.msra.mxu0 0.0
      %1791 = vmatprep.subr.mxu0 0.0
      %1792 = vmatpush2.msra.mxu0 0.0
      %1793 = vmatprep.subr.mxu0 0.0
      %1794 = vmatpush2.msra.mxu0 0.0
      %1795 = vmatprep.subr.mxu0 0.0
      %1796 = vmatpush2.msra.mxu0 0.0
      %1797 = vmatprep.subr.mxu0 0.0
      %1798 = vmatpush2.msra.mxu0 0.0
      %1799 = vmatprep.subr.mxu0 0.0
      %1800 = vmatpush2.msra.mxu0 0.0
      %1801 = vmatprep.mubr.f32.mxu0 0.0
      %1802 = vmatmul.mubr.f32.gmra.mxu0 %v1639
      %v1803 = vpop.f32.mrf.mxu0
      %v1804 = vadd.f32 0.0, %v1803
      %v1805 = vpop.f32.mrf.mxu0
      %1806 = vmatprep.mubr.f32.mxu0 0.0
      %1807 = vmatmul.mubr.f32.gmra.mxu0 %v1642
      %v1808 = vpop.f32.mrf.mxu0
      %v1809 = vadd.f32 0.0, %v1808
      %v1810 = vpop.f32.mrf.mxu0
      %1811 = vmatprep.mubr.f32.mxu0 0.0
      %1812 = vmatmul.mubr.f32.gmra.mxu0 %v1645
      %v1813 = vpop.f32.mrf.mxu0
      %v1814 = vadd.f32 0.0, %v1813
      %v1815 = vpop.f32.mrf.mxu0
      %1816 = vmatprep.mubr.f32.mxu0 0.0
      %1817 = vmatmul.mubr.f32.gmra.mxu0 %v1648
      %v1818 = vpop.f32.mrf.mxu0
      %v1819 = vadd.f32 0.0, %v1818
      %v1820 = vpop.f32.mrf.mxu0
      %1821 = vmatprep.mubr.f32.mxu0 0.0
      %1822 = vmatmul.mubr.f32.gmra.mxu0 %v1651
      %v1823 = vpop.f32.mrf.mxu0
      %v1824 = vadd.f32 0.0, %v1823
      %v1825 = vpop.f32.mrf.mxu0
      %1826 = vmatprep.mubr.f32.mxu0 0.0
      %1827 = vmatmul.mubr.f32.gmra.mxu0 %v1654
      %v1828 = vpop.f32.mrf.mxu0
      %v1829 = vadd.f32 0.0, %v1828
      %v1830 = vpop.f32.mrf.mxu0
      %1831 = vmatprep.mubr.f32.mxu0 0.0
      %1832 = vmatmul.mubr.f32.gmra.mxu0 %v1657
      %v1833 = vpop.f32.mrf.mxu0
      %v1834 = vadd.f32 0.0, %v1833
      %v1835 = vpop.f32.mrf.mxu0
      %1836 = vmatprep.mubr.f32.mxu0 0.0
      %1837 = vmatmul.mubr.f32.gmra.mxu0 %v1660
      %v1838 = vpop.f32.mrf.mxu0
      %v1839 = vadd.f32 0.0, %v1838
      %v1840 = vpop.f32.mrf.mxu0
      %1841 = vmatprep.mubr.f32.mxu0 0.0
      %1842 = vmatmul.mubr.f32.gmra.mxu0 %v1663
      %v1843 = vpop.f32.mrf.mxu0
      %v1844 = vadd.f32 0.0, %v1843
      %v1845 = vpop.f32.mrf.mxu0
      %1846 = vmatprep.mubr.f32.mxu0 0.0
      %1847 = vmatmul.mubr.f32.gmra.mxu0 %v1666
      %v1848 = vpop.f32.mrf.mxu0
      %v1849 = vadd.f32 0.0, %v1848
      %v1850 = vpop.f32.mrf.mxu0
      %1851 = vmatprep.mubr.f32.mxu0 0.0
      %1852 = vmatmul.mubr.f32.gmra.mxu0 %v1669
      %v1853 = vpop.f32.mrf.mxu0
      %v1854 = vadd.f32 0.0, %v1853
      %v1855 = vpop.f32.mrf.mxu0
      %1856 = vmatprep.mubr.f32.mxu0 0.0
      %1857 = vmatmul.mubr.f32.gmra.mxu0 %v1672
      %v1858 = vpop.f32.mrf.mxu0
      %v1859 = vadd.f32 0.0, %v1858
      %v1860 = vpop.f32.mrf.mxu0
      %1861 = vmatprep.mubr.f32.mxu0 0.0
      %1862 = vmatmul.mubr.f32.gmra.mxu0 %v1675
      %v1863 = vpop.f32.mrf.mxu0
      %v1864 = vadd.f32 0.0, %v1863
      %v1865 = vpop.f32.mrf.mxu0
      %1866 = vmatprep.mubr.f32.mxu0 0.0
      %1867 = vmatmul.mubr.f32.gmra.mxu0 %v1678
      %v1868 = vpop.f32.mrf.mxu0
      %v1869 = vadd.f32 0.0, %v1868
      %v1870 = vpop.f32.mrf.mxu0
      %1871 = vmatprep.mubr.f32.mxu0 0.0
      %1872 = vmatmul.mubr.f32.gmra.mxu0 %v1681
      %v1873 = vpop.f32.mrf.mxu0
      %v1874 = vadd.f32 0.0, %v1873
      %v1875 = vpop.f32.mrf.mxu0
      %1876 = vmatprep.mubr.f32.mxu0 0.0
      %1877 = vmatmul.mubr.f32.gmra.mxu0 %v1684
      %v1878 = vpop.f32.mrf.mxu0
      %v1879 = vadd.f32 0.0, %v1878
      %v1880 = vpop.f32.mrf.mxu0
      %1881 = vmatprep.mubr.f32.mxu0 0.0
      %1882 = vmatmul.mubr.f32.gmra.mxu0 %v1687
      %v1883 = vpop.f32.mrf.mxu0
      %v1884 = vadd.f32 0.0, %v1883
      %v1885 = vpop.f32.mrf.mxu0
      %1886 = vmatprep.mubr.f32.mxu0 0.0
      %1887 = vmatmul.mubr.f32.gmra.mxu0 %v1690
      %v1888 = vpop.f32.mrf.mxu0
      %v1889 = vadd.f32 0.0, %v1888
      %v1890 = vpop.f32.mrf.mxu0
      %1891 = vmatprep.mubr.f32.mxu0 0.0
      %1892 = vmatmul.mubr.f32.gmra.mxu0 %v1693
      %v1893 = vpop.f32.mrf.mxu0
      %v1894 = vadd.f32 0.0, %v1893
      %v1895 = vpop.f32.mrf.mxu0
      %1896 = vmatprep.mubr.f32.mxu0 0.0
      %1897 = vmatmul.mubr.f32.gmra.mxu0 %v1696
      %v1898 = vpop.f32.mrf.mxu0
      %v1899 = vadd.f32 0.0, %v1898
      %v1900 = vpop.f32.mrf.mxu0
      %1901 = vmatprep.mubr.f32.mxu0 0.0
      %1902 = vmatmul.mubr.f32.gmra.mxu0 %v1699
      %v1903 = vpop.f32.mrf.mxu0
      %v1904 = vadd.f32 0.0, %v1903
      %v1905 = vpop.f32.mrf.mxu0
      %1906 = vmatprep.mubr.f32.mxu0 0.0
      %1907 = vmatmul.mubr.f32.gmra.mxu0 %v1702
      %v1908 = vpop.f32.mrf.mxu0
      %v1909 = vadd.f32 0.0, %v1908
      %v1910 = vpop.f32.mrf.mxu0
      %1911 = vmatprep.mubr.f32.mxu0 0.0
      %1912 = vmatmul.mubr.f32.gmra.mxu0 %v1705
      %v1913 = vpop.f32.mrf.mxu0
      %v1914 = vadd.f32 0.0, %v1913
      %v1915 = vpop.f32.mrf.mxu0
      %1916 = vmatprep.mubr.f32.mxu0 0.0
      %1917 = vmatmul.mubr.f32.gmra.mxu0 %v1708
      %v1918 = vpop.f32.mrf.mxu0
      %v1919 = vadd.f32 0.0, %v1918
      %v1920 = vpop.f32.mrf.mxu0
      %1921 = vmatprep.mubr.f32.mxu0 0.0
      %1922 = vmatmul.mubr.f32.gmra.mxu0 %v1711
      %v1923 = vpop.f32.mrf.mxu0
      %v1924 = vadd.f32 0.0, %v1923
      %v1925 = vpop.f32.mrf.mxu0
      %1926 = vmatprep.mubr.f32.mxu0 0.0
      %1927 = vmatmul.mubr.f32.gmra.mxu0 %v1714
      %v1928 = vpop.f32.mrf.mxu0
      %v1929 = vadd.f32 0.0, %v1928
      %v1930 = vpop.f32.mrf.mxu0
      %1931 = vmatprep.mubr.f32.mxu0 0.0
      %1932 = vmatmul.mubr.f32.gmra.mxu0 %v1717
      %v1933 = vpop.f32.mrf.mxu0
      %v1934 = vadd.f32 0.0, %v1933
      %v1935 = vpop.f32.mrf.mxu0
      %1936 = vmatprep.mubr.f32.mxu0 0.0
      %1937 = vmatmul.mubr.f32.gmra.mxu0 %v1720
      %v1938 = vpop.f32.mrf.mxu0
      %v1939 = vadd.f32 0.0, %v1938
      %v1940 = vpop.f32.mrf.mxu0
      %1941 = vmatprep.mubr.f32.mxu0 0.0
      %1942 = vmatmul.mubr.f32.gmra.mxu0 %v1723
      %v1943 = vpop.f32.mrf.mxu0
      %v1944 = vadd.f32 0.0, %v1943
      %v1945 = vpop.f32.mrf.mxu0
      %1946 = vmatprep.mubr.f32.mxu0 0.0
      %1947 = vmatmul.mubr.f32.gmra.mxu0 %v1726
      %v1948 = vpop.f32.mrf.mxu0
      %v1949 = vadd.f32 0.0, %v1948
      %v1950 = vpop.f32.mrf.mxu0
      %1951 = vmatprep.mubr.f32.mxu0 0.0
      %1952 = vmatmul.mubr.f32.gmra.mxu0 %v1729
      %v1953 = vpop.f32.mrf.mxu0
      %v1954 = vadd.f32 0.0, %v1953
      %v1955 = vpop.f32.mrf.mxu0
      %1956 = vmatprep.mubr.f32.mxu0 0.0
      %1957 = vmatmul.mubr.f32.gmra.mxu0 %v1732
      %v1958 = vpop.f32.mrf.mxu0
      %v1959 = vadd.f32 0.0, %v1958
      %v1960 = vpop.f32.mrf.mxu0
      %1961 = vdwg.mxu0
      %v1962 = vadd.f32 %v1604, %v1804
      %v1963 = vadd.f32 %v1605, %v1809
      %v1964 = vadd.f32 %v1606, %v1814
      %v1965 = vadd.f32 %v1607, %v1819
      %v1966 = vadd.f32 %v1608, %v1824
      %v1967 = vadd.f32 %v1609, %v1829
      %v1968 = vadd.f32 %v1610, %v1834
      %v1969 = vadd.f32 %v1611, %v1839
      %v1970 = vadd.f32 %v1612, %v1844
      %v1971 = vadd.f32 %v1613, %v1849
      %v1972 = vadd.f32 %v1614, %v1854
      %v1973 = vadd.f32 %v1615, %v1859
      %v1974 = vadd.f32 %v1616, %v1864
      %v1975 = vadd.f32 %v1617, %v1869
      %v1976 = vadd.f32 %v1618, %v1874
      %v1977 = vadd.f32 %v1619, %v1879
      %v1978 = vadd.f32 %v1620, %v1884
      %v1979 = vadd.f32 %v1621, %v1889
      %v1980 = vadd.f32 %v1622, %v1894
      %v1981 = vadd.f32 %v1623, %v1899
      %v1982 = vadd.f32 %v1624, %v1904
      %v1983 = vadd.f32 %v1625, %v1909
      %v1984 = vadd.f32 %v1626, %v1914
      %v1985 = vadd.f32 %v1627, %v1919
      %v1986 = vadd.f32 %v1628, %v1924
      %v1987 = vadd.f32 %v1629, %v1929
      %v1988 = vadd.f32 %v1630, %v1934
      %v1989 = vadd.f32 %v1631, %v1939
      %v1990 = vadd.f32 %v1632, %v1944
      %v1991 = vadd.f32 %v1633, %v1949
      %v1992 = vadd.f32 %v1634, %v1954
      %v1993 = vadd.f32 %v1635, %v1959
      %1994 = vst [vmem:[#allocation2] sm:$0xff] %v1962
      %1995 = vst [vmem:[#allocation2 + $0x8] sm:$0xff] %v1963
      %1996 = vst [vmem:[#allocation2 + $0x10] sm:$0xff] %v1964
      %1997 = vst [vmem:[#allocation2 + $0x18] sm:$0xff] %v1965
      %1998 = vst [vmem:[#allocation2 + $0x20] sm:$0xff] %v1966
      %1999 = vst [vmem:[#allocation2 + $0x28] sm:$0xff] %v1967
      %2000 = vst [vmem:[#allocation2 + $0x30] sm:$0xff] %v1968
      %2001 = vst [vmem:[#allocation2 + $0x38] sm:$0xff] %v1969
      %2002 = vst [vmem:[#allocation2 + $0x40] sm:$0xff] %v1970
      %2003 = vst [vmem:[#allocation2 + $0x48] sm:$0xff] %v1971
      %2004 = vst [vmem:[#allocation2 + $0x50] sm:$0xff] %v1972
      %2005 = vst [vmem:[#allocation2 + $0x58] sm:$0xff] %v1973
      %2006 = vst [vmem:[#allocation2 + $0x60] sm:$0xff] %v1974
      %2007 = vst [vmem:[#allocation2 + $0x68] sm:$0xff] %v1975
      %2008 = vst [vmem:[#allocation2 + $0x70] sm:$0xff] %v1976
      %2009 = vst [vmem:[#allocation2 + $0x78] sm:$0xff] %v1977
      %2010 = vst [vmem:[#allocation2 + $0x80] sm:$0xff] %v1978
      %2011 = vst [vmem:[#allocation2 + $0x88] sm:$0xff] %v1979
      %2012 = vst [vmem:[#allocation2 + $0x90] sm:$0xff] %v1980
      %2013 = vst [vmem:[#allocation2 + $0x98] sm:$0xff] %v1981
      %2014 = vst [vmem:[#allocation2 + $0xa0] sm:$0xff] %v1982
      %2015 = vst [vmem:[#allocation2 + $0xa8] sm:$0xff] %v1983
      %2016 = vst [vmem:[#allocation2 + $0xb0] sm:$0xff] %v1984
      %2017 = vst [vmem:[#allocation2 + $0xb8] sm:$0xff] %v1985
      %2018 = vst [vmem:[#allocation2 + $0xc0] sm:$0xff] %v1986
      %2019 = vst [vmem:[#allocation2 + $0xc8] sm:$0xff] %v1987
      %2020 = vst [vmem:[#allocation2 + $0xd0] sm:$0xff] %v1988
      %2021 = vst [vmem:[#allocation2 + $0xd8] sm:$0xff] %v1989
      %2022 = vst [vmem:[#allocation2 + $0xe0] sm:$0xff] %v1990
      %2023 = vst [vmem:[#allocation2 + $0xe8] sm:$0xff] %v1991
      %2024 = vst [vmem:[#allocation2 + $0xf0] sm:$0xff] %v1992
      %2025 = vst [vmem:[#allocation2 + $0xf8] sm:$0xff] %v1993
      %v2026 = vld [vmem:[%s169 + $0x4] sm:$0xff]
      %v2027 = vld [vmem:[%s169 + $0xc] sm:$0xff]
      %v2028 = vld [vmem:[%s169 + $0x1c] sm:$0xff]
      %v2029 = vld [vmem:[%s169 + $0x24] sm:$0xff]
      %v2030 = vld [vmem:[%s169 + $0x34] sm:$0xff]
      %v2031 = vld [vmem:[%s169 + $0x3c] sm:$0xff]
      %v2032 = vld [vmem:[%s169 + $0x4c] sm:$0xff]
      %v2033 = vld [vmem:[%s169 + $0x54] sm:$0xff]
      %v2034 = vld [vmem:[%s169 + $0x64] sm:$0xff]
      %v2035 = vld [vmem:[%s169 + $0x6c] sm:$0xff]
      %v2036 = vld [vmem:[%s169 + $0x7c] sm:$0xff]
      %v2037 = vld [vmem:[%s169 + $0x84] sm:$0xff]
      %v2038 = vld [vmem:[%s169 + $0x94] sm:$0xff]
      %v2039 = vld [vmem:[%s169 + $0x9c] sm:$0xff]
      %v2040 = vld [vmem:[%s169 + $0xac] sm:$0xff]
      %v2041 = vld [vmem:[%s169 + $0xb4] sm:$0xff]
      %v2042 = vld [vmem:[%s169 + $0xc4] sm:$0xff]
      %v2043 = vld [vmem:[%s169 + $0xcc] sm:$0xff]
      %v2044 = vld [vmem:[%s169 + $0xdc] sm:$0xff]
      %v2045 = vld [vmem:[%s169 + $0xe4] sm:$0xff]
      %v2046 = vld [vmem:[%s169 + $0xf4] sm:$0xff]
      %v2047 = vld [vmem:[%s169 + $0xfc] sm:$0xff]
      %v2048 = vld [vmem:[%s169 + $0x10c] sm:$0xff]
      %v2049 = vld [vmem:[%s169 + $0x114] sm:$0xff]
      %v2050 = vld [vmem:[%s169 + $0x124] sm:$0xff]
      %v2051 = vld [vmem:[%s169 + $0x12c] sm:$0xff]
      %v2052 = vld [vmem:[%s169 + $0x13c] sm:$0xff]
      %v2053 = vld [vmem:[%s169 + $0x144] sm:$0xff]
      %v2054 = vld [vmem:[%s169 + $0x154] sm:$0xff]
      %v2055 = vld [vmem:[%s169 + $0x15c] sm:$0xff]
      %v2056 = vld [vmem:[%s169 + $0x16c] sm:$0xff]
      %v2057 = vld [vmem:[%s169 + $0x174] sm:$0xff]
      %v2058 = vld [vmem:[#allocation2] sm:$0xff]
      %v2059 = vld [vmem:[#allocation2 + $0x8] sm:$0xff]
      %v2060 = vld [vmem:[#allocation2 + $0x10] sm:$0xff]
      %v2061 = vld [vmem:[#allocation2 + $0x18] sm:$0xff]
      %v2062 = vld [vmem:[#allocation2 + $0x20] sm:$0xff]
      %v2063 = vld [vmem:[#allocation2 + $0x28] sm:$0xff]
      %v2064 = vld [vmem:[#allocation2 + $0x30] sm:$0xff]
      %v2065 = vld [vmem:[#allocation2 + $0x38] sm:$0xff]
      %v2066 = vld [vmem:[#allocation2 + $0x40] sm:$0xff]
      %v2067 = vld [vmem:[#allocation2 + $0x48] sm:$0xff]
      %v2068 = vld [vmem:[#allocation2 + $0x50] sm:$0xff]
      %v2069 = vld [vmem:[#allocation2 + $0x58] sm:$0xff]
      %v2070 = vld [vmem:[#allocation2 + $0x60] sm:$0xff]
      %v2071 = vld [vmem:[#allocation2 + $0x68] sm:$0xff]
      %v2072 = vld [vmem:[#allocation2 + $0x70] sm:$0xff]
      %v2073 = vld [vmem:[#allocation2 + $0x78] sm:$0xff]
      %v2074 = vld [vmem:[#allocation2 + $0x80] sm:$0xff]
      %v2075 = vld [vmem:[#allocation2 + $0x88] sm:$0xff]
      %v2076 = vld [vmem:[#allocation2 + $0x90] sm:$0xff]
      %v2077 = vld [vmem:[#allocation2 + $0x98] sm:$0xff]
      %v2078 = vld [vmem:[#allocation2 + $0xa0] sm:$0xff]
      %v2079 = vld [vmem:[#allocation2 + $0xa8] sm:$0xff]
      %v2080 = vld [vmem:[#allocation2 + $0xb0] sm:$0xff]
      %v2081 = vld [vmem:[#allocation2 + $0xb8] sm:$0xff]
      %v2082 = vld [vmem:[#allocation2 + $0xc0] sm:$0xff]
      %v2083 = vld [vmem:[#allocation2 + $0xc8] sm:$0xff]
      %v2084 = vld [vmem:[#allocation2 + $0xd0] sm:$0xff]
      %v2085 = vld [vmem:[#allocation2 + $0xd8] sm:$0xff]
      %v2086 = vld [vmem:[#allocation2 + $0xe0] sm:$0xff]
      %v2087 = vld [vmem:[#allocation2 + $0xe8] sm:$0xff]
      %v2088 = vld [vmem:[#allocation2 + $0xf0] sm:$0xff]
      %v2089 = vld [vmem:[#allocation2 + $0xf8] sm:$0xff]
      %s2090 = scalar_lea.vmem %s1, 16
      %v2091 = vld [vmem:[%s2090] sm:$0xf]
      %v2093 = vsel %vm274, %v2026, 0
      %v2096 = vsel %vm274, %v2027, 0
      %v2099 = vsel %vm274, %v2028, 0
      %v2102 = vsel %vm274, %v2029, 0
      %v2105 = vsel %vm274, %v2030, 0
      %v2108 = vsel %vm274, %v2031, 0
      %v2111 = vsel %vm274, %v2032, 0
      %v2114 = vsel %vm274, %v2033, 0
      %v2117 = vsel %vm274, %v2034, 0
      %v2120 = vsel %vm274, %v2035, 0
      %v2123 = vsel %vm274, %v2036, 0
      %v2126 = vsel %vm274, %v2037, 0
      %v2129 = vsel %vm274, %v2038, 0
      %v2132 = vsel %vm274, %v2039, 0
      %v2135 = vsel %vm274, %v2040, 0
      %v2138 = vsel %vm274, %v2041, 0
      %v2141 = vsel %vm274, %v2042, 0
      %v2144 = vsel %vm274, %v2043, 0
      %v2147 = vsel %vm274, %v2044, 0
      %v2150 = vsel %vm274, %v2045, 0
      %v2153 = vsel %vm274, %v2046, 0
      %v2156 = vsel %vm274, %v2047, 0
      %v2159 = vsel %vm274, %v2048, 0
      %v2162 = vsel %vm274, %v2049, 0
      %v2165 = vsel %vm274, %v2050, 0
      %v2168 = vsel %vm274, %v2051, 0
      %v2171 = vsel %vm274, %v2052, 0
      %v2174 = vsel %vm274, %v2053, 0
      %v2177 = vsel %vm274, %v2054, 0
      %v2180 = vsel %vm274, %v2055, 0
      %v2183 = vsel %vm274, %v2056, 0
      %v2186 = vsel %vm274, %v2057, 0
      %v2189 = vsel %vm371, %v2091, 0
      %2191 = vmatprep.subr.mxu0 0.0
      %2192 = vmatpush1.msra.mxu0 0.0
      %2193 = vmatprep.subr.mxu0 0.0
      %2194 = vmatpush1.msra.mxu0 0.0
      %2195 = vmatprep.subr.mxu0 0.0
      %2196 = vmatpush1.msra.mxu0 0.0
      %2197 = vmatprep.subr.mxu0 0.0
      %2198 = vmatpush1.msra.mxu0 0.0
      %2199 = vmatprep.subr.mxu0 0.0
      %2200 = vmatpush1.msra.mxu0 0.0
      %2201 = vmatprep.subr.mxu0 0.0
      %2202 = vmatpush1.msra.mxu0 0.0
      %2203 = vmatprep.subr.mxu0 0.0
      %2204 = vmatpush1.msra.mxu0 0.0
      %2205 = vmatprep.subr.mxu0 0.0
      %2206 = vmatpush1.msra.mxu0 0.0
      %2207 = vmatprep.subr.mxu0 0.0
      %2208 = vmatpush1.msra.mxu0 0.0
      %2209 = vmatprep.subr.mxu0 0.0
      %2210 = vmatpush1.msra.mxu0 0.0
      %2211 = vmatprep.subr.mxu0 0.0
      %2212 = vmatpush1.msra.mxu0 0.0
      %2213 = vmatprep.subr.mxu0 0.0
      %2214 = vmatpush1.msra.mxu0 0.0
      %2215 = vmatprep.subr.mxu0 0.0
      %2216 = vmatpush1.msra.mxu0 0.0
      %2217 = vmatprep.subr.mxu0 0.0
      %2218 = vmatpush1.msra.mxu0 0.0
      %2219 = vmatprep.subr.mxu0 0.0
      %2220 = vmatpush1.msra.mxu0 0.0
      %2221 = vmatprep.subr.mxu0 0.0
      %2222 = vmatpush1.msra.mxu0 %v2189
      %2223 = vmatprep.subr.mxu0 0.0
      %2224 = vmatpush2.msra.mxu0 0.0
      %2225 = vmatprep.subr.mxu0 0.0
      %2226 = vmatpush2.msra.mxu0 0.0
      %2227 = vmatprep.subr.mxu0 0.0
      %2228 = vmatpush2.msra.mxu0 0.0
      %2229 = vmatprep.subr.mxu0 0.0
      %2230 = vmatpush2.msra.mxu0 0.0
      %2231 = vmatprep.subr.mxu0 0.0
      %2232 = vmatpush2.msra.mxu0 0.0
      %2233 = vmatprep.subr.mxu0 0.0
      %2234 = vmatpush2.msra.mxu0 0.0
      %2235 = vmatprep.subr.mxu0 0.0
      %2236 = vmatpush2.msra.mxu0 0.0
      %2237 = vmatprep.subr.mxu0 0.0
      %2238 = vmatpush2.msra.mxu0 0.0
      %2239 = vmatprep.subr.mxu0 0.0
      %2240 = vmatpush2.msra.mxu0 0.0
      %2241 = vmatprep.subr.mxu0 0.0
      %2242 = vmatpush2.msra.mxu0 0.0
      %2243 = vmatprep.subr.mxu0 0.0
      %2244 = vmatpush2.msra.mxu0 0.0
      %2245 = vmatprep.subr.mxu0 0.0
      %2246 = vmatpush2.msra.mxu0 0.0
      %2247 = vmatprep.subr.mxu0 0.0
      %2248 = vmatpush2.msra.mxu0 0.0
      %2249 = vmatprep.subr.mxu0 0.0
      %2250 = vmatpush2.msra.mxu0 0.0
      %2251 = vmatprep.subr.mxu0 0.0
      %2252 = vmatpush2.msra.mxu0 0.0
      %2253 = vmatprep.subr.mxu0 0.0
      %2254 = vmatpush2.msra.mxu0 0.0
      %2255 = vmatprep.mubr.f32.mxu0 0.0
      %2256 = vmatmul.mubr.f32.gmra.mxu0 %v2093
      %v2257 = vpop.f32.mrf.mxu0
      %v2258 = vadd.f32 0.0, %v2257
      %v2259 = vpop.f32.mrf.mxu0
      %2260 = vmatprep.mubr.f32.mxu0 0.0
      %2261 = vmatmul.mubr.f32.gmra.mxu0 %v2096
      %v2262 = vpop.f32.mrf.mxu0
      %v2263 = vadd.f32 0.0, %v2262
      %v2264 = vpop.f32.mrf.mxu0
      %2265 = vmatprep.mubr.f32.mxu0 0.0
      %2266 = vmatmul.mubr.f32.gmra.mxu0 %v2099
      %v2267 = vpop.f32.mrf.mxu0
      %v2268 = vadd.f32 0.0, %v2267
      %v2269 = vpop.f32.mrf.mxu0
      %2270 = vmatprep.mubr.f32.mxu0 0.0
      %2271 = vmatmul.mubr.f32.gmra.mxu0 %v2102
      %v2272 = vpop.f32.mrf.mxu0
      %v2273 = vadd.f32 0.0, %v2272
      %v2274 = vpop.f32.mrf.mxu0
      %2275 = vmatprep.mubr.f32.mxu0 0.0
      %2276 = vmatmul.mubr.f32.gmra.mxu0 %v2105
      %v2277 = vpop.f32.mrf.mxu0
      %v2278 = vadd.f32 0.0, %v2277
      %v2279 = vpop.f32.mrf.mxu0
      %2280 = vmatprep.mubr.f32.mxu0 0.0
      %2281 = vmatmul.mubr.f32.gmra.mxu0 %v2108
      %v2282 = vpop.f32.mrf.mxu0
      %v2283 = vadd.f32 0.0, %v2282
      %v2284 = vpop.f32.mrf.mxu0
      %2285 = vmatprep.mubr.f32.mxu0 0.0
      %2286 = vmatmul.mubr.f32.gmra.mxu0 %v2111
      %v2287 = vpop.f32.mrf.mxu0
      %v2288 = vadd.f32 0.0, %v2287
      %v2289 = vpop.f32.mrf.mxu0
      %2290 = vmatprep.mubr.f32.mxu0 0.0
      %2291 = vmatmul.mubr.f32.gmra.mxu0 %v2114
      %v2292 = vpop.f32.mrf.mxu0
      %v2293 = vadd.f32 0.0, %v2292
      %v2294 = vpop.f32.mrf.mxu0
      %2295 = vmatprep.mubr.f32.mxu0 0.0
      %2296 = vmatmul.mubr.f32.gmra.mxu0 %v2117
      %v2297 = vpop.f32.mrf.mxu0
      %v2298 = vadd.f32 0.0, %v2297
      %v2299 = vpop.f32.mrf.mxu0
      %2300 = vmatprep.mubr.f32.mxu0 0.0
      %2301 = vmatmul.mubr.f32.gmra.mxu0 %v2120
      %v2302 = vpop.f32.mrf.mxu0
      %v2303 = vadd.f32 0.0, %v2302
      %v2304 = vpop.f32.mrf.mxu0
      %2305 = vmatprep.mubr.f32.mxu0 0.0
      %2306 = vmatmul.mubr.f32.gmra.mxu0 %v2123
      %v2307 = vpop.f32.mrf.mxu0
      %v2308 = vadd.f32 0.0, %v2307
      %v2309 = vpop.f32.mrf.mxu0
      %2310 = vmatprep.mubr.f32.mxu0 0.0
      %2311 = vmatmul.mubr.f32.gmra.mxu0 %v2126
      %v2312 = vpop.f32.mrf.mxu0
      %v2313 = vadd.f32 0.0, %v2312
      %v2314 = vpop.f32.mrf.mxu0
      %2315 = vmatprep.mubr.f32.mxu0 0.0
      %2316 = vmatmul.mubr.f32.gmra.mxu0 %v2129
      %v2317 = vpop.f32.mrf.mxu0
      %v2318 = vadd.f32 0.0, %v2317
      %v2319 = vpop.f32.mrf.mxu0
      %2320 = vmatprep.mubr.f32.mxu0 0.0
      %2321 = vmatmul.mubr.f32.gmra.mxu0 %v2132
      %v2322 = vpop.f32.mrf.mxu0
      %v2323 = vadd.f32 0.0, %v2322
      %v2324 = vpop.f32.mrf.mxu0
      %2325 = vmatprep.mubr.f32.mxu0 0.0
      %2326 = vmatmul.mubr.f32.gmra.mxu0 %v2135
      %v2327 = vpop.f32.mrf.mxu0
      %v2328 = vadd.f32 0.0, %v2327
      %v2329 = vpop.f32.mrf.mxu0
      %2330 = vmatprep.mubr.f32.mxu0 0.0
      %2331 = vmatmul.mubr.f32.gmra.mxu0 %v2138
      %v2332 = vpop.f32.mrf.mxu0
      %v2333 = vadd.f32 0.0, %v2332
      %v2334 = vpop.f32.mrf.mxu0
      %2335 = vmatprep.mubr.f32.mxu0 0.0
      %2336 = vmatmul.mubr.f32.gmra.mxu0 %v2141
      %v2337 = vpop.f32.mrf.mxu0
      %v2338 = vadd.f32 0.0, %v2337
      %v2339 = vpop.f32.mrf.mxu0
      %2340 = vmatprep.mubr.f32.mxu0 0.0
      %2341 = vmatmul.mubr.f32.gmra.mxu0 %v2144
      %v2342 = vpop.f32.mrf.mxu0
      %v2343 = vadd.f32 0.0, %v2342
      %v2344 = vpop.f32.mrf.mxu0
      %2345 = vmatprep.mubr.f32.mxu0 0.0
      %2346 = vmatmul.mubr.f32.gmra.mxu0 %v2147
      %v2347 = vpop.f32.mrf.mxu0
      %v2348 = vadd.f32 0.0, %v2347
      %v2349 = vpop.f32.mrf.mxu0
      %2350 = vmatprep.mubr.f32.mxu0 0.0
      %2351 = vmatmul.mubr.f32.gmra.mxu0 %v2150
      %v2352 = vpop.f32.mrf.mxu0
      %v2353 = vadd.f32 0.0, %v2352
      %v2354 = vpop.f32.mrf.mxu0
      %2355 = vmatprep.mubr.f32.mxu0 0.0
      %2356 = vmatmul.mubr.f32.gmra.mxu0 %v2153
      %v2357 = vpop.f32.mrf.mxu0
      %v2358 = vadd.f32 0.0, %v2357
      %v2359 = vpop.f32.mrf.mxu0
      %2360 = vmatprep.mubr.f32.mxu0 0.0
      %2361 = vmatmul.mubr.f32.gmra.mxu0 %v2156
      %v2362 = vpop.f32.mrf.mxu0
      %v2363 = vadd.f32 0.0, %v2362
      %v2364 = vpop.f32.mrf.mxu0
      %2365 = vmatprep.mubr.f32.mxu0 0.0
      %2366 = vmatmul.mubr.f32.gmra.mxu0 %v2159
      %v2367 = vpop.f32.mrf.mxu0
      %v2368 = vadd.f32 0.0, %v2367
      %v2369 = vpop.f32.mrf.mxu0
      %2370 = vmatprep.mubr.f32.mxu0 0.0
      %2371 = vmatmul.mubr.f32.gmra.mxu0 %v2162
      %v2372 = vpop.f32.mrf.mxu0
      %v2373 = vadd.f32 0.0, %v2372
      %v2374 = vpop.f32.mrf.mxu0
      %2375 = vmatprep.mubr.f32.mxu0 0.0
      %2376 = vmatmul.mubr.f32.gmra.mxu0 %v2165
      %v2377 = vpop.f32.mrf.mxu0
      %v2378 = vadd.f32 0.0, %v2377
      %v2379 = vpop.f32.mrf.mxu0
      %2380 = vmatprep.mubr.f32.mxu0 0.0
      %2381 = vmatmul.mubr.f32.gmra.mxu0 %v2168
      %v2382 = vpop.f32.mrf.mxu0
      %v2383 = vadd.f32 0.0, %v2382
      %v2384 = vpop.f32.mrf.mxu0
      %2385 = vmatprep.mubr.f32.mxu0 0.0
      %2386 = vmatmul.mubr.f32.gmra.mxu0 %v2171
      %v2387 = vpop.f32.mrf.mxu0
      %v2388 = vadd.f32 0.0, %v2387
      %v2389 = vpop.f32.mrf.mxu0
      %2390 = vmatprep.mubr.f32.mxu0 0.0
      %2391 = vmatmul.mubr.f32.gmra.mxu0 %v2174
      %v2392 = vpop.f32.mrf.mxu0
      %v2393 = vadd.f32 0.0, %v2392
      %v2394 = vpop.f32.mrf.mxu0
      %2395 = vmatprep.mubr.f32.mxu0 0.0
      %2396 = vmatmul.mubr.f32.gmra.mxu0 %v2177
      %v2397 = vpop.f32.mrf.mxu0
      %v2398 = vadd.f32 0.0, %v2397
      %v2399 = vpop.f32.mrf.mxu0
      %2400 = vmatprep.mubr.f32.mxu0 0.0
      %2401 = vmatmul.mubr.f32.gmra.mxu0 %v2180
      %v2402 = vpop.f32.mrf.mxu0
      %v2403 = vadd.f32 0.0, %v2402
      %v2404 = vpop.f32.mrf.mxu0
      %2405 = vmatprep.mubr.f32.mxu0 0.0
      %2406 = vmatmul.mubr.f32.gmra.mxu0 %v2183
      %v2407 = vpop.f32.mrf.mxu0
      %v2408 = vadd.f32 0.0, %v2407
      %v2409 = vpop.f32.mrf.mxu0
      %2410 = vmatprep.mubr.f32.mxu0 0.0
      %2411 = vmatmul.mubr.f32.gmra.mxu0 %v2186
      %v2412 = vpop.f32.mrf.mxu0
      %v2413 = vadd.f32 0.0, %v2412
      %v2414 = vpop.f32.mrf.mxu0
      %2415 = vdwg.mxu0
      %v2416 = vadd.f32 %v2058, %v2258
      %v2417 = vadd.f32 %v2059, %v2263
      %v2418 = vadd.f32 %v2060, %v2268
      %v2419 = vadd.f32 %v2061, %v2273
      %v2420 = vadd.f32 %v2062, %v2278
      %v2421 = vadd.f32 %v2063, %v2283
      %v2422 = vadd.f32 %v2064, %v2288
      %v2423 = vadd.f32 %v2065, %v2293
      %v2424 = vadd.f32 %v2066, %v2298
      %v2425 = vadd.f32 %v2067, %v2303
      %v2426 = vadd.f32 %v2068, %v2308
      %v2427 = vadd.f32 %v2069, %v2313
      %v2428 = vadd.f32 %v2070, %v2318
      %v2429 = vadd.f32 %v2071, %v2323
      %v2430 = vadd.f32 %v2072, %v2328
      %v2431 = vadd.f32 %v2073, %v2333
      %v2432 = vadd.f32 %v2074, %v2338
      %v2433 = vadd.f32 %v2075, %v2343
      %v2434 = vadd.f32 %v2076, %v2348
      %v2435 = vadd.f32 %v2077, %v2353
      %v2436 = vadd.f32 %v2078, %v2358
      %v2437 = vadd.f32 %v2079, %v2363
      %v2438 = vadd.f32 %v2080, %v2368
      %v2439 = vadd.f32 %v2081, %v2373
      %v2440 = vadd.f32 %v2082, %v2378
      %v2441 = vadd.f32 %v2083, %v2383
      %v2442 = vadd.f32 %v2084, %v2388
      %v2443 = vadd.f32 %v2085, %v2393
      %v2444 = vadd.f32 %v2086, %v2398
      %v2445 = vadd.f32 %v2087, %v2403
      %v2446 = vadd.f32 %v2088, %v2408
      %v2447 = vadd.f32 %v2089, %v2413
      %2448 = vst [vmem:[#allocation2] sm:$0xff] %v2416
      %2449 = vst [vmem:[#allocation2 + $0x8] sm:$0xff] %v2417
      %2450 = vst [vmem:[#allocation2 + $0x10] sm:$0xff] %v2418
      %2451 = vst [vmem:[#allocation2 + $0x18] sm:$0xff] %v2419
      %2452 = vst [vmem:[#allocation2 + $0x20] sm:$0xff] %v2420
      %2453 = vst [vmem:[#allocation2 + $0x28] sm:$0xff] %v2421
      %2454 = vst [vmem:[#allocation2 + $0x30] sm:$0xff] %v2422
      %2455 = vst [vmem:[#allocation2 + $0x38] sm:$0xff] %v2423
      %2456 = vst [vmem:[#allocation2 + $0x40] sm:$0xff] %v2424
      %2457 = vst [vmem:[#allocation2 + $0x48] sm:$0xff] %v2425
      %2458 = vst [vmem:[#allocation2 + $0x50] sm:$0xff] %v2426
      %2459 = vst [vmem:[#allocation2 + $0x58] sm:$0xff] %v2427
      %2460 = vst [vmem:[#allocation2 + $0x60] sm:$0xff] %v2428
      %2461 = vst [vmem:[#allocation2 + $0x68] sm:$0xff] %v2429
      %2462 = vst [vmem:[#allocation2 + $0x70] sm:$0xff] %v2430
      %2463 = vst [vmem:[#allocation2 + $0x78] sm:$0xff] %v2431
      %2464 = vst [vmem:[#allocation2 + $0x80] sm:$0xff] %v2432
      %2465 = vst [vmem:[#allocation2 + $0x88] sm:$0xff] %v2433
      %2466 = vst [vmem:[#allocation2 + $0x90] sm:$0xff] %v2434
      %2467 = vst [vmem:[#allocation2 + $0x98] sm:$0xff] %v2435
      %2468 = vst [vmem:[#allocation2 + $0xa0] sm:$0xff] %v2436
      %2469 = vst [vmem:[#allocation2 + $0xa8] sm:$0xff] %v2437
      %2470 = vst [vmem:[#allocation2 + $0xb0] sm:$0xff] %v2438
      %2471 = vst [vmem:[#allocation2 + $0xb8] sm:$0xff] %v2439
      %2472 = vst [vmem:[#allocation2 + $0xc0] sm:$0xff] %v2440
      %2473 = vst [vmem:[#allocation2 + $0xc8] sm:$0xff] %v2441
      %2474 = vst [vmem:[#allocation2 + $0xd0] sm:$0xff] %v2442
      %2475 = vst [vmem:[#allocation2 + $0xd8] sm:$0xff] %v2443
      %2476 = vst [vmem:[#allocation2 + $0xe0] sm:$0xff] %v2444
      %2477 = vst [vmem:[#allocation2 + $0xe8] sm:$0xff] %v2445
      %2478 = vst [vmem:[#allocation2 + $0xf0] sm:$0xff] %v2446
      %2479 = vst [vmem:[#allocation2 + $0xf8] sm:$0xff] %v2447
      %v2480 = vld [vmem:[%s169 + $0x5] sm:$0xff]
      %v2481 = vld [vmem:[%s169 + $0xd] sm:$0xff]
      %v2482 = vld [vmem:[%s169 + $0x1d] sm:$0xff]
      %v2483 = vld [vmem:[%s169 + $0x25] sm:$0xff]
      %v2484 = vld [vmem:[%s169 + $0x35] sm:$0xff]
      %v2485 = vld [vmem:[%s169 + $0x3d] sm:$0xff]
      %v2486 = vld [vmem:[%s169 + $0x4d] sm:$0xff]
      %v2487 = vld [vmem:[%s169 + $0x55] sm:$0xff]
      %v2488 = vld [vmem:[%s169 + $0x65] sm:$0xff]
      %v2489 = vld [vmem:[%s169 + $0x6d] sm:$0xff]
      %v2490 = vld [vmem:[%s169 + $0x7d] sm:$0xff]
      %v2491 = vld [vmem:[%s169 + $0x85] sm:$0xff]
      %v2492 = vld [vmem:[%s169 + $0x95] sm:$0xff]
      %v2493 = vld [vmem:[%s169 + $0x9d] sm:$0xff]
      %v2494 = vld [vmem:[%s169 + $0xad] sm:$0xff]
      %v2495 = vld [vmem:[%s169 + $0xb5] sm:$0xff]
      %v2496 = vld [vmem:[%s169 + $0xc5] sm:$0xff]
      %v2497 = vld [vmem:[%s169 + $0xcd] sm:$0xff]
      %v2498 = vld [vmem:[%s169 + $0xdd] sm:$0xff]
      %v2499 = vld [vmem:[%s169 + $0xe5] sm:$0xff]
      %v2500 = vld [vmem:[%s169 + $0xf5] sm:$0xff]
      %v2501 = vld [vmem:[%s169 + $0xfd] sm:$0xff]
      %v2502 = vld [vmem:[%s169 + $0x10d] sm:$0xff]
      %v2503 = vld [vmem:[%s169 + $0x115] sm:$0xff]
      %v2504 = vld [vmem:[%s169 + $0x125] sm:$0xff]
      %v2505 = vld [vmem:[%s169 + $0x12d] sm:$0xff]
      %v2506 = vld [vmem:[%s169 + $0x13d] sm:$0xff]
      %v2507 = vld [vmem:[%s169 + $0x145] sm:$0xff]
      %v2508 = vld [vmem:[%s169 + $0x155] sm:$0xff]
      %v2509 = vld [vmem:[%s169 + $0x15d] sm:$0xff]
      %v2510 = vld [vmem:[%s169 + $0x16d] sm:$0xff]
      %v2511 = vld [vmem:[%s169 + $0x175] sm:$0xff]
      %v2512 = vld [vmem:[#allocation2] sm:$0xff]
      %v2513 = vld [vmem:[#allocation2 + $0x8] sm:$0xff]
      %v2514 = vld [vmem:[#allocation2 + $0x10] sm:$0xff]
      %v2515 = vld [vmem:[#allocation2 + $0x18] sm:$0xff]
      %v2516 = vld [vmem:[#allocation2 + $0x20] sm:$0xff]
      %v2517 = vld [vmem:[#allocation2 + $0x28] sm:$0xff]
      %v2518 = vld [vmem:[#allocation2 + $0x30] sm:$0xff]
      %v2519 = vld [vmem:[#allocation2 + $0x38] sm:$0xff]
      %v2520 = vld [vmem:[#allocation2 + $0x40] sm:$0xff]
      %v2521 = vld [vmem:[#allocation2 + $0x48] sm:$0xff]
      %v2522 = vld [vmem:[#allocation2 + $0x50] sm:$0xff]
      %v2523 = vld [vmem:[#allocation2 + $0x58] sm:$0xff]
      %v2524 = vld [vmem:[#allocation2 + $0x60] sm:$0xff]
      %v2525 = vld [vmem:[#allocation2 + $0x68] sm:$0xff]
      %v2526 = vld [vmem:[#allocation2 + $0x70] sm:$0xff]
      %v2527 = vld [vmem:[#allocation2 + $0x78] sm:$0xff]
      %v2528 = vld [vmem:[#allocation2 + $0x80] sm:$0xff]
      %v2529 = vld [vmem:[#allocation2 + $0x88] sm:$0xff]
      %v2530 = vld [vmem:[#allocation2 + $0x90] sm:$0xff]
      %v2531 = vld [vmem:[#allocation2 + $0x98] sm:$0xff]
      %v2532 = vld [vmem:[#allocation2 + $0xa0] sm:$0xff]
      %v2533 = vld [vmem:[#allocation2 + $0xa8] sm:$0xff]
      %v2534 = vld [vmem:[#allocation2 + $0xb0] sm:$0xff]
      %v2535 = vld [vmem:[#allocation2 + $0xb8] sm:$0xff]
      %v2536 = vld [vmem:[#allocation2 + $0xc0] sm:$0xff]
      %v2537 = vld [vmem:[#allocation2 + $0xc8] sm:$0xff]
      %v2538 = vld [vmem:[#allocation2 + $0xd0] sm:$0xff]
      %v2539 = vld [vmem:[#allocation2 + $0xd8] sm:$0xff]
      %v2540 = vld [vmem:[#allocation2 + $0xe0] sm:$0xff]
      %v2541 = vld [vmem:[#allocation2 + $0xe8] sm:$0xff]
      %v2542 = vld [vmem:[#allocation2 + $0xf0] sm:$0xff]
      %v2543 = vld [vmem:[#allocation2 + $0xf8] sm:$0xff]
      %s2544 = scalar_lea.vmem %s1, 20
      %v2545 = vld [vmem:[%s2544] sm:$0xf]
      %v2547 = vsel %vm274, %v2480, 0
      %v2550 = vsel %vm274, %v2481, 0
      %v2553 = vsel %vm274, %v2482, 0
      %v2556 = vsel %vm274, %v2483, 0
      %v2559 = vsel %vm274, %v2484, 0
      %v2562 = vsel %vm274, %v2485, 0
      %v2565 = vsel %vm274, %v2486, 0
      %v2568 = vsel %vm274, %v2487, 0
      %v2571 = vsel %vm274, %v2488, 0
      %v2574 = vsel %vm274, %v2489, 0
      %v2577 = vsel %vm274, %v2490, 0
      %v2580 = vsel %vm274, %v2491, 0
      %v2583 = vsel %vm274, %v2492, 0
      %v2586 = vsel %vm274, %v2493, 0
      %v2589 = vsel %vm274, %v2494, 0
      %v2592 = vsel %vm274, %v2495, 0
      %v2595 = vsel %vm274, %v2496, 0
      %v2598 = vsel %vm274, %v2497, 0
      %v2601 = vsel %vm274, %v2498, 0
      %v2604 = vsel %vm274, %v2499, 0
      %v2607 = vsel %vm274, %v2500, 0
      %v2610 = vsel %vm274, %v2501, 0
      %v2613 = vsel %vm274, %v2502, 0
      %v2616 = vsel %vm274, %v2503, 0
      %v2619 = vsel %vm274, %v2504, 0
      %v2622 = vsel %vm274, %v2505, 0
      %v2625 = vsel %vm274, %v2506, 0
      %v2628 = vsel %vm274, %v2507, 0
      %v2631 = vsel %vm274, %v2508, 0
      %v2634 = vsel %vm274, %v2509, 0
      %v2637 = vsel %vm274, %v2510, 0
      %v2640 = vsel %vm274, %v2511, 0
      %v2643 = vsel %vm371, %v2545, 0
      %2645 = vmatprep.subr.mxu0 0.0
      %2646 = vmatpush1.msra.mxu0 0.0
      %2647 = vmatprep.subr.mxu0 0.0
      %2648 = vmatpush1.msra.mxu0 0.0
      %2649 = vmatprep.subr.mxu0 0.0
      %2650 = vmatpush1.msra.mxu0 0.0
      %2651 = vmatprep.subr.mxu0 0.0
      %2652 = vmatpush1.msra.mxu0 0.0
      %2653 = vmatprep.subr.mxu0 0.0
      %2654 = vmatpush1.msra.mxu0 0.0
      %2655 = vmatprep.subr.mxu0 0.0
      %2656 = vmatpush1.msra.mxu0 0.0
      %2657 = vmatprep.subr.mxu0 0.0
      %2658 = vmatpush1.msra.mxu0 0.0
      %2659 = vmatprep.subr.mxu0 0.0
      %2660 = vmatpush1.msra.mxu0 0.0
      %2661 = vmatprep.subr.mxu0 0.0
      %2662 = vmatpush1.msra.mxu0 0.0
      %2663 = vmatprep.subr.mxu0 0.0
      %2664 = vmatpush1.msra.mxu0 0.0
      %2665 = vmatprep.subr.mxu0 0.0
      %2666 = vmatpush1.msra.mxu0 0.0
      %2667 = vmatprep.subr.mxu0 0.0
      %2668 = vmatpush1.msra.mxu0 0.0
      %2669 = vmatprep.subr.mxu0 0.0
      %2670 = vmatpush1.msra.mxu0 0.0
      %2671 = vmatprep.subr.mxu0 0.0
      %2672 = vmatpush1.msra.mxu0 0.0
      %2673 = vmatprep.subr.mxu0 0.0
      %2674 = vmatpush1.msra.mxu0 0.0
      %2675 = vmatprep.subr.mxu0 0.0
      %2676 = vmatpush1.msra.mxu0 %v2643
      %2677 = vmatprep.subr.mxu0 0.0
      %2678 = vmatpush2.msra.mxu0 0.0
      %2679 = vmatprep.subr.mxu0 0.0
      %2680 = vmatpush2.msra.mxu0 0.0
      %2681 = vmatprep.subr.mxu0 0.0
      %2682 = vmatpush2.msra.mxu0 0.0
      %2683 = vmatprep.subr.mxu0 0.0
      %2684 = vmatpush2.msra.mxu0 0.0
      %2685 = vmatprep.subr.mxu0 0.0
      %2686 = vmatpush2.msra.mxu0 0.0
      %2687 = vmatprep.subr.mxu0 0.0
      %2688 = vmatpush2.msra.mxu0 0.0
      %2689 = vmatprep.subr.mxu0 0.0
      %2690 = vmatpush2.msra.mxu0 0.0
      %2691 = vmatprep.subr.mxu0 0.0
      %2692 = vmatpush2.msra.mxu0 0.0
      %2693 = vmatprep.subr.mxu0 0.0
      %2694 = vmatpush2.msra.mxu0 0.0
      %2695 = vmatprep.subr.mxu0 0.0
      %2696 = vmatpush2.msra.mxu0 0.0
      %2697 = vmatprep.subr.mxu0 0.0
      %2698 = vmatpush2.msra.mxu0 0.0
      %2699 = vmatprep.subr.mxu0 0.0
      %2700 = vmatpush2.msra.mxu0 0.0
      %2701 = vmatprep.subr.mxu0 0.0
      %2702 = vmatpush2.msra.mxu0 0.0
      %2703 = vmatprep.subr.mxu0 0.0
      %2704 = vmatpush2.msra.mxu0 0.0
      %2705 = vmatprep.subr.mxu0 0.0
      %2706 = vmatpush2.msra.mxu0 0.0
      %2707 = vmatprep.subr.mxu0 0.0
      %2708 = vmatpush2.msra.mxu0 0.0
      %2709 = vmatprep.mubr.f32.mxu0 0.0
      %2710 = vmatmul.mubr.f32.gmra.mxu0 %v2547
      %v2711 = vpop.f32.mrf.mxu0
      %v2712 = vadd.f32 0.0, %v2711
      %v2713 = vpop.f32.mrf.mxu0
      %2714 = vmatprep.mubr.f32.mxu0 0.0
      %2715 = vmatmul.mubr.f32.gmra.mxu0 %v2550
      %v2716 = vpop.f32.mrf.mxu0
      %v2717 = vadd.f32 0.0, %v2716
      %v2718 = vpop.f32.mrf.mxu0
      %2719 = vmatprep.mubr.f32.mxu0 0.0
      %2720 = vmatmul.mubr.f32.gmra.mxu0 %v2553
      %v2721 = vpop.f32.mrf.mxu0
      %v2722 = vadd.f32 0.0, %v2721
      %v2723 = vpop.f32.mrf.mxu0
      %2724 = vmatprep.mubr.f32.mxu0 0.0
      %2725 = vmatmul.mubr.f32.gmra.mxu0 %v2556
      %v2726 = vpop.f32.mrf.mxu0
      %v2727 = vadd.f32 0.0, %v2726
      %v2728 = vpop.f32.mrf.mxu0
      %2729 = vmatprep.mubr.f32.mxu0 0.0
      %2730 = vmatmul.mubr.f32.gmra.mxu0 %v2559
      %v2731 = vpop.f32.mrf.mxu0
      %v2732 = vadd.f32 0.0, %v2731
      %v2733 = vpop.f32.mrf.mxu0
      %2734 = vmatprep.mubr.f32.mxu0 0.0
      %2735 = vmatmul.mubr.f32.gmra.mxu0 %v2562
      %v2736 = vpop.f32.mrf.mxu0
      %v2737 = vadd.f32 0.0, %v2736
      %v2738 = vpop.f32.mrf.mxu0
      %2739 = vmatprep.mubr.f32.mxu0 0.0
      %2740 = vmatmul.mubr.f32.gmra.mxu0 %v2565
      %v2741 = vpop.f32.mrf.mxu0
      %v2742 = vadd.f32 0.0, %v2741
      %v2743 = vpop.f32.mrf.mxu0
      %2744 = vmatprep.mubr.f32.mxu0 0.0
      %2745 = vmatmul.mubr.f32.gmra.mxu0 %v2568
      %v2746 = vpop.f32.mrf.mxu0
      %v2747 = vadd.f32 0.0, %v2746
      %v2748 = vpop.f32.mrf.mxu0
      %2749 = vmatprep.mubr.f32.mxu0 0.0
      %2750 = vmatmul.mubr.f32.gmra.mxu0 %v2571
      %v2751 = vpop.f32.mrf.mxu0
      %v2752 = vadd.f32 0.0, %v2751
      %v2753 = vpop.f32.mrf.mxu0
      %2754 = vmatprep.mubr.f32.mxu0 0.0
      %2755 = vmatmul.mubr.f32.gmra.mxu0 %v2574
      %v2756 = vpop.f32.mrf.mxu0
      %v2757 = vadd.f32 0.0, %v2756
      %v2758 = vpop.f32.mrf.mxu0
      %2759 = vmatprep.mubr.f32.mxu0 0.0
      %2760 = vmatmul.mubr.f32.gmra.mxu0 %v2577
      %v2761 = vpop.f32.mrf.mxu0
      %v2762 = vadd.f32 0.0, %v2761
      %v2763 = vpop.f32.mrf.mxu0
      %2764 = vmatprep.mubr.f32.mxu0 0.0
      %2765 = vmatmul.mubr.f32.gmra.mxu0 %v2580
      %v2766 = vpop.f32.mrf.mxu0
      %v2767 = vadd.f32 0.0, %v2766
      %v2768 = vpop.f32.mrf.mxu0
      %2769 = vmatprep.mubr.f32.mxu0 0.0
      %2770 = vmatmul.mubr.f32.gmra.mxu0 %v2583
      %v2771 = vpop.f32.mrf.mxu0
      %v2772 = vadd.f32 0.0, %v2771
      %v2773 = vpop.f32.mrf.mxu0
      %2774 = vmatprep.mubr.f32.mxu0 0.0
      %2775 = vmatmul.mubr.f32.gmra.mxu0 %v2586
      %v2776 = vpop.f32.mrf.mxu0
      %v2777 = vadd.f32 0.0, %v2776
      %v2778 = vpop.f32.mrf.mxu0
      %2779 = vmatprep.mubr.f32.mxu0 0.0
      %2780 = vmatmul.mubr.f32.gmra.mxu0 %v2589
      %v2781 = vpop.f32.mrf.mxu0
      %v2782 = vadd.f32 0.0, %v2781
      %v2783 = vpop.f32.mrf.mxu0
      %2784 = vmatprep.mubr.f32.mxu0 0.0
      %2785 = vmatmul.mubr.f32.gmra.mxu0 %v2592
      %v2786 = vpop.f32.mrf.mxu0
      %v2787 = vadd.f32 0.0, %v2786
      %v2788 = vpop.f32.mrf.mxu0
      %2789 = vmatprep.mubr.f32.mxu0 0.0
      %2790 = vmatmul.mubr.f32.gmra.mxu0 %v2595
      %v2791 = vpop.f32.mrf.mxu0
      %v2792 = vadd.f32 0.0, %v2791
      %v2793 = vpop.f32.mrf.mxu0
      %2794 = vmatprep.mubr.f32.mxu0 0.0
      %2795 = vmatmul.mubr.f32.gmra.mxu0 %v2598
      %v2796 = vpop.f32.mrf.mxu0
      %v2797 = vadd.f32 0.0, %v2796
      %v2798 = vpop.f32.mrf.mxu0
      %2799 = vmatprep.mubr.f32.mxu0 0.0
      %2800 = vmatmul.mubr.f32.gmra.mxu0 %v2601
      %v2801 = vpop.f32.mrf.mxu0
      %v2802 = vadd.f32 0.0, %v2801
      %v2803 = vpop.f32.mrf.mxu0
      %2804 = vmatprep.mubr.f32.mxu0 0.0
      %2805 = vmatmul.mubr.f32.gmra.mxu0 %v2604
      %v2806 = vpop.f32.mrf.mxu0
      %v2807 = vadd.f32 0.0, %v2806
      %v2808 = vpop.f32.mrf.mxu0
      %2809 = vmatprep.mubr.f32.mxu0 0.0
      %2810 = vmatmul.mubr.f32.gmra.mxu0 %v2607
      %v2811 = vpop.f32.mrf.mxu0
      %v2812 = vadd.f32 0.0, %v2811
      %v2813 = vpop.f32.mrf.mxu0
      %2814 = vmatprep.mubr.f32.mxu0 0.0
      %2815 = vmatmul.mubr.f32.gmra.mxu0 %v2610
      %v2816 = vpop.f32.mrf.mxu0
      %v2817 = vadd.f32 0.0, %v2816
      %v2818 = vpop.f32.mrf.mxu0
      %2819 = vmatprep.mubr.f32.mxu0 0.0
      %2820 = vmatmul.mubr.f32.gmra.mxu0 %v2613
      %v2821 = vpop.f32.mrf.mxu0
      %v2822 = vadd.f32 0.0, %v2821
      %v2823 = vpop.f32.mrf.mxu0
      %2824 = vmatprep.mubr.f32.mxu0 0.0
      %2825 = vmatmul.mubr.f32.gmra.mxu0 %v2616
      %v2826 = vpop.f32.mrf.mxu0
      %v2827 = vadd.f32 0.0, %v2826
      %v2828 = vpop.f32.mrf.mxu0
      %2829 = vmatprep.mubr.f32.mxu0 0.0
      %2830 = vmatmul.mubr.f32.gmra.mxu0 %v2619
      %v2831 = vpop.f32.mrf.mxu0
      %v2832 = vadd.f32 0.0, %v2831
      %v2833 = vpop.f32.mrf.mxu0
      %2834 = vmatprep.mubr.f32.mxu0 0.0
      %2835 = vmatmul.mubr.f32.gmra.mxu0 %v2622
      %v2836 = vpop.f32.mrf.mxu0
      %v2837 = vadd.f32 0.0, %v2836
      %v2838 = vpop.f32.mrf.mxu0
      %2839 = vmatprep.mubr.f32.mxu0 0.0
      %2840 = vmatmul.mubr.f32.gmra.mxu0 %v2625
      %v2841 = vpop.f32.mrf.mxu0
      %v2842 = vadd.f32 0.0, %v2841
      %v2843 = vpop.f32.mrf.mxu0
      %2844 = vmatprep.mubr.f32.mxu0 0.0
      %2845 = vmatmul.mubr.f32.gmra.mxu0 %v2628
      %v2846 = vpop.f32.mrf.mxu0
      %v2847 = vadd.f32 0.0, %v2846
      %v2848 = vpop.f32.mrf.mxu0
      %2849 = vmatprep.mubr.f32.mxu0 0.0
      %2850 = vmatmul.mubr.f32.gmra.mxu0 %v2631
      %v2851 = vpop.f32.mrf.mxu0
      %v2852 = vadd.f32 0.0, %v2851
      %v2853 = vpop.f32.mrf.mxu0
      %2854 = vmatprep.mubr.f32.mxu0 0.0
      %2855 = vmatmul.mubr.f32.gmra.mxu0 %v2634
      %v2856 = vpop.f32.mrf.mxu0
      %v2857 = vadd.f32 0.0, %v2856
      %v2858 = vpop.f32.mrf.mxu0
      %2859 = vmatprep.mubr.f32.mxu0 0.0
      %2860 = vmatmul.mubr.f32.gmra.mxu0 %v2637
      %v2861 = vpop.f32.mrf.mxu0
      %v2862 = vadd.f32 0.0, %v2861
      %v2863 = vpop.f32.mrf.mxu0
      %2864 = vmatprep.mubr.f32.mxu0 0.0
      %2865 = vmatmul.mubr.f32.gmra.mxu0 %v2640
      %v2866 = vpop.f32.mrf.mxu0
      %v2867 = vadd.f32 0.0, %v2866
      %v2868 = vpop.f32.mrf.mxu0
      %2869 = vdwg.mxu0
      %v2870 = vadd.f32 %v2512, %v2712
      %v2871 = vadd.f32 %v2513, %v2717
      %v2872 = vadd.f32 %v2514, %v2722
      %v2873 = vadd.f32 %v2515, %v2727
      %v2874 = vadd.f32 %v2516, %v2732
      %v2875 = vadd.f32 %v2517, %v2737
      %v2876 = vadd.f32 %v2518, %v2742
      %v2877 = vadd.f32 %v2519, %v2747
      %v2878 = vadd.f32 %v2520, %v2752
      %v2879 = vadd.f32 %v2521, %v2757
      %v2880 = vadd.f32 %v2522, %v2762
      %v2881 = vadd.f32 %v2523, %v2767
      %v2882 = vadd.f32 %v2524, %v2772
      %v2883 = vadd.f32 %v2525, %v2777
      %v2884 = vadd.f32 %v2526, %v2782
      %v2885 = vadd.f32 %v2527, %v2787
      %v2886 = vadd.f32 %v2528, %v2792
      %v2887 = vadd.f32 %v2529, %v2797
      %v2888 = vadd.f32 %v2530, %v2802
      %v2889 = vadd.f32 %v2531, %v2807
      %v2890 = vadd.f32 %v2532, %v2812
      %v2891 = vadd.f32 %v2533, %v2817
      %v2892 = vadd.f32 %v2534, %v2822
      %v2893 = vadd.f32 %v2535, %v2827
      %v2894 = vadd.f32 %v2536, %v2832
      %v2895 = vadd.f32 %v2537, %v2837
      %v2896 = vadd.f32 %v2538, %v2842
      %v2897 = vadd.f32 %v2539, %v2847
      %v2898 = vadd.f32 %v2540, %v2852
      %v2899 = vadd.f32 %v2541, %v2857
      %v2900 = vadd.f32 %v2542, %v2862
      %v2901 = vadd.f32 %v2543, %v2867
      %2902 = vst [vmem:[#allocation2] sm:$0xff] %v2870
      %2903 = vst [vmem:[#allocation2 + $0x8] sm:$0xff] %v2871
      %2904 = vst [vmem:[#allocation2 + $0x10] sm:$0xff] %v2872
      %2905 = vst [vmem:[#allocation2 + $0x18] sm:$0xff] %v2873
      %2906 = vst [vmem:[#allocation2 + $0x20] sm:$0xff] %v2874
      %2907 = vst [vmem:[#allocation2 + $0x28] sm:$0xff] %v2875
      %2908 = vst [vmem:[#allocation2 + $0x30] sm:$0xff] %v2876
      %2909 = vst [vmem:[#allocation2 + $0x38] sm:$0xff] %v2877
      %2910 = vst [vmem:[#allocation2 + $0x40] sm:$0xff] %v2878
      %2911 = vst [vmem:[#allocation2 + $0x48] sm:$0xff] %v2879
      %2912 = vst [vmem:[#allocation2 + $0x50] sm:$0xff] %v2880
      %2913 = vst [vmem:[#allocation2 + $0x58] sm:$0xff] %v2881
      %2914 = vst [vmem:[#allocation2 + $0x60] sm:$0xff] %v2882
      %2915 = vst [vmem:[#allocation2 + $0x68] sm:$0xff] %v2883
      %2916 = vst [vmem:[#allocation2 + $0x70] sm:$0xff] %v2884
      %2917 = vst [vmem:[#allocation2 + $0x78] sm:$0xff] %v2885
      %2918 = vst [vmem:[#allocation2 + $0x80] sm:$0xff] %v2886
      %2919 = vst [vmem:[#allocation2 + $0x88] sm:$0xff] %v2887
      %2920 = vst [vmem:[#allocation2 + $0x90] sm:$0xff] %v2888
      %2921 = vst [vmem:[#allocation2 + $0x98] sm:$0xff] %v2889
      %2922 = vst [vmem:[#allocation2 + $0xa0] sm:$0xff] %v2890
      %2923 = vst [vmem:[#allocation2 + $0xa8] sm:$0xff] %v2891
      %2924 = vst [vmem:[#allocation2 + $0xb0] sm:$0xff] %v2892
      %2925 = vst [vmem:[#allocation2 + $0xb8] sm:$0xff] %v2893
      %2926 = vst [vmem:[#allocation2 + $0xc0] sm:$0xff] %v2894
      %2927 = vst [vmem:[#allocation2 + $0xc8] sm:$0xff] %v2895
      %2928 = vst [vmem:[#allocation2 + $0xd0] sm:$0xff] %v2896
      %2929 = vst [vmem:[#allocation2 + $0xd8] sm:$0xff] %v2897
      %2930 = vst [vmem:[#allocation2 + $0xe0] sm:$0xff] %v2898
      %2931 = vst [vmem:[#allocation2 + $0xe8] sm:$0xff] %v2899
      %2932 = vst [vmem:[#allocation2 + $0xf0] sm:$0xff] %v2900
      %2933 = vst [vmem:[#allocation2 + $0xf8] sm:$0xff] %v2901
      %v2934 = vld [vmem:[%s169 + $0x6] sm:$0xff]
      %v2935 = vld [vmem:[%s169 + $0xe] sm:$0xff]
      %v2936 = vld [vmem:[%s169 + $0x1e] sm:$0xff]
      %v2937 = vld [vmem:[%s169 + $0x26] sm:$0xff]
      %v2938 = vld [vmem:[%s169 + $0x36] sm:$0xff]
      %v2939 = vld [vmem:[%s169 + $0x3e] sm:$0xff]
      %v2940 = vld [vmem:[%s169 + $0x4e] sm:$0xff]
      %v2941 = vld [vmem:[%s169 + $0x56] sm:$0xff]
      %v2942 = vld [vmem:[%s169 + $0x66] sm:$0xff]
      %v2943 = vld [vmem:[%s169 + $0x6e] sm:$0xff]
      %v2944 = vld [vmem:[%s169 + $0x7e] sm:$0xff]
      %v2945 = vld [vmem:[%s169 + $0x86] sm:$0xff]
      %v2946 = vld [vmem:[%s169 + $0x96] sm:$0xff]
      %v2947 = vld [vmem:[%s169 + $0x9e] sm:$0xff]
      %v2948 = vld [vmem:[%s169 + $0xae] sm:$0xff]
      %v2949 = vld [vmem:[%s169 + $0xb6] sm:$0xff]
      %v2950 = vld [vmem:[%s169 + $0xc6] sm:$0xff]
      %v2951 = vld [vmem:[%s169 + $0xce] sm:$0xff]
      %v2952 = vld [vmem:[%s169 + $0xde] sm:$0xff]
      %v2953 = vld [vmem:[%s169 + $0xe6] sm:$0xff]
      %v2954 = vld [vmem:[%s169 + $0xf6] sm:$0xff]
      %v2955 = vld [vmem:[%s169 + $0xfe] sm:$0xff]
      %v2956 = vld [vmem:[%s169 + $0x10e] sm:$0xff]
      %v2957 = vld [vmem:[%s169 + $0x116] sm:$0xff]
      %v2958 = vld [vmem:[%s169 + $0x126] sm:$0xff]
      %v2959 = vld [vmem:[%s169 + $0x12e] sm:$0xff]
      %v2960 = vld [vmem:[%s169 + $0x13e] sm:$0xff]
      %v2961 = vld [vmem:[%s169 + $0x146] sm:$0xff]
      %v2962 = vld [vmem:[%s169 + $0x156] sm:$0xff]
      %v2963 = vld [vmem:[%s169 + $0x15e] sm:$0xff]
      %v2964 = vld [vmem:[%s169 + $0x16e] sm:$0xff]
      %v2965 = vld [vmem:[%s169 + $0x176] sm:$0xff]
      %v2966 = vld [vmem:[#allocation2] sm:$0xff]
      %v2967 = vld [vmem:[#allocation2 + $0x8] sm:$0xff]
      %v2968 = vld [vmem:[#allocation2 + $0x10] sm:$0xff]
      %v2969 = vld [vmem:[#allocation2 + $0x18] sm:$0xff]
      %v2970 = vld [vmem:[#allocation2 + $0x20] sm:$0xff]
      %v2971 = vld [vmem:[#allocation2 + $0x28] sm:$0xff]
      %v2972 = vld [vmem:[#allocation2 + $0x30] sm:$0xff]
      %v2973 = vld [vmem:[#allocation2 + $0x38] sm:$0xff]
      %v2974 = vld [vmem:[#allocation2 + $0x40] sm:$0xff]
      %v2975 = vld [vmem:[#allocation2 + $0x48] sm:$0xff]
      %v2976 = vld [vmem:[#allocation2 + $0x50] sm:$0xff]
      %v2977 = vld [vmem:[#allocation2 + $0x58] sm:$0xff]
      %v2978 = vld [vmem:[#allocation2 + $0x60] sm:$0xff]
      %v2979 = vld [vmem:[#allocation2 + $0x68] sm:$0xff]
      %v2980 = vld [vmem:[#allocation2 + $0x70] sm:$0xff]
      %v2981 = vld [vmem:[#allocation2 + $0x78] sm:$0xff]
      %v2982 = vld [vmem:[#allocation2 + $0x80] sm:$0xff]
      %v2983 = vld [vmem:[#allocation2 + $0x88] sm:$0xff]
      %v2984 = vld [vmem:[#allocation2 + $0x90] sm:$0xff]
      %v2985 = vld [vmem:[#allocation2 + $0x98] sm:$0xff]
      %v2986 = vld [vmem:[#allocation2 + $0xa0] sm:$0xff]
      %v2987 = vld [vmem:[#allocation2 + $0xa8] sm:$0xff]
      %v2988 = vld [vmem:[#allocation2 + $0xb0] sm:$0xff]
      %v2989 = vld [vmem:[#allocation2 + $0xb8] sm:$0xff]
      %v2990 = vld [vmem:[#allocation2 + $0xc0] sm:$0xff]
      %v2991 = vld [vmem:[#allocation2 + $0xc8] sm:$0xff]
      %v2992 = vld [vmem:[#allocation2 + $0xd0] sm:$0xff]
      %v2993 = vld [vmem:[#allocation2 + $0xd8] sm:$0xff]
      %v2994 = vld [vmem:[#allocation2 + $0xe0] sm:$0xff]
      %v2995 = vld [vmem:[#allocation2 + $0xe8] sm:$0xff]
      %v2996 = vld [vmem:[#allocation2 + $0xf0] sm:$0xff]
      %v2997 = vld [vmem:[#allocation2 + $0xf8] sm:$0xff]
      %s2998 = scalar_lea.vmem %s1, 24
      %v2999 = vld [vmem:[%s2998] sm:$0xf]
      %v3001 = vsel %vm274, %v2934, 0
      %v3004 = vsel %vm274, %v2935, 0
      %v3007 = vsel %vm274, %v2936, 0
      %v3010 = vsel %vm274, %v2937, 0
      %v3013 = vsel %vm274, %v2938, 0
      %v3016 = vsel %vm274, %v2939, 0
      %v3019 = vsel %vm274, %v2940, 0
      %v3022 = vsel %vm274, %v2941, 0
      %v3025 = vsel %vm274, %v2942, 0
      %v3028 = vsel %vm274, %v2943, 0
      %v3031 = vsel %vm274, %v2944, 0
      %v3034 = vsel %vm274, %v2945, 0
      %v3037 = vsel %vm274, %v2946, 0
      %v3040 = vsel %vm274, %v2947, 0
      %v3043 = vsel %vm274, %v2948, 0
      %v3046 = vsel %vm274, %v2949, 0
      %v3049 = vsel %vm274, %v2950, 0
      %v3052 = vsel %vm274, %v2951, 0
      %v3055 = vsel %vm274, %v2952, 0
      %v3058 = vsel %vm274, %v2953, 0
      %v3061 = vsel %vm274, %v2954, 0
      %v3064 = vsel %vm274, %v2955, 0
      %v3067 = vsel %vm274, %v2956, 0
      %v3070 = vsel %vm274, %v2957, 0
      %v3073 = vsel %vm274, %v2958, 0
      %v3076 = vsel %vm274, %v2959, 0
      %v3079 = vsel %vm274, %v2960, 0
      %v3082 = vsel %vm274, %v2961, 0
      %v3085 = vsel %vm274, %v2962, 0
      %v3088 = vsel %vm274, %v2963, 0
      %v3091 = vsel %vm274, %v2964, 0
      %v3094 = vsel %vm274, %v2965, 0
      %v3097 = vsel %vm371, %v2999, 0
      %3099 = vmatprep.subr.mxu0 0.0
      %3100 = vmatpush1.msra.mxu0 0.0
      %3101 = vmatprep.subr.mxu0 0.0
      %3102 = vmatpush1.msra.mxu0 0.0
      %3103 = vmatprep.subr.mxu0 0.0
      %3104 = vmatpush1.msra.mxu0 0.0
      %3105 = vmatprep.subr.mxu0 0.0
      %3106 = vmatpush1.msra.mxu0 0.0
      %3107 = vmatprep.subr.mxu0 0.0
      %3108 = vmatpush1.msra.mxu0 0.0
      %3109 = vmatprep.subr.mxu0 0.0
      %3110 = vmatpush1.msra.mxu0 0.0
      %3111 = vmatprep.subr.mxu0 0.0
      %3112 = vmatpush1.msra.mxu0 0.0
      %3113 = vmatprep.subr.mxu0 0.0
      %3114 = vmatpush1.msra.mxu0 0.0
      %3115 = vmatprep.subr.mxu0 0.0
      %3116 = vmatpush1.msra.mxu0 0.0
      %3117 = vmatprep.subr.mxu0 0.0
      %3118 = vmatpush1.msra.mxu0 0.0
      %3119 = vmatprep.subr.mxu0 0.0
      %3120 = vmatpush1.msra.mxu0 0.0
      %3121 = vmatprep.subr.mxu0 0.0
      %3122 = vmatpush1.msra.mxu0 0.0
      %3123 = vmatprep.subr.mxu0 0.0
      %3124 = vmatpush1.msra.mxu0 0.0
      %3125 = vmatprep.subr.mxu0 0.0
      %3126 = vmatpush1.msra.mxu0 0.0
      %3127 = vmatprep.subr.mxu0 0.0
      %3128 = vmatpush1.msra.mxu0 0.0
      %3129 = vmatprep.subr.mxu0 0.0
      %3130 = vmatpush1.msra.mxu0 %v3097
      %3131 = vmatprep.subr.mxu0 0.0
      %3132 = vmatpush2.msra.mxu0 0.0
      %3133 = vmatprep.subr.mxu0 0.0
      %3134 = vmatpush2.msra.mxu0 0.0
      %3135 = vmatprep.subr.mxu0 0.0
      %3136 = vmatpush2.msra.mxu0 0.0
      %3137 = vmatprep.subr.mxu0 0.0
      %3138 = vmatpush2.msra.mxu0 0.0
      %3139 = vmatprep.subr.mxu0 0.0
      %3140 = vmatpush2.msra.mxu0 0.0
      %3141 = vmatprep.subr.mxu0 0.0
      %3142 = vmatpush2.msra.mxu0 0.0
      %3143 = vmatprep.subr.mxu0 0.0
      %3144 = vmatpush2.msra.mxu0 0.0
      %3145 = vmatprep.subr.mxu0 0.0
      %3146 = vmatpush2.msra.mxu0 0.0
      %3147 = vmatprep.subr.mxu0 0.0
      %3148 = vmatpush2.msra.mxu0 0.0
      %3149 = vmatprep.subr.mxu0 0.0
      %3150 = vmatpush2.msra.mxu0 0.0
      %3151 = vmatprep.subr.mxu0 0.0
      %3152 = vmatpush2.msra.mxu0 0.0
      %3153 = vmatprep.subr.mxu0 0.0
      %3154 = vmatpush2.msra.mxu0 0.0
      %3155 = vmatprep.subr.mxu0 0.0
      %3156 = vmatpush2.msra.mxu0 0.0
      %3157 = vmatprep.subr.mxu0 0.0
      %3158 = vmatpush2.msra.mxu0 0.0
      %3159 = vmatprep.subr.mxu0 0.0
      %3160 = vmatpush2.msra.mxu0 0.0
      %3161 = vmatprep.subr.mxu0 0.0
      %3162 = vmatpush2.msra.mxu0 0.0
      %3163 = vmatprep.mubr.f32.mxu0 0.0
      %3164 = vmatmul.mubr.f32.gmra.mxu0 %v3001
      %v3165 = vpop.f32.mrf.mxu0
      %v3166 = vadd.f32 0.0, %v3165
      %v3167 = vpop.f32.mrf.mxu0
      %3168 = vmatprep.mubr.f32.mxu0 0.0
      %3169 = vmatmul.mubr.f32.gmra.mxu0 %v3004
      %v3170 = vpop.f32.mrf.mxu0
      %v3171 = vadd.f32 0.0, %v3170
      %v3172 = vpop.f32.mrf.mxu0
      %3173 = vmatprep.mubr.f32.mxu0 0.0
      %3174 = vmatmul.mubr.f32.gmra.mxu0 %v3007
      %v3175 = vpop.f32.mrf.mxu0
      %v3176 = vadd.f32 0.0, %v3175
      %v3177 = vpop.f32.mrf.mxu0
      %3178 = vmatprep.mubr.f32.mxu0 0.0
      %3179 = vmatmul.mubr.f32.gmra.mxu0 %v3010
      %v3180 = vpop.f32.mrf.mxu0
      %v3181 = vadd.f32 0.0, %v3180
      %v3182 = vpop.f32.mrf.mxu0
      %3183 = vmatprep.mubr.f32.mxu0 0.0
      %3184 = vmatmul.mubr.f32.gmra.mxu0 %v3013
      %v3185 = vpop.f32.mrf.mxu0
      %v3186 = vadd.f32 0.0, %v3185
      %v3187 = vpop.f32.mrf.mxu0
      %3188 = vmatprep.mubr.f32.mxu0 0.0
      %3189 = vmatmul.mubr.f32.gmra.mxu0 %v3016
      %v3190 = vpop.f32.mrf.mxu0
      %v3191 = vadd.f32 0.0, %v3190
      %v3192 = vpop.f32.mrf.mxu0
      %3193 = vmatprep.mubr.f32.mxu0 0.0
      %3194 = vmatmul.mubr.f32.gmra.mxu0 %v3019
      %v3195 = vpop.f32.mrf.mxu0
      %v3196 = vadd.f32 0.0, %v3195
      %v3197 = vpop.f32.mrf.mxu0
      %3198 = vmatprep.mubr.f32.mxu0 0.0
      %3199 = vmatmul.mubr.f32.gmra.mxu0 %v3022
      %v3200 = vpop.f32.mrf.mxu0
      %v3201 = vadd.f32 0.0, %v3200
      %v3202 = vpop.f32.mrf.mxu0
      %3203 = vmatprep.mubr.f32.mxu0 0.0
      %3204 = vmatmul.mubr.f32.gmra.mxu0 %v3025
      %v3205 = vpop.f32.mrf.mxu0
      %v3206 = vadd.f32 0.0, %v3205
      %v3207 = vpop.f32.mrf.mxu0
      %3208 = vmatprep.mubr.f32.mxu0 0.0
      %3209 = vmatmul.mubr.f32.gmra.mxu0 %v3028
      %v3210 = vpop.f32.mrf.mxu0
      %v3211 = vadd.f32 0.0, %v3210
      %v3212 = vpop.f32.mrf.mxu0
      %3213 = vmatprep.mubr.f32.mxu0 0.0
      %3214 = vmatmul.mubr.f32.gmra.mxu0 %v3031
      %v3215 = vpop.f32.mrf.mxu0
      %v3216 = vadd.f32 0.0, %v3215
      %v3217 = vpop.f32.mrf.mxu0
      %3218 = vmatprep.mubr.f32.mxu0 0.0
      %3219 = vmatmul.mubr.f32.gmra.mxu0 %v3034
      %v3220 = vpop.f32.mrf.mxu0
      %v3221 = vadd.f32 0.0, %v3220
      %v3222 = vpop.f32.mrf.mxu0
      %3223 = vmatprep.mubr.f32.mxu0 0.0
      %3224 = vmatmul.mubr.f32.gmra.mxu0 %v3037
      %v3225 = vpop.f32.mrf.mxu0
      %v3226 = vadd.f32 0.0, %v3225
      %v3227 = vpop.f32.mrf.mxu0
      %3228 = vmatprep.mubr.f32.mxu0 0.0
      %3229 = vmatmul.mubr.f32.gmra.mxu0 %v3040
      %v3230 = vpop.f32.mrf.mxu0
      %v3231 = vadd.f32 0.0, %v3230
      %v3232 = vpop.f32.mrf.mxu0
      %3233 = vmatprep.mubr.f32.mxu0 0.0
      %3234 = vmatmul.mubr.f32.gmra.mxu0 %v3043
      %v3235 = vpop.f32.mrf.mxu0
      %v3236 = vadd.f32 0.0, %v3235
      %v3237 = vpop.f32.mrf.mxu0
      %3238 = vmatprep.mubr.f32.mxu0 0.0
      %3239 = vmatmul.mubr.f32.gmra.mxu0 %v3046
      %v3240 = vpop.f32.mrf.mxu0
      %v3241 = vadd.f32 0.0, %v3240
      %v3242 = vpop.f32.mrf.mxu0
      %3243 = vmatprep.mubr.f32.mxu0 0.0
      %3244 = vmatmul.mubr.f32.gmra.mxu0 %v3049
      %v3245 = vpop.f32.mrf.mxu0
      %v3246 = vadd.f32 0.0, %v3245
      %v3247 = vpop.f32.mrf.mxu0
      %3248 = vmatprep.mubr.f32.mxu0 0.0
      %3249 = vmatmul.mubr.f32.gmra.mxu0 %v3052
      %v3250 = vpop.f32.mrf.mxu0
      %v3251 = vadd.f32 0.0, %v3250
      %v3252 = vpop.f32.mrf.mxu0
      %3253 = vmatprep.mubr.f32.mxu0 0.0
      %3254 = vmatmul.mubr.f32.gmra.mxu0 %v3055
      %v3255 = vpop.f32.mrf.mxu0
      %v3256 = vadd.f32 0.0, %v3255
      %v3257 = vpop.f32.mrf.mxu0
      %3258 = vmatprep.mubr.f32.mxu0 0.0
      %3259 = vmatmul.mubr.f32.gmra.mxu0 %v3058
      %v3260 = vpop.f32.mrf.mxu0
      %v3261 = vadd.f32 0.0, %v3260
      %v3262 = vpop.f32.mrf.mxu0
      %3263 = vmatprep.mubr.f32.mxu0 0.0
      %3264 = vmatmul.mubr.f32.gmra.mxu0 %v3061
      %v3265 = vpop.f32.mrf.mxu0
      %v3266 = vadd.f32 0.0, %v3265
      %v3267 = vpop.f32.mrf.mxu0
      %3268 = vmatprep.mubr.f32.mxu0 0.0
      %3269 = vmatmul.mubr.f32.gmra.mxu0 %v3064
      %v3270 = vpop.f32.mrf.mxu0
      %v3271 = vadd.f32 0.0, %v3270
      %v3272 = vpop.f32.mrf.mxu0
      %3273 = vmatprep.mubr.f32.mxu0 0.0
      %3274 = vmatmul.mubr.f32.gmra.mxu0 %v3067
      %v3275 = vpop.f32.mrf.mxu0
      %v3276 = vadd.f32 0.0, %v3275
      %v3277 = vpop.f32.mrf.mxu0
      %3278 = vmatprep.mubr.f32.mxu0 0.0
      %3279 = vmatmul.mubr.f32.gmra.mxu0 %v3070
      %v3280 = vpop.f32.mrf.mxu0
      %v3281 = vadd.f32 0.0, %v3280
      %v3282 = vpop.f32.mrf.mxu0
      %3283 = vmatprep.mubr.f32.mxu0 0.0
      %3284 = vmatmul.mubr.f32.gmra.mxu0 %v3073
      %v3285 = vpop.f32.mrf.mxu0
      %v3286 = vadd.f32 0.0, %v3285
      %v3287 = vpop.f32.mrf.mxu0
      %3288 = vmatprep.mubr.f32.mxu0 0.0
      %3289 = vmatmul.mubr.f32.gmra.mxu0 %v3076
      %v3290 = vpop.f32.mrf.mxu0
      %v3291 = vadd.f32 0.0, %v3290
      %v3292 = vpop.f32.mrf.mxu0
      %3293 = vmatprep.mubr.f32.mxu0 0.0
      %3294 = vmatmul.mubr.f32.gmra.mxu0 %v3079
      %v3295 = vpop.f32.mrf.mxu0
      %v3296 = vadd.f32 0.0, %v3295
      %v3297 = vpop.f32.mrf.mxu0
      %3298 = vmatprep.mubr.f32.mxu0 0.0
      %3299 = vmatmul.mubr.f32.gmra.mxu0 %v3082
      %v3300 = vpop.f32.mrf.mxu0
      %v3301 = vadd.f32 0.0, %v3300
      %v3302 = vpop.f32.mrf.mxu0
      %3303 = vmatprep.mubr.f32.mxu0 0.0
      %3304 = vmatmul.mubr.f32.gmra.mxu0 %v3085
      %v3305 = vpop.f32.mrf.mxu0
      %v3306 = vadd.f32 0.0, %v3305
      %v3307 = vpop.f32.mrf.mxu0
      %3308 = vmatprep.mubr.f32.mxu0 0.0
      %3309 = vmatmul.mubr.f32.gmra.mxu0 %v3088
      %v3310 = vpop.f32.mrf.mxu0
      %v3311 = vadd.f32 0.0, %v3310
      %v3312 = vpop.f32.mrf.mxu0
      %3313 = vmatprep.mubr.f32.mxu0 0.0
      %3314 = vmatmul.mubr.f32.gmra.mxu0 %v3091
      %v3315 = vpop.f32.mrf.mxu0
      %v3316 = vadd.f32 0.0, %v3315
      %v3317 = vpop.f32.mrf.mxu0
      %3318 = vmatprep.mubr.f32.mxu0 0.0
      %3319 = vmatmul.mubr.f32.gmra.mxu0 %v3094
      %v3320 = vpop.f32.mrf.mxu0
      %v3321 = vadd.f32 0.0, %v3320
      %v3322 = vpop.f32.mrf.mxu0
      %3323 = vdwg.mxu0
      %v3324 = vadd.f32 %v2966, %v3166
      %v3325 = vadd.f32 %v2967, %v3171
      %v3326 = vadd.f32 %v2968, %v3176
      %v3327 = vadd.f32 %v2969, %v3181
      %v3328 = vadd.f32 %v2970, %v3186
      %v3329 = vadd.f32 %v2971, %v3191
      %v3330 = vadd.f32 %v2972, %v3196
      %v3331 = vadd.f32 %v2973, %v3201
      %v3332 = vadd.f32 %v2974, %v3206
      %v3333 = vadd.f32 %v2975, %v3211
      %v3334 = vadd.f32 %v2976, %v3216
      %v3335 = vadd.f32 %v2977, %v3221
      %v3336 = vadd.f32 %v2978, %v3226
      %v3337 = vadd.f32 %v2979, %v3231
      %v3338 = vadd.f32 %v2980, %v3236
      %v3339 = vadd.f32 %v2981, %v3241
      %v3340 = vadd.f32 %v2982, %v3246
      %v3341 = vadd.f32 %v2983, %v3251
      %v3342 = vadd.f32 %v2984, %v3256
      %v3343 = vadd.f32 %v2985, %v3261
      %v3344 = vadd.f32 %v2986, %v3266
      %v3345 = vadd.f32 %v2987, %v3271
      %v3346 = vadd.f32 %v2988, %v3276
      %v3347 = vadd.f32 %v2989, %v3281
      %v3348 = vadd.f32 %v2990, %v3286
      %v3349 = vadd.f32 %v2991, %v3291
      %v3350 = vadd.f32 %v2992, %v3296
      %v3351 = vadd.f32 %v2993, %v3301
      %v3352 = vadd.f32 %v2994, %v3306
      %v3353 = vadd.f32 %v2995, %v3311
      %v3354 = vadd.f32 %v2996, %v3316
      %v3355 = vadd.f32 %v2997, %v3321
      %3356 = vst [vmem:[#allocation2] sm:$0xff] %v3324
      %3357 = vst [vmem:[#allocation2 + $0x8] sm:$0xff] %v3325
      %3358 = vst [vmem:[#allocation2 + $0x10] sm:$0xff] %v3326
      %3359 = vst [vmem:[#allocation2 + $0x18] sm:$0xff] %v3327
      %3360 = vst [vmem:[#allocation2 + $0x20] sm:$0xff] %v3328
      %3361 = vst [vmem:[#allocation2 + $0x28] sm:$0xff] %v3329
      %3362 = vst [vmem:[#allocation2 + $0x30] sm:$0xff] %v3330
      %3363 = vst [vmem:[#allocation2 + $0x38] sm:$0xff] %v3331
      %3364 = vst [vmem:[#allocation2 + $0x40] sm:$0xff] %v3332
      %3365 = vst [vmem:[#allocation2 + $0x48] sm:$0xff] %v3333
      %3366 = vst [vmem:[#allocation2 + $0x50] sm:$0xff] %v3334
      %3367 = vst [vmem:[#allocation2 + $0x58] sm:$0xff] %v3335
      %3368 = vst [vmem:[#allocation2 + $0x60] sm:$0xff] %v3336
      %3369 = vst [vmem:[#allocation2 + $0x68] sm:$0xff] %v3337
      %3370 = vst [vmem:[#allocation2 + $0x70] sm:$0xff] %v3338
      %3371 = vst [vmem:[#allocation2 + $0x78] sm:$0xff] %v3339
      %3372 = vst [vmem:[#allocation2 + $0x80] sm:$0xff] %v3340
      %3373 = vst [vmem:[#allocation2 + $0x88] sm:$0xff] %v3341
      %3374 = vst [vmem:[#allocation2 + $0x90] sm:$0xff] %v3342
      %3375 = vst [vmem:[#allocation2 + $0x98] sm:$0xff] %v3343
      %3376 = vst [vmem:[#allocation2 + $0xa0] sm:$0xff] %v3344
      %3377 = vst [vmem:[#allocation2 + $0xa8] sm:$0xff] %v3345
      %3378 = vst [vmem:[#allocation2 + $0xb0] sm:$0xff] %v3346
      %3379 = vst [vmem:[#allocation2 + $0xb8] sm:$0xff] %v3347
      %3380 = vst [vmem:[#allocation2 + $0xc0] sm:$0xff] %v3348
      %3381 = vst [vmem:[#allocation2 + $0xc8] sm:$0xff] %v3349
      %3382 = vst [vmem:[#allocation2 + $0xd0] sm:$0xff] %v3350
      %3383 = vst [vmem:[#allocation2 + $0xd8] sm:$0xff] %v3351
      %3384 = vst [vmem:[#allocation2 + $0xe0] sm:$0xff] %v3352
      %3385 = vst [vmem:[#allocation2 + $0xe8] sm:$0xff] %v3353
      %3386 = vst [vmem:[#allocation2 + $0xf0] sm:$0xff] %v3354
      %3387 = vst [vmem:[#allocation2 + $0xf8] sm:$0xff] %v3355
      %v3388 = vld [vmem:[%s169 + $0x7] sm:$0xff]
      %v3389 = vld [vmem:[%s169 + $0xf] sm:$0xff]
      %v3390 = vld [vmem:[%s169 + $0x1f] sm:$0xff]
      %v3391 = vld [vmem:[%s169 + $0x27] sm:$0xff]
      %v3392 = vld [vmem:[%s169 + $0x37] sm:$0xff]
      %v3393 = vld [vmem:[%s169 + $0x3f] sm:$0xff]
      %v3394 = vld [vmem:[%s169 + $0x4f] sm:$0xff]
      %v3395 = vld [vmem:[%s169 + $0x57] sm:$0xff]
      %v3396 = vld [vmem:[%s169 + $0x67] sm:$0xff]
      %v3397 = vld [vmem:[%s169 + $0x6f] sm:$0xff]
      %v3398 = vld [vmem:[%s169 + $0x7f] sm:$0xff]
      %v3399 = vld [vmem:[%s169 + $0x87] sm:$0xff]
      %v3400 = vld [vmem:[%s169 + $0x97] sm:$0xff]
      %v3401 = vld [vmem:[%s169 + $0x9f] sm:$0xff]
      %v3402 = vld [vmem:[%s169 + $0xaf] sm:$0xff]
      %v3403 = vld [vmem:[%s169 + $0xb7] sm:$0xff]
      %v3404 = vld [vmem:[%s169 + $0xc7] sm:$0xff]
      %v3405 = vld [vmem:[%s169 + $0xcf] sm:$0xff]
      %v3406 = vld [vmem:[%s169 + $0xdf] sm:$0xff]
      %v3407 = vld [vmem:[%s169 + $0xe7] sm:$0xff]
      %v3408 = vld [vmem:[%s169 + $0xf7] sm:$0xff]
      %v3409 = vld [vmem:[%s169 + $0xff] sm:$0xff]
      %v3410 = vld [vmem:[%s169 + $0x10f] sm:$0xff]
      %v3411 = vld [vmem:[%s169 + $0x117] sm:$0xff]
      %v3412 = vld [vmem:[%s169 + $0x127] sm:$0xff]
      %v3413 = vld [vmem:[%s169 + $0x12f] sm:$0xff]
      %v3414 = vld [vmem:[%s169 + $0x13f] sm:$0xff]
      %v3415 = vld [vmem:[%s169 + $0x147] sm:$0xff]
      %v3416 = vld [vmem:[%s169 + $0x157] sm:$0xff]
      %v3417 = vld [vmem:[%s169 + $0x15f] sm:$0xff]
      %v3418 = vld [vmem:[%s169 + $0x16f] sm:$0xff]
      %v3419 = vld [vmem:[%s169 + $0x177] sm:$0xff]
      %v3420 = vld [vmem:[#allocation2] sm:$0xff]
      %v3421 = vld [vmem:[#allocation2 + $0x8] sm:$0xff]
      %v3422 = vld [vmem:[#allocation2 + $0x10] sm:$0xff]
      %v3423 = vld [vmem:[#allocation2 + $0x18] sm:$0xff]
      %v3424 = vld [vmem:[#allocation2 + $0x20] sm:$0xff]
      %v3425 = vld [vmem:[#allocation2 + $0x28] sm:$0xff]
      %v3426 = vld [vmem:[#allocation2 + $0x30] sm:$0xff]
      %v3427 = vld [vmem:[#allocation2 + $0x38] sm:$0xff]
      %v3428 = vld [vmem:[#allocation2 + $0x40] sm:$0xff]
      %v3429 = vld [vmem:[#allocation2 + $0x48] sm:$0xff]
      %v3430 = vld [vmem:[#allocation2 + $0x50] sm:$0xff]
      %v3431 = vld [vmem:[#allocation2 + $0x58] sm:$0xff]
      %v3432 = vld [vmem:[#allocation2 + $0x60] sm:$0xff]
      %v3433 = vld [vmem:[#allocation2 + $0x68] sm:$0xff]
      %v3434 = vld [vmem:[#allocation2 + $0x70] sm:$0xff]
      %v3435 = vld [vmem:[#allocation2 + $0x78] sm:$0xff]
      %v3436 = vld [vmem:[#allocation2 + $0x80] sm:$0xff]
      %v3437 = vld [vmem:[#allocation2 + $0x88] sm:$0xff]
      %v3438 = vld [vmem:[#allocation2 + $0x90] sm:$0xff]
      %v3439 = vld [vmem:[#allocation2 + $0x98] sm:$0xff]
      %v3440 = vld [vmem:[#allocation2 + $0xa0] sm:$0xff]
      %v3441 = vld [vmem:[#allocation2 + $0xa8] sm:$0xff]
      %v3442 = vld [vmem:[#allocation2 + $0xb0] sm:$0xff]
      %v3443 = vld [vmem:[#allocation2 + $0xb8] sm:$0xff]
      %v3444 = vld [vmem:[#allocation2 + $0xc0] sm:$0xff]
      %v3445 = vld [vmem:[#allocation2 + $0xc8] sm:$0xff]
      %v3446 = vld [vmem:[#allocation2 + $0xd0] sm:$0xff]
      %v3447 = vld [vmem:[#allocation2 + $0xd8] sm:$0xff]
      %v3448 = vld [vmem:[#allocation2 + $0xe0] sm:$0xff]
      %v3449 = vld [vmem:[#allocation2 + $0xe8] sm:$0xff]
      %v3450 = vld [vmem:[#allocation2 + $0xf0] sm:$0xff]
      %v3451 = vld [vmem:[#allocation2 + $0xf8] sm:$0xff]
      %s3452 = scalar_lea.vmem %s1, 28
      %v3453 = vld [vmem:[%s3452] sm:$0xf]
      %v3455 = vsel %vm274, %v3388, 0
      %v3458 = vsel %vm274, %v3389, 0
      %v3461 = vsel %vm274, %v3390, 0
      %v3464 = vsel %vm274, %v3391, 0
      %v3467 = vsel %vm274, %v3392, 0
      %v3470 = vsel %vm274, %v3393, 0
      %v3473 = vsel %vm274, %v3394, 0
      %v3476 = vsel %vm274, %v3395, 0
      %v3479 = vsel %vm274, %v3396, 0
      %v3482 = vsel %vm274, %v3397, 0
      %v3485 = vsel %vm274, %v3398, 0
      %v3488 = vsel %vm274, %v3399, 0
      %v3491 = vsel %vm274, %v3400, 0
      %v3494 = vsel %vm274, %v3401, 0
      %v3497 = vsel %vm274, %v3402, 0
      %v3500 = vsel %vm274, %v3403, 0
      %v3503 = vsel %vm274, %v3404, 0
      %v3506 = vsel %vm274, %v3405, 0
      %v3509 = vsel %vm274, %v3406, 0
      %v3512 = vsel %vm274, %v3407, 0
      %v3515 = vsel %vm274, %v3408, 0
      %v3518 = vsel %vm274, %v3409, 0
      %v3521 = vsel %vm274, %v3410, 0
      %v3524 = vsel %vm274, %v3411, 0
      %v3527 = vsel %vm274, %v3412, 0
      %v3530 = vsel %vm274, %v3413, 0
      %v3533 = vsel %vm274, %v3414, 0
      %v3536 = vsel %vm274, %v3415, 0
      %v3539 = vsel %vm274, %v3416, 0
      %v3542 = vsel %vm274, %v3417, 0
      %v3545 = vsel %vm274, %v3418, 0
      %v3548 = vsel %vm274, %v3419, 0
      %v3551 = vsel %vm371, %v3453, 0
      %3553 = vmatprep.subr.mxu0 0.0
      %3554 = vmatpush1.msra.mxu0 0.0
      %3555 = vmatprep.subr.mxu0 0.0
      %3556 = vmatpush1.msra.mxu0 0.0
      %3557 = vmatprep.subr.mxu0 0.0
      %3558 = vmatpush1.msra.mxu0 0.0
      %3559 = vmatprep.subr.mxu0 0.0
      %3560 = vmatpush1.msra.mxu0 0.0
      %3561 = vmatprep.subr.mxu0 0.0
      %3562 = vmatpush1.msra.mxu0 0.0
      %3563 = vmatprep.subr.mxu0 0.0
      %3564 = vmatpush1.msra.mxu0 0.0
      %3565 = vmatprep.subr.mxu0 0.0
      %3566 = vmatpush1.msra.mxu0 0.0
      %3567 = vmatprep.subr.mxu0 0.0
      %3568 = vmatpush1.msra.mxu0 0.0
      %3569 = vmatprep.subr.mxu0 0.0
      %3570 = vmatpush1.msra.mxu0 0.0
      %3571 = vmatprep.subr.mxu0 0.0
      %3572 = vmatpush1.msra.mxu0 0.0
      %3573 = vmatprep.subr.mxu0 0.0
      %3574 = vmatpush1.msra.mxu0 0.0
      %3575 = vmatprep.subr.mxu0 0.0
      %3576 = vmatpush1.msra.mxu0 0.0
      %3577 = vmatprep.subr.mxu0 0.0
      %3578 = vmatpush1.msra.mxu0 0.0
      %3579 = vmatprep.subr.mxu0 0.0
      %3580 = vmatpush1.msra.mxu0 0.0
      %3581 = vmatprep.subr.mxu0 0.0
      %3582 = vmatpush1.msra.mxu0 0.0
      %3583 = vmatprep.subr.mxu0 0.0
      %3584 = vmatpush1.msra.mxu0 %v3551
      %3585 = vmatprep.subr.mxu0 0.0
      %3586 = vmatpush2.msra.mxu0 0.0
      %3587 = vmatprep.subr.mxu0 0.0
      %3588 = vmatpush2.msra.mxu0 0.0
      %3589 = vmatprep.subr.mxu0 0.0
      %3590 = vmatpush2.msra.mxu0 0.0
      %3591 = vmatprep.subr.mxu0 0.0
      %3592 = vmatpush2.msra.mxu0 0.0
      %3593 = vmatprep.subr.mxu0 0.0
      %3594 = vmatpush2.msra.mxu0 0.0
      %3595 = vmatprep.subr.mxu0 0.0
      %3596 = vmatpush2.msra.mxu0 0.0
      %3597 = vmatprep.subr.mxu0 0.0
      %3598 = vmatpush2.msra.mxu0 0.0
      %3599 = vmatprep.subr.mxu0 0.0
      %3600 = vmatpush2.msra.mxu0 0.0
      %3601 = vmatprep.subr.mxu0 0.0
      %3602 = vmatpush2.msra.mxu0 0.0
      %3603 = vmatprep.subr.mxu0 0.0
      %3604 = vmatpush2.msra.mxu0 0.0
      %3605 = vmatprep.subr.mxu0 0.0
      %3606 = vmatpush2.msra.mxu0 0.0
      %3607 = vmatprep.subr.mxu0 0.0
      %3608 = vmatpush2.msra.mxu0 0.0
      %3609 = vmatprep.subr.mxu0 0.0
      %3610 = vmatpush2.msra.mxu0 0.0
      %3611 = vmatprep.subr.mxu0 0.0
      %3612 = vmatpush2.msra.mxu0 0.0
      %3613 = vmatprep.subr.mxu0 0.0
      %3614 = vmatpush2.msra.mxu0 0.0
      %3615 = vmatprep.subr.mxu0 0.0
      %3616 = vmatpush2.msra.mxu0 0.0
      %3617 = vmatprep.mubr.f32.mxu0 0.0
      %3618 = vmatmul.mubr.f32.gmra.mxu0 %v3455
      %v3619 = vpop.f32.mrf.mxu0
      %v3620 = vadd.f32 0.0, %v3619
      %v3621 = vpop.f32.mrf.mxu0
      %3622 = vmatprep.mubr.f32.mxu0 0.0
      %3623 = vmatmul.mubr.f32.gmra.mxu0 %v3458
      %v3624 = vpop.f32.mrf.mxu0
      %v3625 = vadd.f32 0.0, %v3624
      %v3626 = vpop.f32.mrf.mxu0
      %3627 = vmatprep.mubr.f32.mxu0 0.0
      %3628 = vmatmul.mubr.f32.gmra.mxu0 %v3461
      %v3629 = vpop.f32.mrf.mxu0
      %v3630 = vadd.f32 0.0, %v3629
      %v3631 = vpop.f32.mrf.mxu0
      %3632 = vmatprep.mubr.f32.mxu0 0.0
      %3633 = vmatmul.mubr.f32.gmra.mxu0 %v3464
      %v3634 = vpop.f32.mrf.mxu0
      %v3635 = vadd.f32 0.0, %v3634
      %v3636 = vpop.f32.mrf.mxu0
      %3637 = vmatprep.mubr.f32.mxu0 0.0
      %3638 = vmatmul.mubr.f32.gmra.mxu0 %v3467
      %v3639 = vpop.f32.mrf.mxu0
      %v3640 = vadd.f32 0.0, %v3639
      %v3641 = vpop.f32.mrf.mxu0
      %3642 = vmatprep.mubr.f32.mxu0 0.0
      %3643 = vmatmul.mubr.f32.gmra.mxu0 %v3470
      %v3644 = vpop.f32.mrf.mxu0
      %v3645 = vadd.f32 0.0, %v3644
      %v3646 = vpop.f32.mrf.mxu0
      %3647 = vmatprep.mubr.f32.mxu0 0.0
      %3648 = vmatmul.mubr.f32.gmra.mxu0 %v3473
      %v3649 = vpop.f32.mrf.mxu0
      %v3650 = vadd.f32 0.0, %v3649
      %v3651 = vpop.f32.mrf.mxu0
      %3652 = vmatprep.mubr.f32.mxu0 0.0
      %3653 = vmatmul.mubr.f32.gmra.mxu0 %v3476
      %v3654 = vpop.f32.mrf.mxu0
      %v3655 = vadd.f32 0.0, %v3654
      %v3656 = vpop.f32.mrf.mxu0
      %3657 = vmatprep.mubr.f32.mxu0 0.0
      %3658 = vmatmul.mubr.f32.gmra.mxu0 %v3479
      %v3659 = vpop.f32.mrf.mxu0
      %v3660 = vadd.f32 0.0, %v3659
      %v3661 = vpop.f32.mrf.mxu0
      %3662 = vmatprep.mubr.f32.mxu0 0.0
      %3663 = vmatmul.mubr.f32.gmra.mxu0 %v3482
      %v3664 = vpop.f32.mrf.mxu0
      %v3665 = vadd.f32 0.0, %v3664
      %v3666 = vpop.f32.mrf.mxu0
      %3667 = vmatprep.mubr.f32.mxu0 0.0
      %3668 = vmatmul.mubr.f32.gmra.mxu0 %v3485
      %v3669 = vpop.f32.mrf.mxu0
      %v3670 = vadd.f32 0.0, %v3669
      %v3671 = vpop.f32.mrf.mxu0
      %3672 = vmatprep.mubr.f32.mxu0 0.0
      %3673 = vmatmul.mubr.f32.gmra.mxu0 %v3488
      %v3674 = vpop.f32.mrf.mxu0
      %v3675 = vadd.f32 0.0, %v3674
      %v3676 = vpop.f32.mrf.mxu0
      %3677 = vmatprep.mubr.f32.mxu0 0.0
      %3678 = vmatmul.mubr.f32.gmra.mxu0 %v3491
      %v3679 = vpop.f32.mrf.mxu0
      %v3680 = vadd.f32 0.0, %v3679
      %v3681 = vpop.f32.mrf.mxu0
      %3682 = vmatprep.mubr.f32.mxu0 0.0
      %3683 = vmatmul.mubr.f32.gmra.mxu0 %v3494
      %v3684 = vpop.f32.mrf.mxu0
      %v3685 = vadd.f32 0.0, %v3684
      %v3686 = vpop.f32.mrf.mxu0
      %3687 = vmatprep.mubr.f32.mxu0 0.0
      %3688 = vmatmul.mubr.f32.gmra.mxu0 %v3497
      %v3689 = vpop.f32.mrf.mxu0
      %v3690 = vadd.f32 0.0, %v3689
      %v3691 = vpop.f32.mrf.mxu0
      %3692 = vmatprep.mubr.f32.mxu0 0.0
      %3693 = vmatmul.mubr.f32.gmra.mxu0 %v3500
      %v3694 = vpop.f32.mrf.mxu0
      %v3695 = vadd.f32 0.0, %v3694
      %v3696 = vpop.f32.mrf.mxu0
      %3697 = vmatprep.mubr.f32.mxu0 0.0
      %3698 = vmatmul.mubr.f32.gmra.mxu0 %v3503
      %v3699 = vpop.f32.mrf.mxu0
      %v3700 = vadd.f32 0.0, %v3699
      %v3701 = vpop.f32.mrf.mxu0
      %3702 = vmatprep.mubr.f32.mxu0 0.0
      %3703 = vmatmul.mubr.f32.gmra.mxu0 %v3506
      %v3704 = vpop.f32.mrf.mxu0
      %v3705 = vadd.f32 0.0, %v3704
      %v3706 = vpop.f32.mrf.mxu0
      %3707 = vmatprep.mubr.f32.mxu0 0.0
      %3708 = vmatmul.mubr.f32.gmra.mxu0 %v3509
      %v3709 = vpop.f32.mrf.mxu0
      %v3710 = vadd.f32 0.0, %v3709
      %v3711 = vpop.f32.mrf.mxu0
      %3712 = vmatprep.mubr.f32.mxu0 0.0
      %3713 = vmatmul.mubr.f32.gmra.mxu0 %v3512
      %v3714 = vpop.f32.mrf.mxu0
      %v3715 = vadd.f32 0.0, %v3714
      %v3716 = vpop.f32.mrf.mxu0
      %3717 = vmatprep.mubr.f32.mxu0 0.0
      %3718 = vmatmul.mubr.f32.gmra.mxu0 %v3515
      %v3719 = vpop.f32.mrf.mxu0
      %v3720 = vadd.f32 0.0, %v3719
      %v3721 = vpop.f32.mrf.mxu0
      %3722 = vmatprep.mubr.f32.mxu0 0.0
      %3723 = vmatmul.mubr.f32.gmra.mxu0 %v3518
      %v3724 = vpop.f32.mrf.mxu0
      %v3725 = vadd.f32 0.0, %v3724
      %v3726 = vpop.f32.mrf.mxu0
      %3727 = vmatprep.mubr.f32.mxu0 0.0
      %3728 = vmatmul.mubr.f32.gmra.mxu0 %v3521
      %v3729 = vpop.f32.mrf.mxu0
      %v3730 = vadd.f32 0.0, %v3729
      %v3731 = vpop.f32.mrf.mxu0
      %3732 = vmatprep.mubr.f32.mxu0 0.0
      %3733 = vmatmul.mubr.f32.gmra.mxu0 %v3524
      %v3734 = vpop.f32.mrf.mxu0
      %v3735 = vadd.f32 0.0, %v3734
      %v3736 = vpop.f32.mrf.mxu0
      %3737 = vmatprep.mubr.f32.mxu0 0.0
      %3738 = vmatmul.mubr.f32.gmra.mxu0 %v3527
      %v3739 = vpop.f32.mrf.mxu0
      %v3740 = vadd.f32 0.0, %v3739
      %v3741 = vpop.f32.mrf.mxu0
      %3742 = vmatprep.mubr.f32.mxu0 0.0
      %3743 = vmatmul.mubr.f32.gmra.mxu0 %v3530
      %v3744 = vpop.f32.mrf.mxu0
      %v3745 = vadd.f32 0.0, %v3744
      %v3746 = vpop.f32.mrf.mxu0
      %3747 = vmatprep.mubr.f32.mxu0 0.0
      %3748 = vmatmul.mubr.f32.gmra.mxu0 %v3533
      %v3749 = vpop.f32.mrf.mxu0
      %v3750 = vadd.f32 0.0, %v3749
      %v3751 = vpop.f32.mrf.mxu0
      %3752 = vmatprep.mubr.f32.mxu0 0.0
      %3753 = vmatmul.mubr.f32.gmra.mxu0 %v3536
      %v3754 = vpop.f32.mrf.mxu0
      %v3755 = vadd.f32 0.0, %v3754
      %v3756 = vpop.f32.mrf.mxu0
      %3757 = vmatprep.mubr.f32.mxu0 0.0
      %3758 = vmatmul.mubr.f32.gmra.mxu0 %v3539
      %v3759 = vpop.f32.mrf.mxu0
      %v3760 = vadd.f32 0.0, %v3759
      %v3761 = vpop.f32.mrf.mxu0
      %3762 = vmatprep.mubr.f32.mxu0 0.0
      %3763 = vmatmul.mubr.f32.gmra.mxu0 %v3542
      %v3764 = vpop.f32.mrf.mxu0
      %v3765 = vadd.f32 0.0, %v3764
      %v3766 = vpop.f32.mrf.mxu0
      %3767 = vmatprep.mubr.f32.mxu0 0.0
      %3768 = vmatmul.mubr.f32.gmra.mxu0 %v3545
      %v3769 = vpop.f32.mrf.mxu0
      %v3770 = vadd.f32 0.0, %v3769
      %v3771 = vpop.f32.mrf.mxu0
      %3772 = vmatprep.mubr.f32.mxu0 0.0
      %3773 = vmatmul.mubr.f32.gmra.mxu0 %v3548
      %v3774 = vpop.f32.mrf.mxu0
      %v3775 = vadd.f32 0.0, %v3774
      %v3776 = vpop.f32.mrf.mxu0
      %3777 = vdwg.mxu0
      %v3778 = vadd.f32 %v3420, %v3620
      %v3779 = vadd.f32 %v3421, %v3625
      %v3780 = vadd.f32 %v3422, %v3630
      %v3781 = vadd.f32 %v3423, %v3635
      %v3782 = vadd.f32 %v3424, %v3640
      %v3783 = vadd.f32 %v3425, %v3645
      %v3784 = vadd.f32 %v3426, %v3650
      %v3785 = vadd.f32 %v3427, %v3655
      %v3786 = vadd.f32 %v3428, %v3660
      %v3787 = vadd.f32 %v3429, %v3665
      %v3788 = vadd.f32 %v3430, %v3670
      %v3789 = vadd.f32 %v3431, %v3675
      %v3790 = vadd.f32 %v3432, %v3680
      %v3791 = vadd.f32 %v3433, %v3685
      %v3792 = vadd.f32 %v3434, %v3690
      %v3793 = vadd.f32 %v3435, %v3695
      %v3794 = vadd.f32 %v3436, %v3700
      %v3795 = vadd.f32 %v3437, %v3705
      %v3796 = vadd.f32 %v3438, %v3710
      %v3797 = vadd.f32 %v3439, %v3715
      %v3798 = vadd.f32 %v3440, %v3720
      %v3799 = vadd.f32 %v3441, %v3725
      %v3800 = vadd.f32 %v3442, %v3730
      %v3801 = vadd.f32 %v3443, %v3735
      %v3802 = vadd.f32 %v3444, %v3740
      %v3803 = vadd.f32 %v3445, %v3745
      %v3804 = vadd.f32 %v3446, %v3750
      %v3805 = vadd.f32 %v3447, %v3755
      %v3806 = vadd.f32 %v3448, %v3760
      %v3807 = vadd.f32 %v3449, %v3765
      %v3808 = vadd.f32 %v3450, %v3770
      %v3809 = vadd.f32 %v3451, %v3775
      %3810 = vst [vmem:[#allocation2] sm:$0xff] %v3778
      %3811 = vst [vmem:[#allocation2 + $0x8] sm:$0xff] %v3779
      %3812 = vst [vmem:[#allocation2 + $0x10] sm:$0xff] %v3780
      %3813 = vst [vmem:[#allocation2 + $0x18] sm:$0xff] %v3781
      %3814 = vst [vmem:[#allocation2 + $0x20] sm:$0xff] %v3782
      %3815 = vst [vmem:[#allocation2 + $0x28] sm:$0xff] %v3783
      %3816 = vst [vmem:[#allocation2 + $0x30] sm:$0xff] %v3784
      %3817 = vst [vmem:[#allocation2 + $0x38] sm:$0xff] %v3785
      %3818 = vst [vmem:[#allocation2 + $0x40] sm:$0xff] %v3786
      %3819 = vst [vmem:[#allocation2 + $0x48] sm:$0xff] %v3787
      %3820 = vst [vmem:[#allocation2 + $0x50] sm:$0xff] %v3788
      %3821 = vst [vmem:[#allocation2 + $0x58] sm:$0xff] %v3789
      %3822 = vst [vmem:[#allocation2 + $0x60] sm:$0xff] %v3790
      %3823 = vst [vmem:[#allocation2 + $0x68] sm:$0xff] %v3791
      %3824 = vst [vmem:[#allocation2 + $0x70] sm:$0xff] %v3792
      %3825 = vst [vmem:[#allocation2 + $0x78] sm:$0xff] %v3793
      %3826 = vst [vmem:[#allocation2 + $0x80] sm:$0xff] %v3794
      %3827 = vst [vmem:[#allocation2 + $0x88] sm:$0xff] %v3795
      %3828 = vst [vmem:[#allocation2 + $0x90] sm:$0xff] %v3796
      %3829 = vst [vmem:[#allocation2 + $0x98] sm:$0xff] %v3797
      %3830 = vst [vmem:[#allocation2 + $0xa0] sm:$0xff] %v3798
      %3831 = vst [vmem:[#allocation2 + $0xa8] sm:$0xff] %v3799
      %3832 = vst [vmem:[#allocation2 + $0xb0] sm:$0xff] %v3800
      %3833 = vst [vmem:[#allocation2 + $0xb8] sm:$0xff] %v3801
      %3834 = vst [vmem:[#allocation2 + $0xc0] sm:$0xff] %v3802
      %3835 = vst [vmem:[#allocation2 + $0xc8] sm:$0xff] %v3803
      %3836 = vst [vmem:[#allocation2 + $0xd0] sm:$0xff] %v3804
      %3837 = vst [vmem:[#allocation2 + $0xd8] sm:$0xff] %v3805
      %3838 = vst [vmem:[#allocation2 + $0xe0] sm:$0xff] %v3806
      %3839 = vst [vmem:[#allocation2 + $0xe8] sm:$0xff] %v3807
      %3840 = vst [vmem:[#allocation2 + $0xf0] sm:$0xff] %v3808
      %3841 = vst [vmem:[#allocation2 + $0xf8] sm:$0xff] %v3809
      %v3842 = vld [vmem:[%s169 + $0x8] sm:$0xff]
      %v3843 = vld [vmem:[%s169 + $0x10] sm:$0xff]
      %v3844 = vld [vmem:[%s169 + $0x20] sm:$0xff]
      %v3845 = vld [vmem:[%s169 + $0x28] sm:$0xff]
      %v3846 = vld [vmem:[%s169 + $0x38] sm:$0xff]
      %v3847 = vld [vmem:[%s169 + $0x40] sm:$0xff]
      %v3848 = vld [vmem:[%s169 + $0x50] sm:$0xff]
      %v3849 = vld [vmem:[%s169 + $0x58] sm:$0xff]
      %v3850 = vld [vmem:[%s169 + $0x68] sm:$0xff]
      %v3851 = vld [vmem:[%s169 + $0x70] sm:$0xff]
      %v3852 = vld [vmem:[%s169 + $0x80] sm:$0xff]
      %v3853 = vld [vmem:[%s169 + $0x88] sm:$0xff]
      %v3854 = vld [vmem:[%s169 + $0x98] sm:$0xff]
      %v3855 = vld [vmem:[%s169 + $0xa0] sm:$0xff]
      %v3856 = vld [vmem:[%s169 + $0xb0] sm:$0xff]
      %v3857 = vld [vmem:[%s169 + $0xb8] sm:$0xff]
      %v3858 = vld [vmem:[%s169 + $0xc8] sm:$0xff]
      %v3859 = vld [vmem:[%s169 + $0xd0] sm:$0xff]
      %v3860 = vld [vmem:[%s169 + $0xe0] sm:$0xff]
      %v3861 = vld [vmem:[%s169 + $0xe8] sm:$0xff]
      %v3862 = vld [vmem:[%s169 + $0xf8] sm:$0xff]
      %v3863 = vld [vmem:[%s169 + $0x100] sm:$0xff]
      %v3864 = vld [vmem:[%s169 + $0x110] sm:$0xff]
      %v3865 = vld [vmem:[%s169 + $0x118] sm:$0xff]
      %v3866 = vld [vmem:[%s169 + $0x128] sm:$0xff]
      %v3867 = vld [vmem:[%s169 + $0x130] sm:$0xff]
      %v3868 = vld [vmem:[%s169 + $0x140] sm:$0xff]
      %v3869 = vld [vmem:[%s169 + $0x148] sm:$0xff]
      %v3870 = vld [vmem:[%s169 + $0x158] sm:$0xff]
      %v3871 = vld [vmem:[%s169 + $0x160] sm:$0xff]
      %v3872 = vld [vmem:[%s169 + $0x170] sm:$0xff]
      %v3873 = vld [vmem:[%s169 + $0x178] sm:$0xff]
      %v3874 = vld [vmem:[#allocation2] sm:$0xff]
      %v3875 = vld [vmem:[#allocation2 + $0x8] sm:$0xff]
      %v3876 = vld [vmem:[#allocation2 + $0x10] sm:$0xff]
      %v3877 = vld [vmem:[#allocation2 + $0x18] sm:$0xff]
      %v3878 = vld [vmem:[#allocation2 + $0x20] sm:$0xff]
      %v3879 = vld [vmem:[#allocation2 + $0x28] sm:$0xff]
      %v3880 = vld [vmem:[#allocation2 + $0x30] sm:$0xff]
      %v3881 = vld [vmem:[#allocation2 + $0x38] sm:$0xff]
      %v3882 = vld [vmem:[#allocation2 + $0x40] sm:$0xff]
      %v3883 = vld [vmem:[#allocation2 + $0x48] sm:$0xff]
      %v3884 = vld [vmem:[#allocation2 + $0x50] sm:$0xff]
      %v3885 = vld [vmem:[#allocation2 + $0x58] sm:$0xff]
      %v3886 = vld [vmem:[#allocation2 + $0x60] sm:$0xff]
      %v3887 = vld [vmem:[#allocation2 + $0x68] sm:$0xff]
      %v3888 = vld [vmem:[#allocation2 + $0x70] sm:$0xff]
      %v3889 = vld [vmem:[#allocation2 + $0x78] sm:$0xff]
      %v3890 = vld [vmem:[#allocation2 + $0x80] sm:$0xff]
      %v3891 = vld [vmem:[#allocation2 + $0x88] sm:$0xff]
      %v3892 = vld [vmem:[#allocation2 + $0x90] sm:$0xff]
      %v3893 = vld [vmem:[#allocation2 + $0x98] sm:$0xff]
      %v3894 = vld [vmem:[#allocation2 + $0xa0] sm:$0xff]
      %v3895 = vld [vmem:[#allocation2 + $0xa8] sm:$0xff]
      %v3896 = vld [vmem:[#allocation2 + $0xb0] sm:$0xff]
      %v3897 = vld [vmem:[#allocation2 + $0xb8] sm:$0xff]
      %v3898 = vld [vmem:[#allocation2 + $0xc0] sm:$0xff]
      %v3899 = vld [vmem:[#allocation2 + $0xc8] sm:$0xff]
      %v3900 = vld [vmem:[#allocation2 + $0xd0] sm:$0xff]
      %v3901 = vld [vmem:[#allocation2 + $0xd8] sm:$0xff]
      %v3902 = vld [vmem:[#allocation2 + $0xe0] sm:$0xff]
      %v3903 = vld [vmem:[#allocation2 + $0xe8] sm:$0xff]
      %v3904 = vld [vmem:[#allocation2 + $0xf0] sm:$0xff]
      %v3905 = vld [vmem:[#allocation2 + $0xf8] sm:$0xff]
      %s3906 = scalar_lea.vmem %s1, 32
      %v3907 = vld [vmem:[%s3906] sm:$0xf]
      %v3909 = vsel %vm274, %v3842, 0
      %v3912 = vsel %vm274, %v3843, 0
      %v3915 = vsel %vm274, %v3844, 0
      %v3918 = vsel %vm274, %v3845, 0
      %v3921 = vsel %vm274, %v3846, 0
      %v3924 = vsel %vm274, %v3847, 0
      %v3927 = vsel %vm274, %v3848, 0
      %v3930 = vsel %vm274, %v3849, 0
      %v3933 = vsel %vm274, %v3850, 0
      %v3936 = vsel %vm274, %v3851, 0
      %v3939 = vsel %vm274, %v3852, 0
      %v3942 = vsel %vm274, %v3853, 0
      %v3945 = vsel %vm274, %v3854, 0
      %v3948 = vsel %vm274, %v3855, 0
      %v3951 = vsel %vm274, %v3856, 0
      %v3954 = vsel %vm274, %v3857, 0
      %v3957 = vsel %vm274, %v3858, 0
      %v3960 = vsel %vm274, %v3859, 0
      %v3963 = vsel %vm274, %v3860, 0
      %v3966 = vsel %vm274, %v3861, 0
      %v3969 = vsel %vm274, %v3862, 0
      %v3972 = vsel %vm274, %v3863, 0
      %v3975 = vsel %vm274, %v3864, 0
      %v3978 = vsel %vm274, %v3865, 0
      %v3981 = vsel %vm274, %v3866, 0
      %v3984 = vsel %vm274, %v3867, 0
      %v3987 = vsel %vm274, %v3868, 0
      %v3990 = vsel %vm274, %v3869, 0
      %v3993 = vsel %vm274, %v3870, 0
      %v3996 = vsel %vm274, %v3871, 0
      %v3999 = vsel %vm274, %v3872, 0
      %v4002 = vsel %vm274, %v3873, 0
      %v4005 = vsel %vm371, %v3907, 0
      %4007 = vmatprep.subr.mxu0 0.0
      %4008 = vmatpush1.msra.mxu0 0.0
      %4009 = vmatprep.subr.mxu0 0.0
      %4010 = vmatpush1.msra.mxu0 0.0
      %4011 = vmatprep.subr.mxu0 0.0
      %4012 = vmatpush1.msra.mxu0 0.0
      %4013 = vmatprep.subr.mxu0 0.0
      %4014 = vmatpush1.msra.mxu0 0.0
      %4015 = vmatprep.subr.mxu0 0.0
      %4016 = vmatpush1.msra.mxu0 0.0
      %4017 = vmatprep.subr.mxu0 0.0
      %4018 = vmatpush1.msra.mxu0 0.0
      %4019 = vmatprep.subr.mxu0 0.0
      %4020 = vmatpush1.msra.mxu0 0.0
      %4021 = vmatprep.subr.mxu0 0.0
      %4022 = vmatpush1.msra.mxu0 0.0
      %4023 = vmatprep.subr.mxu0 0.0
      %4024 = vmatpush1.msra.mxu0 0.0
      %4025 = vmatprep.subr.mxu0 0.0
      %4026 = vmatpush1.msra.mxu0 0.0
      %4027 = vmatprep.subr.mxu0 0.0
      %4028 = vmatpush1.msra.mxu0 0.0
      %4029 = vmatprep.subr.mxu0 0.0
      %4030 = vmatpush1.msra.mxu0 0.0
      %4031 = vmatprep.subr.mxu0 0.0
      %4032 = vmatpush1.msra.mxu0 0.0
      %4033 = vmatprep.subr.mxu0 0.0
      %4034 = vmatpush1.msra.mxu0 0.0
      %4035 = vmatprep.subr.mxu0 0.0
      %4036 = vmatpush1.msra.mxu0 0.0
      %4037 = vmatprep.subr.mxu0 0.0
      %4038 = vmatpush1.msra.mxu0 %v4005
      %4039 = vmatprep.subr.mxu0 0.0
      %4040 = vmatpush2.msra.mxu0 0.0
      %4041 = vmatprep.subr.mxu0 0.0
      %4042 = vmatpush2.msra.mxu0 0.0
      %4043 = vmatprep.subr.mxu0 0.0
      %4044 = vmatpush2.msra.mxu0 0.0
      %4045 = vmatprep.subr.mxu0 0.0
      %4046 = vmatpush2.msra.mxu0 0.0
      %4047 = vmatprep.subr.mxu0 0.0
      %4048 = vmatpush2.msra.mxu0 0.0
      %4049 = vmatprep.subr.mxu0 0.0
      %4050 = vmatpush2.msra.mxu0 0.0
      %4051 = vmatprep.subr.mxu0 0.0
      %4052 = vmatpush2.msra.mxu0 0.0
      %4053 = vmatprep.subr.mxu0 0.0
      %4054 = vmatpush2.msra.mxu0 0.0
      %4055 = vmatprep.subr.mxu0 0.0
      %4056 = vmatpush2.msra.mxu0 0.0
      %4057 = vmatprep.subr.mxu0 0.0
      %4058 = vmatpush2.msra.mxu0 0.0
      %4059 = vmatprep.subr.mxu0 0.0
      %4060 = vmatpush2.msra.mxu0 0.0
      %4061 = vmatprep.subr.mxu0 0.0
      %4062 = vmatpush2.msra.mxu0 0.0
      %4063 = vmatprep.subr.mxu0 0.0
      %4064 = vmatpush2.msra.mxu0 0.0
      %4065 = vmatprep.subr.mxu0 0.0
      %4066 = vmatpush2.msra.mxu0 0.0
      %4067 = vmatprep.subr.mxu0 0.0
      %4068 = vmatpush2.msra.mxu0 0.0
      %4069 = vmatprep.subr.mxu0 0.0
      %4070 = vmatpush2.msra.mxu0 0.0
      %4071 = vmatprep.mubr.f32.mxu0 0.0
      %4072 = vmatmul.mubr.f32.gmra.mxu0 %v3909
      %v4073 = vpop.f32.mrf.mxu0
      %v4074 = vadd.f32 0.0, %v4073
      %v4075 = vpop.f32.mrf.mxu0
      %4076 = vmatprep.mubr.f32.mxu0 0.0
      %4077 = vmatmul.mubr.f32.gmra.mxu0 %v3912
      %v4078 = vpop.f32.mrf.mxu0
      %v4079 = vadd.f32 0.0, %v4078
      %v4080 = vpop.f32.mrf.mxu0
      %4081 = vmatprep.mubr.f32.mxu0 0.0
      %4082 = vmatmul.mubr.f32.gmra.mxu0 %v3915
      %v4083 = vpop.f32.mrf.mxu0
      %v4084 = vadd.f32 0.0, %v4083
      %v4085 = vpop.f32.mrf.mxu0
      %4086 = vmatprep.mubr.f32.mxu0 0.0
      %4087 = vmatmul.mubr.f32.gmra.mxu0 %v3918
      %v4088 = vpop.f32.mrf.mxu0
      %v4089 = vadd.f32 0.0, %v4088
      %v4090 = vpop.f32.mrf.mxu0
      %4091 = vmatprep.mubr.f32.mxu0 0.0
      %4092 = vmatmul.mubr.f32.gmra.mxu0 %v3921
      %v4093 = vpop.f32.mrf.mxu0
      %v4094 = vadd.f32 0.0, %v4093
      %v4095 = vpop.f32.mrf.mxu0
      %4096 = vmatprep.mubr.f32.mxu0 0.0
      %4097 = vmatmul.mubr.f32.gmra.mxu0 %v3924
      %v4098 = vpop.f32.mrf.mxu0
      %v4099 = vadd.f32 0.0, %v4098
      %v4100 = vpop.f32.mrf.mxu0
      %4101 = vmatprep.mubr.f32.mxu0 0.0
      %4102 = vmatmul.mubr.f32.gmra.mxu0 %v3927
      %v4103 = vpop.f32.mrf.mxu0
      %v4104 = vadd.f32 0.0, %v4103
      %v4105 = vpop.f32.mrf.mxu0
      %4106 = vmatprep.mubr.f32.mxu0 0.0
      %4107 = vmatmul.mubr.f32.gmra.mxu0 %v3930
      %v4108 = vpop.f32.mrf.mxu0
      %v4109 = vadd.f32 0.0, %v4108
      %v4110 = vpop.f32.mrf.mxu0
      %4111 = vmatprep.mubr.f32.mxu0 0.0
      %4112 = vmatmul.mubr.f32.gmra.mxu0 %v3933
      %v4113 = vpop.f32.mrf.mxu0
      %v4114 = vadd.f32 0.0, %v4113
      %v4115 = vpop.f32.mrf.mxu0
      %4116 = vmatprep.mubr.f32.mxu0 0.0
      %4117 = vmatmul.mubr.f32.gmra.mxu0 %v3936
      %v4118 = vpop.f32.mrf.mxu0
      %v4119 = vadd.f32 0.0, %v4118
      %v4120 = vpop.f32.mrf.mxu0
      %4121 = vmatprep.mubr.f32.mxu0 0.0
      %4122 = vmatmul.mubr.f32.gmra.mxu0 %v3939
      %v4123 = vpop.f32.mrf.mxu0
      %v4124 = vadd.f32 0.0, %v4123
      %v4125 = vpop.f32.mrf.mxu0
      %4126 = vmatprep.mubr.f32.mxu0 0.0
      %4127 = vmatmul.mubr.f32.gmra.mxu0 %v3942
      %v4128 = vpop.f32.mrf.mxu0
      %v4129 = vadd.f32 0.0, %v4128
      %v4130 = vpop.f32.mrf.mxu0
      %4131 = vmatprep.mubr.f32.mxu0 0.0
      %4132 = vmatmul.mubr.f32.gmra.mxu0 %v3945
      %v4133 = vpop.f32.mrf.mxu0
      %v4134 = vadd.f32 0.0, %v4133
      %v4135 = vpop.f32.mrf.mxu0
      %4136 = vmatprep.mubr.f32.mxu0 0.0
      %4137 = vmatmul.mubr.f32.gmra.mxu0 %v3948
      %v4138 = vpop.f32.mrf.mxu0
      %v4139 = vadd.f32 0.0, %v4138
      %v4140 = vpop.f32.mrf.mxu0
      %4141 = vmatprep.mubr.f32.mxu0 0.0
      %4142 = vmatmul.mubr.f32.gmra.mxu0 %v3951
      %v4143 = vpop.f32.mrf.mxu0
      %v4144 = vadd.f32 0.0, %v4143
      %v4145 = vpop.f32.mrf.mxu0
      %4146 = vmatprep.mubr.f32.mxu0 0.0
      %4147 = vmatmul.mubr.f32.gmra.mxu0 %v3954
      %v4148 = vpop.f32.mrf.mxu0
      %v4149 = vadd.f32 0.0, %v4148
      %v4150 = vpop.f32.mrf.mxu0
      %4151 = vmatprep.mubr.f32.mxu0 0.0
      %4152 = vmatmul.mubr.f32.gmra.mxu0 %v3957
      %v4153 = vpop.f32.mrf.mxu0
      %v4154 = vadd.f32 0.0, %v4153
      %v4155 = vpop.f32.mrf.mxu0
      %4156 = vmatprep.mubr.f32.mxu0 0.0
      %4157 = vmatmul.mubr.f32.gmra.mxu0 %v3960
      %v4158 = vpop.f32.mrf.mxu0
      %v4159 = vadd.f32 0.0, %v4158
      %v4160 = vpop.f32.mrf.mxu0
      %4161 = vmatprep.mubr.f32.mxu0 0.0
      %4162 = vmatmul.mubr.f32.gmra.mxu0 %v3963
      %v4163 = vpop.f32.mrf.mxu0
      %v4164 = vadd.f32 0.0, %v4163
      %v4165 = vpop.f32.mrf.mxu0
      %4166 = vmatprep.mubr.f32.mxu0 0.0
      %4167 = vmatmul.mubr.f32.gmra.mxu0 %v3966
      %v4168 = vpop.f32.mrf.mxu0
      %v4169 = vadd.f32 0.0, %v4168
      %v4170 = vpop.f32.mrf.mxu0
      %4171 = vmatprep.mubr.f32.mxu0 0.0
      %4172 = vmatmul.mubr.f32.gmra.mxu0 %v3969
      %v4173 = vpop.f32.mrf.mxu0
      %v4174 = vadd.f32 0.0, %v4173
      %v4175 = vpop.f32.mrf.mxu0
      %4176 = vmatprep.mubr.f32.mxu0 0.0
      %4177 = vmatmul.mubr.f32.gmra.mxu0 %v3972
      %v4178 = vpop.f32.mrf.mxu0
      %v4179 = vadd.f32 0.0, %v4178
      %v4180 = vpop.f32.mrf.mxu0
      %4181 = vmatprep.mubr.f32.mxu0 0.0
      %4182 = vmatmul.mubr.f32.gmra.mxu0 %v3975
      %v4183 = vpop.f32.mrf.mxu0
      %v4184 = vadd.f32 0.0, %v4183
      %v4185 = vpop.f32.mrf.mxu0
      %4186 = vmatprep.mubr.f32.mxu0 0.0
      %4187 = vmatmul.mubr.f32.gmra.mxu0 %v3978
      %v4188 = vpop.f32.mrf.mxu0
      %v4189 = vadd.f32 0.0, %v4188
      %v4190 = vpop.f32.mrf.mxu0
      %4191 = vmatprep.mubr.f32.mxu0 0.0
      %4192 = vmatmul.mubr.f32.gmra.mxu0 %v3981
      %v4193 = vpop.f32.mrf.mxu0
      %v4194 = vadd.f32 0.0, %v4193
      %v4195 = vpop.f32.mrf.mxu0
      %4196 = vmatprep.mubr.f32.mxu0 0.0
      %4197 = vmatmul.mubr.f32.gmra.mxu0 %v3984
      %v4198 = vpop.f32.mrf.mxu0
      %v4199 = vadd.f32 0.0, %v4198
      %v4200 = vpop.f32.mrf.mxu0
      %4201 = vmatprep.mubr.f32.mxu0 0.0
      %4202 = vmatmul.mubr.f32.gmra.mxu0 %v3987
      %v4203 = vpop.f32.mrf.mxu0
      %v4204 = vadd.f32 0.0, %v4203
      %v4205 = vpop.f32.mrf.mxu0
      %4206 = vmatprep.mubr.f32.mxu0 0.0
      %4207 = vmatmul.mubr.f32.gmra.mxu0 %v3990
      %v4208 = vpop.f32.mrf.mxu0
      %v4209 = vadd.f32 0.0, %v4208
      %v4210 = vpop.f32.mrf.mxu0
      %4211 = vmatprep.mubr.f32.mxu0 0.0
      %4212 = vmatmul.mubr.f32.gmra.mxu0 %v3993
      %v4213 = vpop.f32.mrf.mxu0
      %v4214 = vadd.f32 0.0, %v4213
      %v4215 = vpop.f32.mrf.mxu0
      %4216 = vmatprep.mubr.f32.mxu0 0.0
      %4217 = vmatmul.mubr.f32.gmra.mxu0 %v3996
      %v4218 = vpop.f32.mrf.mxu0
      %v4219 = vadd.f32 0.0, %v4218
      %v4220 = vpop.f32.mrf.mxu0
      %4221 = vmatprep.mubr.f32.mxu0 0.0
      %4222 = vmatmul.mubr.f32.gmra.mxu0 %v3999
      %v4223 = vpop.f32.mrf.mxu0
      %v4224 = vadd.f32 0.0, %v4223
      %v4225 = vpop.f32.mrf.mxu0
      %4226 = vmatprep.mubr.f32.mxu0 0.0
      %4227 = vmatmul.mubr.f32.gmra.mxu0 %v4002
      %v4228 = vpop.f32.mrf.mxu0
      %v4229 = vadd.f32 0.0, %v4228
      %v4230 = vpop.f32.mrf.mxu0
      %4231 = vdwg.mxu0
      %v4232 = vadd.f32 %v3874, %v4074
      %v4233 = vadd.f32 %v3875, %v4079
      %v4234 = vadd.f32 %v3876, %v4084
      %v4235 = vadd.f32 %v3877, %v4089
      %v4236 = vadd.f32 %v3878, %v4094
      %v4237 = vadd.f32 %v3879, %v4099
      %v4238 = vadd.f32 %v3880, %v4104
      %v4239 = vadd.f32 %v3881, %v4109
      %v4240 = vadd.f32 %v3882, %v4114
      %v4241 = vadd.f32 %v3883, %v4119
      %v4242 = vadd.f32 %v3884, %v4124
      %v4243 = vadd.f32 %v3885, %v4129
      %v4244 = vadd.f32 %v3886, %v4134
      %v4245 = vadd.f32 %v3887, %v4139
      %v4246 = vadd.f32 %v3888, %v4144
      %v4247 = vadd.f32 %v3889, %v4149
      %v4248 = vadd.f32 %v3890, %v4154
      %v4249 = vadd.f32 %v3891, %v4159
      %v4250 = vadd.f32 %v3892, %v4164
      %v4251 = vadd.f32 %v3893, %v4169
      %v4252 = vadd.f32 %v3894, %v4174
      %v4253 = vadd.f32 %v3895, %v4179
      %v4254 = vadd.f32 %v3896, %v4184
      %v4255 = vadd.f32 %v3897, %v4189
      %v4256 = vadd.f32 %v3898, %v4194
      %v4257 = vadd.f32 %v3899, %v4199
      %v4258 = vadd.f32 %v3900, %v4204
      %v4259 = vadd.f32 %v3901, %v4209
      %v4260 = vadd.f32 %v3902, %v4214
      %v4261 = vadd.f32 %v3903, %v4219
      %v4262 = vadd.f32 %v3904, %v4224
      %v4263 = vadd.f32 %v3905, %v4229
      %4264 = vst [vmem:[#allocation2] sm:$0xff] %v4232
      %4265 = vst [vmem:[#allocation2 + $0x8] sm:$0xff] %v4233
      %4266 = vst [vmem:[#allocation2 + $0x10] sm:$0xff] %v4234
      %4267 = vst [vmem:[#allocation2 + $0x18] sm:$0xff] %v4235
      %4268 = vst [vmem:[#allocation2 + $0x20] sm:$0xff] %v4236
      %4269 = vst [vmem:[#allocation2 + $0x28] sm:$0xff] %v4237
      %4270 = vst [vmem:[#allocation2 + $0x30] sm:$0xff] %v4238
      %4271 = vst [vmem:[#allocation2 + $0x38] sm:$0xff] %v4239
      %4272 = vst [vmem:[#allocation2 + $0x40] sm:$0xff] %v4240
      %4273 = vst [vmem:[#allocation2 + $0x48] sm:$0xff] %v4241
      %4274 = vst [vmem:[#allocation2 + $0x50] sm:$0xff] %v4242
      %4275 = vst [vmem:[#allocation2 + $0x58] sm:$0xff] %v4243
      %4276 = vst [vmem:[#allocation2 + $0x60] sm:$0xff] %v4244
      %4277 = vst [vmem:[#allocation2 + $0x68] sm:$0xff] %v4245
      %4278 = vst [vmem:[#allocation2 + $0x70] sm:$0xff] %v4246
      %4279 = vst [vmem:[#allocation2 + $0x78] sm:$0xff] %v4247
      %4280 = vst [vmem:[#allocation2 + $0x80] sm:$0xff] %v4248
      %4281 = vst [vmem:[#allocation2 + $0x88] sm:$0xff] %v4249
      %4282 = vst [vmem:[#allocation2 + $0x90] sm:$0xff] %v4250
      %4283 = vst [vmem:[#allocation2 + $0x98] sm:$0xff] %v4251
      %4284 = vst [vmem:[#allocation2 + $0xa0] sm:$0xff] %v4252
      %4285 = vst [vmem:[#allocation2 + $0xa8] sm:$0xff] %v4253
      %4286 = vst [vmem:[#allocation2 + $0xb0] sm:$0xff] %v4254
      %4287 = vst [vmem:[#allocation2 + $0xb8] sm:$0xff] %v4255
      %4288 = vst [vmem:[#allocation2 + $0xc0] sm:$0xff] %v4256
      %4289 = vst [vmem:[#allocation2 + $0xc8] sm:$0xff] %v4257
      %4290 = vst [vmem:[#allocation2 + $0xd0] sm:$0xff] %v4258
      %4291 = vst [vmem:[#allocation2 + $0xd8] sm:$0xff] %v4259
      %4292 = vst [vmem:[#allocation2 + $0xe0] sm:$0xff] %v4260
      %4293 = vst [vmem:[#allocation2 + $0xe8] sm:$0xff] %v4261
      %4294 = vst [vmem:[#allocation2 + $0xf0] sm:$0xff] %v4262
      %4295 = vst [vmem:[#allocation2 + $0xf8] sm:$0xff] %v4263
      %v4296 = vld [vmem:[#allocation2] sm:$0xff]
      %v4297 = vld [vmem:[#allocation2 + $0x8] sm:$0xff]
      %v4298 = vld [vmem:[#allocation2 + $0x10] sm:$0xff]
      %v4299 = vld [vmem:[#allocation2 + $0x18] sm:$0xff]
      %v4300 = vld [vmem:[#allocation2 + $0x20] sm:$0xff]
      %v4301 = vld [vmem:[#allocation2 + $0x28] sm:$0xff]
      %v4302 = vld [vmem:[#allocation2 + $0x30] sm:$0xff]
      %v4303 = vld [vmem:[#allocation2 + $0x38] sm:$0xff]
      %v4304 = vld [vmem:[#allocation2 + $0x40] sm:$0xff]
      %v4305 = vld [vmem:[#allocation2 + $0x48] sm:$0xff]
      %v4306 = vld [vmem:[#allocation2 + $0x50] sm:$0xff]
      %v4307 = vld [vmem:[#allocation2 + $0x58] sm:$0xff]
      %v4308 = vld [vmem:[#allocation2 + $0x60] sm:$0xff]
      %v4309 = vld [vmem:[#allocation2 + $0x68] sm:$0xff]
      %v4310 = vld [vmem:[#allocation2 + $0x70] sm:$0xff]
      %v4311 = vld [vmem:[#allocation2 + $0x78] sm:$0xff]
      %v4312 = vld [vmem:[#allocation2 + $0x80] sm:$0xff]
      %v4313 = vld [vmem:[#allocation2 + $0x88] sm:$0xff]
      %v4314 = vld [vmem:[#allocation2 + $0x90] sm:$0xff]
      %v4315 = vld [vmem:[#allocation2 + $0x98] sm:$0xff]
      %v4316 = vld [vmem:[#allocation2 + $0xa0] sm:$0xff]
      %v4317 = vld [vmem:[#allocation2 + $0xa8] sm:$0xff]
      %v4318 = vld [vmem:[#allocation2 + $0xb0] sm:$0xff]
      %v4319 = vld [vmem:[#allocation2 + $0xb8] sm:$0xff]
      %v4320 = vld [vmem:[#allocation2 + $0xc0] sm:$0xff]
      %v4321 = vld [vmem:[#allocation2 + $0xc8] sm:$0xff]
      %v4322 = vld [vmem:[#allocation2 + $0xd0] sm:$0xff]
      %v4323 = vld [vmem:[#allocation2 + $0xd8] sm:$0xff]
      %v4324 = vld [vmem:[#allocation2 + $0xe0] sm:$0xff]
      %v4325 = vld [vmem:[#allocation2 + $0xe8] sm:$0xff]
      %v4326 = vld [vmem:[#allocation2 + $0xf0] sm:$0xff]
      %v4327 = vld [vmem:[#allocation2 + $0xf8] sm:$0xff]
      %v4328 = vld [vmem:[%s2] sm:$0x1]
      %v4330 = vlaneseq
      %v4331 = vshrl.u32 %v4330, 7
      %v4332 = vsub.s32 0, %v4331
      %v4333 = vrot.slane %v4328, %v4332
      %v4335 = vadd.f32 %v4296, %v4333
      %v4336 = vadd.f32 %v4297, %v4333
      %v4337 = vadd.f32 %v4298, %v4333
      %v4338 = vadd.f32 %v4299, %v4333
      %v4339 = vadd.f32 %v4300, %v4333
      %v4340 = vadd.f32 %v4301, %v4333
      %v4341 = vadd.f32 %v4302, %v4333
      %v4342 = vadd.f32 %v4303, %v4333
      %v4343 = vadd.f32 %v4304, %v4333
      %v4344 = vadd.f32 %v4305, %v4333
      %v4345 = vadd.f32 %v4306, %v4333
      %v4346 = vadd.f32 %v4307, %v4333
      %v4347 = vadd.f32 %v4308, %v4333
      %v4348 = vadd.f32 %v4309, %v4333
      %v4349 = vadd.f32 %v4310, %v4333
      %v4350 = vadd.f32 %v4311, %v4333
      %v4351 = vadd.f32 %v4312, %v4333
      %v4352 = vadd.f32 %v4313, %v4333
      %v4353 = vadd.f32 %v4314, %v4333
      %v4354 = vadd.f32 %v4315, %v4333
      %v4355 = vadd.f32 %v4316, %v4333
      %v4356 = vadd.f32 %v4317, %v4333
      %v4357 = vadd.f32 %v4318, %v4333
      %v4358 = vadd.f32 %v4319, %v4333
      %v4359 = vadd.f32 %v4320, %v4333
      %v4360 = vadd.f32 %v4321, %v4333
      %v4361 = vadd.f32 %v4322, %v4333
      %v4362 = vadd.f32 %v4323, %v4333
      %v4363 = vadd.f32 %v4324, %v4333
      %v4364 = vadd.f32 %v4325, %v4333
      %v4365 = vadd.f32 %v4326, %v4333
      %v4366 = vadd.f32 %v4327, %v4333
      %4367 = vst [vmem:[%s175] sm:$0xff] %v4335
      %4368 = vst [vmem:[%s175 + $0x8] sm:$0xff] %v4336
      %4369 = vst [vmem:[%s175 + $0x10] sm:$0xff] %v4337
      %4370 = vst [vmem:[%s175 + $0x18] sm:$0xff] %v4338
      %4371 = vst [vmem:[%s175 + $0x20] sm:$0xff] %v4339
      %4372 = vst [vmem:[%s175 + $0x28] sm:$0xff] %v4340
      %4373 = vst [vmem:[%s175 + $0x30] sm:$0xff] %v4341
      %4374 = vst [vmem:[%s175 + $0x38] sm:$0xff] %v4342
      %4375 = vst [vmem:[%s175 + $0x40] sm:$0xff] %v4343
      %4376 = vst [vmem:[%s175 + $0x48] sm:$0xff] %v4344
      %4377 = vst [vmem:[%s175 + $0x50] sm:$0xff] %v4345
      %4378 = vst [vmem:[%s175 + $0x58] sm:$0xff] %v4346
      %4379 = vst [vmem:[%s175 + $0x60] sm:$0xff] %v4347
      %4380 = vst [vmem:[%s175 + $0x68] sm:$0xff] %v4348
      %4381 = vst [vmem:[%s175 + $0x70] sm:$0xff] %v4349
      %4382 = vst [vmem:[%s175 + $0x78] sm:$0xff] %v4350
      %4383 = vst [vmem:[%s175 + $0x80] sm:$0xff] %v4351
      %4384 = vst [vmem:[%s175 + $0x88] sm:$0xff] %v4352
      %4385 = vst [vmem:[%s175 + $0x90] sm:$0xff] %v4353
      %4386 = vst [vmem:[%s175 + $0x98] sm:$0xff] %v4354
      %4387 = vst [vmem:[%s175 + $0xa0] sm:$0xff] %v4355
      %4388 = vst [vmem:[%s175 + $0xa8] sm:$0xff] %v4356
      %4389 = vst [vmem:[%s175 + $0xb0] sm:$0xff] %v4357
      %4390 = vst [vmem:[%s175 + $0xb8] sm:$0xff] %v4358
      %4391 = vst [vmem:[%s175 + $0xc0] sm:$0xff] %v4359
      %4392 = vst [vmem:[%s175 + $0xc8] sm:$0xff] %v4360
      %4393 = vst [vmem:[%s175 + $0xd0] sm:$0xff] %v4361
      %4394 = vst [vmem:[%s175 + $0xd8] sm:$0xff] %v4362
      %4395 = vst [vmem:[%s175 + $0xe0] sm:$0xff] %v4363
      %4396 = vst [vmem:[%s175 + $0xe8] sm:$0xff] %v4364
      %4397 = vst [vmem:[%s175 + $0xf0] sm:$0xff] %v4365
      %4398 = vst [vmem:[%s175 + $0xf8] sm:$0xff] %v4366
      %s4399 = smul.u32 32, %s14
      %p4400 = scmp.lt.s32.totalorder %s4399, 63
      %s4401 = scalar_select %p4400, %s4399, 63
      %s4402 = smul.addr %s4401, 8
      %s4403 = scalar_lea.vmem %s3, %s4402
      // Predicated region
      $region33: #{unit_tcn_forward.1} parent=31 // pred_check
        %p4404 = pneg %p100
      $region34: #{unit_tcn_forward.1} parent=31 // pred_check_branch
        %4406 = sbr.rel (%p4404) target = $region36
      $region35: #{unit_tcn_forward.1} parent=31 // pred_region
        %s4407 = smul.u32 32, %s14
      $region36: #{unit_tcn_forward.1} parent=31 // pred_fallthru
        _
    $region32: #{unit_tcn_forward.1} parent=5 // pred_fallthru
      _
    %p4408 = scmp.le.s32.totalorder 2, %s9
    // Predicated region
    $region37: #{unit_tcn_forward.1} parent=5 // pred_check
      %p4409 = pneg %p4408
    $region38: #{unit_tcn_forward.1} parent=5 // pred_check_branch
      %4411 = sbr.rel (%p4409) target = $region40
    $region39: #{unit_tcn_forward.1} parent=5 // pred_region
      %s4412 = ssub.s32 %s9, 2
      // Predicated region
      $region41: #{unit_tcn_forward.1} parent=39 // pred_check
        %p4413 = pneg %p106
      $region42: #{unit_tcn_forward.1} parent=39 // pred_check_branch
        %4415 = sbr.rel (%p4413) target = $region44
      $region43: #{unit_tcn_forward.1} parent=39 // pred_region
        %s4416 = smul.u32 32, %s15
        %p4417 = scmp.lt.s32.totalorder %s4416, 63
        %s4418 = scalar_select %p4417, %s4416, 63
        %s4419 = smul.addr %s4418, 8
        %s4420 = scalar_lea.vmem %s3, %s4419
      $region44: #{unit_tcn_forward.1} parent=39 // pred_fallthru
        _
    $region40: #{unit_tcn_forward.1} parent=5 // pred_fallthru
      _
  $region6: #{unit_tcn_forward.1} parent=0 // loop_footer
    %s13 = sadd.s32 1, %s9
  $region7: #{unit_tcn_forward.1} parent=0 // loop_footer_branch
    %8 = sbr.rel target = $region3
  $region8: #{unit_tcn_forward.1} parent=0 // loop_exit
    _

</llo_original>
